<compile_context>
chip_gen: v7x
topology: tpu7x:2x2x1
jax: 0.10.0
libtpu: 0.0.40
codegen_flags: <defaults>
</compile_context>

<pallas_src>
import functools
import math

import jax
import jax.numpy as jnp
import numpy as np
from jax.experimental import pallas as pl
from jax.experimental.pallas import tpu as pltpu

LEAKY_SLOPE = 0.2
BN_EPS = 1e-5


def _cdiv(a, b):
    return -(-a // b)


def _leaky(z):
    return jnp.where(z >= 0, z, LEAKY_SLOPE * z)


def _dgc_kernel(x_ref, bd_adj_ref, pool_ref, expand_ref, rep_rows_ref, mask_ref,
                w_sw_ref, b_sw_ref, w_glob_ref, b_glob_ref,
                w_co_g_ref, w_co_x_ref, b_co_ref, w_dw_ref, b_dw_ref,
                out_ref, *, mm_dtype):
    """One batch tile as a lane-dense (C, bt*N) slab; all matmuls are 2-D."""
    f32 = jnp.float32

    def mm(a, b):
        # MXU matmul with mm_dtype inputs and f32 accumulation.  astype is a
        # no-op for operands that are already mm_dtype (pre-cast weights).
        return jnp.dot(a.astype(mm_dtype), b.astype(mm_dtype),
                       preferred_element_type=f32)

    x = x_ref[...]                                       # (C, L) f32

    # ---------------- forward_static_gcn ----------------
    # bd_adj = kron(I_bt, adjList); the /num_nodes lives in w_sw (exact fold).
    a = _leaky(mm(x, bd_adj_ref[...]))                   # per-batch x @ adjList
    s = _leaky(mm(w_sw_ref[...], a) + b_sw_ref[...])     # static_weight 1x1 conv
    x2 = x + s                                           # residual (C_out == C_in)
    x2_mm = x2.astype(mm_dtype)                          # hoisted: reused by 3 matmuls

    # ---------------- forward_construct_dynamic_graph ----------------
    x_glb = mm(x2_mm, pool_ref[...])                     # (C, bt) per-batch node mean
    g = _leaky(mm(w_glob_ref[...], x_glb) + b_glob_ref[...])   # conv_global + folded BN
    glob_cols = mm(mm(w_co_g_ref[...], g), expand_ref[...])    # (N, L) broadcast cols
    logits = mm(w_co_x_ref[...], x2_mm) + glob_cols + b_co_ref[...]
    dyn = jax.nn.sigmoid(logits)                         # (N, L): dyn[m, b*N + n]
    # Block-diagonal dynamic adjacency; mask is exact 0/1, masking in mm_dtype.
    dyn_bd = mm(rep_rows_ref[...], dyn).astype(mm_dtype) * mask_ref[...]   # (L, L)

    # ---------------- forward_dynamic_gcn ----------------
    # /num_nodes folded into w_dw (positive scale commutes through leaky).
    y = _leaky(mm(x2_mm, dyn_bd))                        # per-batch x2 @ dyn_adj
    out = _leaky(mm(w_dw_ref[...], y) + b_dw_ref[...])   # dynamic_weight 1x1 conv
    out_ref[...] = out.astype(out_ref.dtype)


def _choose_tiling(B, N, *, lane_cap=512, min_grid_blocks=2):
    """Return (bt, n_blocks): batch items per grid block / number of grid blocks.

    Per-block lane width bt*N must be a multiple of 128 for multi-block grids
    (256-aligned preferred for v6e/v7x) and is capped near `lane_cap` so the
    (bt*N)^2 block-diagonal constants and matmuls stay small.  At least
    `min_grid_blocks` blocks keep both v7x TensorCores busy.
    """
    unit_bt = None
    for align in (256, 128):               # v6e/v7x want 256; v5e needs only 128
        u = align // math.gcd(align, N)     # batch items per `align`-lane chunk
        if u * N <= 2 * lane_cap:           # accept one over-cap unit rather than bail
            unit_bt = u
            break

    if unit_bt is None:
        # Lane axis cannot be tiled to 128 within budget: single full-width
        # block, padded so Bp*N is a (>=128) multiple of 128 lanes.
        pad_bt = 128 // math.gcd(128, N)
        return _cdiv(B, pad_bt) * pad_bt, 1

    bt_cap = max(unit_bt, (lane_cap // (unit_bt * N)) * unit_bt)
    n_blocks = max(min_grid_blocks, _cdiv(B, bt_cap))
    bt = min(bt_cap, _cdiv(_cdiv(B, n_blocks), unit_bt) * unit_bt)
    return bt, n_blocks


@functools.lru_cache(maxsize=8)
def _structural_constants(bt, N, dtype):
    """Data-independent kron constants, cached on (bt, N, dtype)."""
    eye_bt = np.eye(bt, dtype=np.float32)
    inv_n = 1.0 / float(N)
    pool = np.kron(eye_bt, np.full((N, 1), inv_n, np.float32))      # (bt*N, bt)
    expand = np.kron(eye_bt, np.ones((1, N), np.float32))           # (bt, bt*N)
    rep_rows = np.kron(np.ones((bt, 1), np.float32),
                       np.eye(N, dtype=np.float32))                 # (bt*N, N)
    mask = np.kron(eye_bt, np.ones((N, N), np.float32))             # (bt*N, bt*N) 0/1
    return tuple(jnp.asarray(c, dtype=dtype)
                 for c in (pool, expand, rep_rows, mask))


def _vmem_limit_bytes():
    cap = 128 * 1024 * 1024
    try:   # generation-aware: v7x only has 64 MiB physical VMEM per TensorCore.
        cap = int(pltpu.get_tpu_info().vmem_capacity_bytes)
    except Exception:
        pass
    return int(min(32 * 1024 * 1024, cap // 2))


def _build_specs(c_in, c_out, lane, weight_shapes, single_buffer_weights):
    x_spec = pl.BlockSpec((c_in, lane), lambda i: (0, i))
    if single_buffer_weights:
        # Grid-invariant constants: one VMEM copy instead of the default
        # double buffer.
        w_specs = [pl.BlockSpec(s, lambda i: (0, 0), pipeline_mode=pl.Buffered(1))
                   for s in weight_shapes]
    else:
        w_specs = [pl.BlockSpec(s, lambda i: (0, 0)) for s in weight_shapes]
    out_spec = pl.BlockSpec((c_out, lane), lambda i: (0, i))
    return [x_spec] + w_specs, out_spec


def dynamic_graph_convolution(x, params, num_nodes, in_features, out_features,
                              *, lane_cap=512, min_grid_blocks=2,
                              mm_dtype=jnp.float32):
    """x: (B, C_in, N) float32 -> (B, C_out, N) float32."""
    B, C, N = x.shape
    assert C == in_features and N == num_nodes
    assert in_features == out_features, "residual add requires C_in == C_out"

    bt, n_blocks = _choose_tiling(B, N, lane_cap=lane_cap,
                                  min_grid_blocks=min_grid_blocks)
    lane = bt * N
    Bp = bt * n_blocks
    xp = x
    if Bp != B:
        xp = jnp.concatenate([x, jnp.zeros((Bp - B, C, N), x.dtype)], axis=0)

    # Lane-dense slab: columns ordered batch-major, node-minor.
    x2d = jnp.transpose(xp, (1, 0, 2)).reshape(C, Bp * N)

    f32 = jnp.float32
    w_dtype = np.dtype(mm_dtype)
    inv_n = 1.0 / float(num_nodes)

    # ---- host-side constant folding / layout (pure preprocessing) ----
    pool, expand, rep_rows, mask = _structural_constants(bt, N, w_dtype)

    # Conv1d weight stores adjList^T; undo so the kernel computes x @ adjList.
    # Rebuilt per call since adjList is a (trainable) parameter.
    adjacency = jnp.transpose(jnp.asarray(params["w_adj"], f32))
    bd_adj = jnp.kron(jnp.eye(bt, dtype=f32), adjacency)            # (bt*N, bt*N)

    # /num_nodes of the static branch folded into static_weight (exact linear
    # fold), and of the dynamic branch into dynamic_weight (positive scale
    # commutes through the positively-homogeneous LeakyReLU).
    w_sw_eff = jnp.asarray(params["w_sw"], f32) * inv_n
    w_dw_eff = jnp.asarray(params["w_dw"], f32) * inv_n

    # Eval-mode BatchNorm folded into conv_global.
    bn_scale = (jnp.asarray(params["bn_gamma"], f32)
                * jax.lax.rsqrt(jnp.asarray(params["bn_var"], f32) + BN_EPS))
    w_glob_eff = bn_scale * jnp.asarray(params["w_glob"], f32)
    b_glob_eff = (bn_scale * (jnp.asarray(params["b_glob"], f32)
                              - jnp.asarray(params["bn_mean"], f32))
                  + jnp.asarray(params["bn_beta"], f32))

    # Split conv_create_co_mat weight host-side (no unaligned in-kernel slice).
    w_co = jnp.asarray(params["w_co"], f32)
    w_co_g = w_co[:, :in_features]
    w_co_x = w_co[:, in_features:]

    def as_mm(w):   # matmul operands: pre-cast to mm_dtype (halves vld for bf16)
        return jnp.asarray(w, dtype=w_dtype)

    def as_f32(w):  # biases are added post-matmul in f32
        return jnp.asarray(w, dtype=f32)

    weights = [as_mm(bd_adj), pool, expand, rep_rows, mask,
               as_mm(w_sw_eff), as_f32(params["b_sw"]),
               as_mm(w_glob_eff), as_f32(b_glob_eff),
               as_mm(w_co_g), as_mm(w_co_x), as_f32(params["b_co"]),
               as_mm(w_dw_eff), as_f32(params["b_dw"])]

    kernel = functools.partial(_dgc_kernel, mm_dtype=mm_dtype)

    out2d = None
    call_error = None
    for single_buffer_weights in (True, False):
        try:
            in_specs, out_spec = _build_specs(
                C, out_features, lane, tuple(w.shape for w in weights),
                single_buffer_weights)
            out2d = pl.pallas_call(
                kernel,
                out_shape=jax.ShapeDtypeStruct((out_features, Bp * N), x.dtype),
                grid=(n_blocks,),
                in_specs=in_specs,
                out_specs=out_spec,
                compiler_params=pltpu.CompilerParams(
                    dimension_semantics=("parallel",),   # batch tiles -> megacore
                    vmem_limit_bytes=_vmem_limit_bytes(),
                ),
            )(x2d, *weights)
            jax.block_until_ready(out2d)
            break
        except Exception as err:   # fallback: JAX without Buffered(1) support
            call_error = err
            out2d = None
    if out2d is None:
        raise call_error

    out = out2d.reshape(out_features, Bp, N).transpose(1, 0, 2)
    return out[:B]


def reference_forward(x, p, num_nodes):
    """Plain-JAX reference mirroring the PyTorch forward structure."""
    def leaky(z):
        return jnp.where(z >= 0, z, LEAKY_SLOPE * z)

    # forward_static_gcn
    xt = jnp.transpose(x, (0, 2, 1))                               # (B, N, C)
    a = jnp.einsum('mn,bnc->bmc', p['w_adj'], xt)                  # Conv1d(N,N,1)
    a = leaky(a) / num_nodes
    at = jnp.transpose(a, (0, 2, 1))                               # (B, C, N)
    s = leaky(jnp.einsum('oc,bcn->bon', p['w_sw'], at) + p['b_sw'][None])
    x2 = x + s

    # forward_construct_dynamic_graph
    x_glb = jnp.mean(x2, axis=2, keepdims=True)                    # (B, C, 1)
    g = jnp.einsum('oc,bcl->bol', p['w_glob'], x_glb) + p['b_glob'][None]
    g = ((g - p['bn_mean'][None]) / jnp.sqrt(p['bn_var'][None] + BN_EPS)
         * p['bn_gamma'][None] + p['bn_beta'][None])
    g = leaky(g)
    g = jnp.broadcast_to(g, x2.shape)
    cat = jnp.concatenate([g, x2], axis=1)                         # (B, 2C, N)
    dyn = jax.nn.sigmoid(jnp.einsum('oc,bcn->bon', p['w_co'], cat)
                         + p['b_co'][None])

    # forward_dynamic_gcn
    y = jnp.einsum('bcm,bmn->bcn', x2, dyn) / num_nodes
    y = leaky(y)
    y = leaky(jnp.einsum('oc,bcn->bon', p['w_dw'], y) + p['b_dw'][None])
    return y


if __name__ == "__main__":
    B, C_in, C_out, N = 2, 32, 32, 8   # in_features == out_features (residual add)

    key = jax.random.PRNGKey(0)
    keys = jax.random.split(key, 16)

    adj = jax.random.uniform(keys[0], (N, N), jnp.float32)          # adjList
    params = {
        "w_adj": jnp.transpose(adj),    # static_adj.weight.copy_(adj.T.unsqueeze(-1))
        "w_sw": 0.1 * jax.random.normal(keys[1], (C_out, C_in), jnp.float32),
        "b_sw": 0.1 * jax.random.normal(keys[2], (C_out, 1), jnp.float32),
        "w_glob": 0.1 * jax.random.normal(keys[3], (C_in, C_in), jnp.float32),
        "b_glob": 0.1 * jax.random.normal(keys[4], (C_in, 1), jnp.float32),
        "bn_gamma": 1.0 + 0.1 * jax.random.normal(keys[5], (C_in, 1), jnp.float32),
        "bn_beta": 0.1 * jax.random.normal(keys[6], (C_in, 1), jnp.float32),
        "bn_mean": 0.1 * jax.random.normal(keys[7], (C_in, 1), jnp.float32),
        "bn_var": 0.5 + jax.random.uniform(keys[8], (C_in, 1), jnp.float32),
        "w_co": 0.1 * jax.random.normal(keys[9], (N, 2 * C_in), jnp.float32),
        "b_co": 0.1 * jax.random.normal(keys[10], (N, 1), jnp.float32),
        "w_dw": 0.1 * jax.random.normal(keys[11], (C_out, C_in), jnp.float32),
        "b_dw": 0.1 * jax.random.normal(keys[12], (C_out, 1), jnp.float32),
    }

    x = jax.random.normal(keys[13], (B, C_in, N), jnp.float32)
    y_ref = reference_forward(x, params, N)

    # f32 run + numerical check against the plain-JAX reference.
    y = dynamic_graph_convolution(x, params, N, C_in, C_out)
    y = jax.block_until_ready(y)
    np.testing.assert_allclose(np.asarray(y), np.asarray(y_ref),
                               rtol=2e-3, atol=2e-3)

    # bf16-MXU variant (v5e/v6e/v7x): tolerance-checked, not just smoke-checked.
    y_bf16 = dynamic_graph_convolution(x, params, N, C_in, C_out,
                                       mm_dtype=jnp.bfloat16)
    y_bf16 = jax.block_until_ready(y_bf16)
    np.testing.assert_allclose(np.asarray(y_bf16), np.asarray(y_ref),
                               rtol=5e-2, atol=5e-2)

    print("KERNEL_OK")
</pallas_src>

<mosaic_0001>
module attributes {stable_mosaic.version = 11 : i64} {
  func.func @_dgc_kernel(%arg0: i32, %arg1: memref<32x256xf32, #tpu.memory_space<vmem>>, %arg2: memref<256x256xf32, #tpu.memory_space<vmem>>, %arg3: memref<256x32xf32, #tpu.memory_space<vmem>>, %arg4: memref<32x256xf32, #tpu.memory_space<vmem>>, %arg5: memref<256x8xf32, #tpu.memory_space<vmem>>, %arg6: memref<256x256xf32, #tpu.memory_space<vmem>>, %arg7: memref<32x32xf32, #tpu.memory_space<vmem>>, %arg8: memref<32x1xf32, #tpu.memory_space<vmem>>, %arg9: memref<32x32xf32, #tpu.memory_space<vmem>>, %arg10: memref<32x1xf32, #tpu.memory_space<vmem>>, %arg11: memref<8x32xf32, #tpu.memory_space<vmem>>, %arg12: memref<8x32xf32, #tpu.memory_space<vmem>>, %arg13: memref<8x1xf32, #tpu.memory_space<vmem>>, %arg14: memref<32x32xf32, #tpu.memory_space<vmem>>, %arg15: memref<32x1xf32, #tpu.memory_space<vmem>>, %arg16: memref<32x256xf32, #tpu.memory_space<vmem>>) attributes {dimension_semantics = [#tpu.dimension_semantics<parallel>], iteration_bounds = array<i64: 2>, scalar_prefetch = 0 : i64, scratch_operands = 0 : i64, tpu.core_type = #tpu.core_type<tc>, window_params = [{transform_indices = @transform_0, window_bounds = array<i64: 32, 256>}, {pipeline_mode = #tpu.pipeline_mode<synchronous>, transform_indices = @transform_1, window_bounds = array<i64: 256, 256>}, {pipeline_mode = #tpu.pipeline_mode<synchronous>, transform_indices = @transform_2, window_bounds = array<i64: 256, 32>}, {pipeline_mode = #tpu.pipeline_mode<synchronous>, transform_indices = @transform_3, window_bounds = array<i64: 32, 256>}, {pipeline_mode = #tpu.pipeline_mode<synchronous>, transform_indices = @transform_4, window_bounds = array<i64: 256, 8>}, {pipeline_mode = #tpu.pipeline_mode<synchronous>, transform_indices = @transform_5, window_bounds = array<i64: 256, 256>}, {pipeline_mode = #tpu.pipeline_mode<synchronous>, transform_indices = @transform_6, window_bounds = array<i64: 32, 32>}, {pipeline_mode = #tpu.pipeline_mode<synchronous>, transform_indices = @transform_7, window_bounds = array<i64: 32, 1>}, {pipeline_mode = #tpu.pipeline_mode<synchronous>, transform_indices = @transform_8, window_bounds = array<i64: 32, 32>}, {pipeline_mode = #tpu.pipeline_mode<synchronous>, transform_indices = @transform_9, window_bounds = array<i64: 32, 1>}, {pipeline_mode = #tpu.pipeline_mode<synchronous>, transform_indices = @transform_10, window_bounds = array<i64: 8, 32>}, {pipeline_mode = #tpu.pipeline_mode<synchronous>, transform_indices = @transform_11, window_bounds = array<i64: 8, 32>}, {pipeline_mode = #tpu.pipeline_mode<synchronous>, transform_indices = @transform_12, window_bounds = array<i64: 8, 1>}, {pipeline_mode = #tpu.pipeline_mode<synchronous>, transform_indices = @transform_13, window_bounds = array<i64: 32, 32>}, {pipeline_mode = #tpu.pipeline_mode<synchronous>, transform_indices = @transform_14, window_bounds = array<i64: 32, 1>}, {transform_indices = @transform_15, window_bounds = array<i64: 32, 256>}]} {
    %c0 = arith.constant 0 : index
    %c0_0 = arith.constant 0 : index
    %0 = vector.load %arg1[%c0, %c0_0] : memref<32x256xf32, #tpu.memory_space<vmem>>, vector<32x256xf32>
    %c0_1 = arith.constant 0 : index
    %c0_2 = arith.constant 0 : index
    %1 = vector.load %arg2[%c0_1, %c0_2] : memref<256x256xf32, #tpu.memory_space<vmem>>, vector<256x256xf32>
    %cst = arith.constant dense<0.000000e+00> : vector<32x256xf32>
    %2 = tpu.matmul %0, %1, %cst {dimension_numbers = #tpu.dot_dimension_numbers<[1], [0], [0], [1], [0, 0, 1, 1], [], []>} : vector<32x256xf32>, vector<256x256xf32>, vector<32x256xf32> -> vector<32x256xf32>
    %cst_3 = arith.constant 0.000000e+00 : f32
    %3 = vector.broadcast %cst_3 : f32 to vector<32x256xf32>
    %4 = arith.cmpf oge, %2, %3 : vector<32x256xf32>
    %cst_4 = arith.constant 2.000000e-01 : f32
    %5 = vector.broadcast %cst_4 : f32 to vector<32x256xf32>
    %6 = arith.mulf %5, %2 : vector<32x256xf32>
    %7 = arith.select %4, %2, %6 : vector<32x256xi1>, vector<32x256xf32>
    %c0_5 = arith.constant 0 : index
    %c0_6 = arith.constant 0 : index
    %8 = vector.load %arg7[%c0_5, %c0_6] : memref<32x32xf32, #tpu.memory_space<vmem>>, vector<32x32xf32>
    %cst_7 = arith.constant dense<0.000000e+00> : vector<32x256xf32>
    %9 = tpu.matmul %8, %7, %cst_7 {dimension_numbers = #tpu.dot_dimension_numbers<[1], [0], [0], [1], [0, 0, 1, 1], [], []>} : vector<32x32xf32>, vector<32x256xf32>, vector<32x256xf32> -> vector<32x256xf32>
    %c0_8 = arith.constant 0 : index
    %c0_9 = arith.constant 0 : index
    %10 = vector.load %arg8[%c0_8, %c0_9] : memref<32x1xf32, #tpu.memory_space<vmem>>, vector<32x1xf32>
    %11 = vector.broadcast %10 : vector<32x1xf32> to vector<32x256xf32>
    %12 = arith.addf %9, %11 : vector<32x256xf32>
    %cst_10 = arith.constant 0.000000e+00 : f32
    %13 = vector.broadcast %cst_10 : f32 to vector<32x256xf32>
    %14 = arith.cmpf oge, %12, %13 : vector<32x256xf32>
    %cst_11 = arith.constant 2.000000e-01 : f32
    %15 = vector.broadcast %cst_11 : f32 to vector<32x256xf32>
    %16 = arith.mulf %15, %12 : vector<32x256xf32>
    %17 = arith.select %14, %12, %16 : vector<32x256xi1>, vector<32x256xf32>
    %18 = arith.addf %0, %17 : vector<32x256xf32>
    %c0_12 = arith.constant 0 : index
    %c0_13 = arith.constant 0 : index
    %19 = vector.load %arg3[%c0_12, %c0_13] : memref<256x32xf32, #tpu.memory_space<vmem>>, vector<256x32xf32>
    %cst_14 = arith.constant dense<0.000000e+00> : vector<32x32xf32>
    %20 = tpu.matmul %18, %19, %cst_14 {dimension_numbers = #tpu.dot_dimension_numbers<[1], [0], [0], [1], [0, 0, 1, 1], [], []>} : vector<32x256xf32>, vector<256x32xf32>, vector<32x32xf32> -> vector<32x32xf32>
    %c0_15 = arith.constant 0 : index
    %c0_16 = arith.constant 0 : index
    %21 = vector.load %arg9[%c0_15, %c0_16] : memref<32x32xf32, #tpu.memory_space<vmem>>, vector<32x32xf32>
    %cst_17 = arith.constant dense<0.000000e+00> : vector<32x32xf32>
    %22 = tpu.matmul %21, %20, %cst_17 {dimension_numbers = #tpu.dot_dimension_numbers<[1], [0], [0], [1], [0, 0, 1, 1], [], []>} : vector<32x32xf32>, vector<32x32xf32>, vector<32x32xf32> -> vector<32x32xf32>
    %c0_18 = arith.constant 0 : index
    %c0_19 = arith.constant 0 : index
    %23 = vector.load %arg10[%c0_18, %c0_19] : memref<32x1xf32, #tpu.memory_space<vmem>>, vector<32x1xf32>
    %24 = vector.broadcast %23 : vector<32x1xf32> to vector<32x32xf32>
    %25 = arith.addf %22, %24 : vector<32x32xf32>
    %cst_20 = arith.constant 0.000000e+00 : f32
    %26 = vector.broadcast %cst_20 : f32 to vector<32x32xf32>
    %27 = arith.cmpf oge, %25, %26 : vector<32x32xf32>
    %cst_21 = arith.constant 2.000000e-01 : f32
    %28 = vector.broadcast %cst_21 : f32 to vector<32x32xf32>
    %29 = arith.mulf %28, %25 : vector<32x32xf32>
    %30 = arith.select %27, %25, %29 : vector<32x32xi1>, vector<32x32xf32>
    %c0_22 = arith.constant 0 : index
    %c0_23 = arith.constant 0 : index
    %31 = vector.load %arg11[%c0_22, %c0_23] : memref<8x32xf32, #tpu.memory_space<vmem>>, vector<8x32xf32>
    %cst_24 = arith.constant dense<0.000000e+00> : vector<8x32xf32>
    %32 = tpu.matmul %31, %30, %cst_24 {dimension_numbers = #tpu.dot_dimension_numbers<[1], [0], [0], [1], [0, 0, 1, 1], [], []>} : vector<8x32xf32>, vector<32x32xf32>, vector<8x32xf32> -> vector<8x32xf32>
    %c0_25 = arith.constant 0 : index
    %c0_26 = arith.constant 0 : index
    %33 = vector.load %arg4[%c0_25, %c0_26] : memref<32x256xf32, #tpu.memory_space<vmem>>, vector<32x256xf32>
    %cst_27 = arith.constant dense<0.000000e+00> : vector<8x256xf32>
    %34 = tpu.matmul %32, %33, %cst_27 {dimension_numbers = #tpu.dot_dimension_numbers<[1], [0], [0], [1], [0, 0, 1, 1], [], []>} : vector<8x32xf32>, vector<32x256xf32>, vector<8x256xf32> -> vector<8x256xf32>
    %c0_28 = arith.constant 0 : index
    %c0_29 = arith.constant 0 : index
    %35 = vector.load %arg12[%c0_28, %c0_29] : memref<8x32xf32, #tpu.memory_space<vmem>>, vector<8x32xf32>
    %cst_30 = arith.constant dense<0.000000e+00> : vector<8x256xf32>
    %36 = tpu.matmul %35, %18, %cst_30 {dimension_numbers = #tpu.dot_dimension_numbers<[1], [0], [0], [1], [0, 0, 1, 1], [], []>} : vector<8x32xf32>, vector<32x256xf32>, vector<8x256xf32> -> vector<8x256xf32>
    %37 = arith.addf %36, %34 : vector<8x256xf32>
    %c0_31 = arith.constant 0 : index
    %c0_32 = arith.constant 0 : index
    %38 = vector.load %arg13[%c0_31, %c0_32] : memref<8x1xf32, #tpu.memory_space<vmem>>, vector<8x1xf32>
    %39 = vector.broadcast %38 : vector<8x1xf32> to vector<8x256xf32>
    %40 = arith.addf %37, %39 : vector<8x256xf32>
    %41 = arith.negf %40 : vector<8x256xf32>
    %42 = math.exp %41 : vector<8x256xf32>
    %cst_33 = arith.constant 1.000000e+00 : f32
    %43 = vector.broadcast %cst_33 : f32 to vector<8x256xf32>
    %44 = arith.addf %43, %42 : vector<8x256xf32>
    %45 = arith.divf %43, %44 : vector<8x256xf32>
    %c0_34 = arith.constant 0 : index
    %c0_35 = arith.constant 0 : index
    %46 = vector.load %arg5[%c0_34, %c0_35] : memref<256x8xf32, #tpu.memory_space<vmem>>, vector<256x8xf32>
    %cst_36 = arith.constant dense<0.000000e+00> : vector<256x256xf32>
    %47 = tpu.matmul %46, %45, %cst_36 {dimension_numbers = #tpu.dot_dimension_numbers<[1], [0], [0], [1], [0, 0, 1, 1], [], []>} : vector<256x8xf32>, vector<8x256xf32>, vector<256x256xf32> -> vector<256x256xf32>
    %c0_37 = arith.constant 0 : index
    %c0_38 = arith.constant 0 : index
    %48 = vector.load %arg6[%c0_37, %c0_38] : memref<256x256xf32, #tpu.memory_space<vmem>>, vector<256x256xf32>
    %49 = arith.mulf %47, %48 : vector<256x256xf32>
    %cst_39 = arith.constant dense<0.000000e+00> : vector<32x256xf32>
    %50 = tpu.matmul %18, %49, %cst_39 {dimension_numbers = #tpu.dot_dimension_numbers<[1], [0], [0], [1], [0, 0, 1, 1], [], []>} : vector<32x256xf32>, vector<256x256xf32>, vector<32x256xf32> -> vector<32x256xf32>
    %cst_40 = arith.constant 0.000000e+00 : f32
    %51 = vector.broadcast %cst_40 : f32 to vector<32x256xf32>
    %52 = arith.cmpf oge, %50, %51 : vector<32x256xf32>
    %cst_41 = arith.constant 2.000000e-01 : f32
    %53 = vector.broadcast %cst_41 : f32 to vector<32x256xf32>
    %54 = arith.mulf %53, %50 : vector<32x256xf32>
    %55 = arith.select %52, %50, %54 : vector<32x256xi1>, vector<32x256xf32>
    %c0_42 = arith.constant 0 : index
    %c0_43 = arith.constant 0 : index
    %56 = vector.load %arg14[%c0_42, %c0_43] : memref<32x32xf32, #tpu.memory_space<vmem>>, vector<32x32xf32>
    %cst_44 = arith.constant dense<0.000000e+00> : vector<32x256xf32>
    %57 = tpu.matmul %56, %55, %cst_44 {dimension_numbers = #tpu.dot_dimension_numbers<[1], [0], [0], [1], [0, 0, 1, 1], [], []>} : vector<32x32xf32>, vector<32x256xf32>, vector<32x256xf32> -> vector<32x256xf32>
    %c0_45 = arith.constant 0 : index
    %c0_46 = arith.constant 0 : index
    %58 = vector.load %arg15[%c0_45, %c0_46] : memref<32x1xf32, #tpu.memory_space<vmem>>, vector<32x1xf32>
    %59 = vector.broadcast %58 : vector<32x1xf32> to vector<32x256xf32>
    %60 = arith.addf %57, %59 : vector<32x256xf32>
    %cst_47 = arith.constant 0.000000e+00 : f32
    %61 = vector.broadcast %cst_47 : f32 to vector<32x256xf32>
    %62 = arith.cmpf oge, %60, %61 : vector<32x256xf32>
    %cst_48 = arith.constant 2.000000e-01 : f32
    %63 = vector.broadcast %cst_48 : f32 to vector<32x256xf32>
    %64 = arith.mulf %63, %60 : vector<32x256xf32>
    %65 = arith.select %62, %60, %64 : vector<32x256xi1>, vector<32x256xf32>
    %c0_49 = arith.constant 0 : index
    %c0_50 = arith.constant 0 : index
    %66 = vector.load %arg16[%c0_49, %c0_50] : memref<32x256xf32, #tpu.memory_space<vmem>>, vector<32x256xf32>
    tpu.vector_store %arg16[%c0_49, %c0_50], %65 {strides = array<i32>} : memref<32x256xf32, #tpu.memory_space<vmem>>, vector<32x256xf32>,
    return
  }
  func.func @transform_0(%arg0: i32) -> (i32, i32) {
    %c0_i32 = arith.constant 0 : i32
    %c0_i32_0 = arith.constant 0 : i32
    return %c0_i32, %arg0 : i32, i32
  }
  func.func @transform_1(%arg0: i32) -> (i32, i32) {
    %c0_i32 = arith.constant 0 : i32
    %c0_i32_0 = arith.constant 0 : i32
    %c0_i32_1 = arith.constant 0 : i32
    return %c0_i32, %c0_i32_0 : i32, i32
  }
  func.func @transform_2(%arg0: i32) -> (i32, i32) {
    %c0_i32 = arith.constant 0 : i32
    %c0_i32_0 = arith.constant 0 : i32
    %c0_i32_1 = arith.constant 0 : i32
    return %c0_i32, %c0_i32_0 : i32, i32
  }
  func.func @transform_3(%arg0: i32) -> (i32, i32) {
    %c0_i32 = arith.constant 0 : i32
    %c0_i32_0 = arith.constant 0 : i32
    %c0_i32_1 = arith.constant 0 : i32
    return %c0_i32, %c0_i32_0 : i32, i32
  }
  func.func @transform_4(%arg0: i32) -> (i32, i32) {
    %c0_i32 = arith.constant 0 : i32
    %c0_i32_0 = arith.constant 0 : i32
    %c0_i32_1 = arith.constant 0 : i32
    return %c0_i32, %c0_i32_0 : i32, i32
  }
  func.func @transform_5(%arg0: i32) -> (i32, i32) {
    %c0_i32 = arith.constant 0 : i32
    %c0_i32_0 = arith.constant 0 : i32
    %c0_i32_1 = arith.constant 0 : i32
    return %c0_i32, %c0_i32_0 : i32, i32
  }
  func.func @transform_6(%arg0: i32) -> (i32, i32) {
    %c0_i32 = arith.constant 0 : i32
    %c0_i32_0 = arith.constant 0 : i32
    %c0_i32_1 = arith.constant 0 : i32
    return %c0_i32, %c0_i32_0 : i32, i32
  }
  func.func @transform_7(%arg0: i32) -> (i32, i32) {
    %c0_i32 = arith.constant 0 : i32
    %c0_i32_0 = arith.constant 0 : i32
    %c0_i32_1 = arith.constant 0 : i32
    return %c0_i32, %c0_i32_0 : i32, i32
  }
  func.func @transform_8(%arg0: i32) -> (i32, i32) {
    %c0_i32 = arith.constant 0 : i32
    %c0_i32_0 = arith.constant 0 : i32
    %c0_i32_1 = arith.constant 0 : i32
    return %c0_i32, %c0_i32_0 : i32, i32
  }
  func.func @transform_9(%arg0: i32) -> (i32, i32) {
    %c0_i32 = arith.constant 0 : i32
    %c0_i32_0 = arith.constant 0 : i32
    %c0_i32_1 = arith.constant 0 : i32
    return %c0_i32, %c0_i32_0 : i32, i32
  }
  func.func @transform_10(%arg0: i32) -> (i32, i32) {
    %c0_i32 = arith.constant 0 : i32
    %c0_i32_0 = arith.constant 0 : i32
    %c0_i32_1 = arith.constant 0 : i32
    return %c0_i32, %c0_i32_0 : i32, i32
  }
  func.func @transform_11(%arg0: i32) -> (i32, i32) {
    %c0_i32 = arith.constant 0 : i32
    %c0_i32_0 = arith.constant 0 : i32
    %c0_i32_1 = arith.constant 0 : i32
    return %c0_i32, %c0_i32_0 : i32, i32
  }
  func.func @transform_12(%arg0: i32) -> (i32, i32) {
    %c0_i32 = arith.constant 0 : i32
    %c0_i32_0 = arith.constant 0 : i32
    %c0_i32_1 = arith.constant 0 : i32
    return %c0_i32, %c0_i32_0 : i32, i32
  }
  func.func @transform_13(%arg0: i32) -> (i32, i32) {
    %c0_i32 = arith.constant 0 : i32
    %c0_i32_0 = arith.constant 0 : i32
    %c0_i32_1 = arith.constant 0 : i32
    return %c0_i32, %c0_i32_0 : i32, i32
  }
  func.func @transform_14(%arg0: i32) -> (i32, i32) {
    %c0_i32 = arith.constant 0 : i32
    %c0_i32_0 = arith.constant 0 : i32
    %c0_i32_1 = arith.constant 0 : i32
    return %c0_i32, %c0_i32_0 : i32, i32
  }
  func.func @transform_15(%arg0: i32) -> (i32, i32) {
    %c0_i32 = arith.constant 0 : i32
    %c0_i32_0 = arith.constant 0 : i32
    return %c0_i32, %arg0 : i32, i32
  }
}

module attributes {stable_mosaic.version = 11 : i64} {
  func.func @_dgc_kernel(%arg0: i32, %arg1: memref<32x256xf32, #tpu.memory_space<vmem>>, %arg2: memref<256x256xf32, #tpu.memory_space<vmem>>, %arg3: memref<256x32xf32, #tpu.memory_space<vmem>>, %arg4: memref<32x256xf32, #tpu.memory_space<vmem>>, %arg5: memref<256x8xf32, #tpu.memory_space<vmem>>, %arg6: memref<256x256xf32, #tpu.memory_space<vmem>>, %arg7: memref<32x32xf32, #tpu.memory_space<vmem>>, %arg8: memref<32x1xf32, #tpu.memory_space<vmem>>, %arg9: memref<32x32xf32, #tpu.memory_space<vmem>>, %arg10: memref<32x1xf32, #tpu.memory_space<vmem>>, %arg11: memref<8x32xf32, #tpu.memory_space<vmem>>, %arg12: memref<8x32xf32, #tpu.memory_space<vmem>>, %arg13: memref<8x1xf32, #tpu.memory_space<vmem>>, %arg14: memref<32x32xf32, #tpu.memory_space<vmem>>, %arg15: memref<32x1xf32, #tpu.memory_space<vmem>>, %arg16: memref<32x256xf32, #tpu.memory_space<vmem>>) attributes {dimension_semantics = [#tpu.dimension_semantics<parallel>], iteration_bounds = array<i64: 2>, scalar_prefetch = 0 : i64, scratch_operands = 0 : i64, tpu.core_type = #tpu.core_type<tc>, window_params = [{transform_indices = @transform_0, window_bounds = array<i64: 32, 256>}, {pipeline_mode = #tpu.pipeline_mode<synchronous>, transform_indices = @transform_1, window_bounds = array<i64: 256, 256>}, {pipeline_mode = #tpu.pipeline_mode<synchronous>, transform_indices = @transform_2, window_bounds = array<i64: 256, 32>}, {pipeline_mode = #tpu.pipeline_mode<synchronous>, transform_indices = @transform_3, window_bounds = array<i64: 32, 256>}, {pipeline_mode = #tpu.pipeline_mode<synchronous>, transform_indices = @transform_4, window_bounds = array<i64: 256, 8>}, {pipeline_mode = #tpu.pipeline_mode<synchronous>, transform_indices = @transform_5, window_bounds = array<i64: 256, 256>}, {pipeline_mode = #tpu.pipeline_mode<synchronous>, transform_indices = @transform_6, window_bounds = array<i64: 32, 32>}, {pipeline_mode = #tpu.pipeline_mode<synchronous>, transform_indices = @transform_7, window_bounds = array<i64: 32, 1>}, {pipeline_mode = #tpu.pipeline_mode<synchronous>, transform_indices = @transform_8, window_bounds = array<i64: 32, 32>}, {pipeline_mode = #tpu.pipeline_mode<synchronous>, transform_indices = @transform_9, window_bounds = array<i64: 32, 1>}, {pipeline_mode = #tpu.pipeline_mode<synchronous>, transform_indices = @transform_10, window_bounds = array<i64: 8, 32>}, {pipeline_mode = #tpu.pipeline_mode<synchronous>, transform_indices = @transform_11, window_bounds = array<i64: 8, 32>}, {pipeline_mode = #tpu.pipeline_mode<synchronous>, transform_indices = @transform_12, window_bounds = array<i64: 8, 1>}, {pipeline_mode = #tpu.pipeline_mode<synchronous>, transform_indices = @transform_13, window_bounds = array<i64: 32, 32>}, {pipeline_mode = #tpu.pipeline_mode<synchronous>, transform_indices = @transform_14, window_bounds = array<i64: 32, 1>}, {transform_indices = @transform_15, window_bounds = array<i64: 32, 256>}]} {
    %c0 = arith.constant 0 : index
    %c0_0 = arith.constant 0 : index
    %0 = vector.load %arg1[%c0, %c0_0] : memref<32x256xf32, #tpu.memory_space<vmem>>, vector<32x256xf32>
    %c0_1 = arith.constant 0 : index
    %c0_2 = arith.constant 0 : index
    %1 = vector.load %arg2[%c0_1, %c0_2] : memref<256x256xf32, #tpu.memory_space<vmem>>, vector<256x256xf32>
    %cst = arith.constant dense<0.000000e+00> : vector<32x256xf32>
    %2 = tpu.matmul %0, %1, %cst {dimension_numbers = #tpu.dot_dimension_numbers<[1], [0], [0], [1], [0, 0, 1, 1], [], []>} : vector<32x256xf32>, vector<256x256xf32>, vector<32x256xf32> -> vector<32x256xf32>
    %cst_3 = arith.constant 0.000000e+00 : f32
    %3 = vector.broadcast %cst_3 : f32 to vector<32x256xf32>
    %4 = arith.cmpf oge, %2, %3 : vector<32x256xf32>
    %cst_4 = arith.constant 2.000000e-01 : f32
    %5 = vector.broadcast %cst_4 : f32 to vector<32x256xf32>
    %6 = arith.mulf %5, %2 : vector<32x256xf32>
    %7 = arith.select %4, %2, %6 : vector<32x256xi1>, vector<32x256xf32>
    %c0_5 = arith.constant 0 : index
    %c0_6 = arith.constant 0 : index
    %8 = vector.load %arg7[%c0_5, %c0_6] : memref<32x32xf32, #tpu.memory_space<vmem>>, vector<32x32xf32>
    %cst_7 = arith.constant dense<0.000000e+00> : vector<32x256xf32>
    %9 = tpu.matmul %8, %7, %cst_7 {dimension_numbers = #tpu.dot_dimension_numbers<[1], [0], [0], [1], [0, 0, 1, 1], [], []>} : vector<32x32xf32>, vector<32x256xf32>, vector<32x256xf32> -> vector<32x256xf32>
    %c0_8 = arith.constant 0 : index
    %c0_9 = arith.constant 0 : index
    %10 = vector.load %arg8[%c0_8, %c0_9] : memref<32x1xf32, #tpu.memory_space<vmem>>, vector<32x1xf32>
    %11 = vector.broadcast %10 : vector<32x1xf32> to vector<32x256xf32>
    %12 = arith.addf %9, %11 : vector<32x256xf32>
    %cst_10 = arith.constant 0.000000e+00 : f32
    %13 = vector.broadcast %cst_10 : f32 to vector<32x256xf32>
    %14 = arith.cmpf oge, %12, %13 : vector<32x256xf32>
    %cst_11 = arith.constant 2.000000e-01 : f32
    %15 = vector.broadcast %cst_11 : f32 to vector<32x256xf32>
    %16 = arith.mulf %15, %12 : vector<32x256xf32>
    %17 = arith.select %14, %12, %16 : vector<32x256xi1>, vector<32x256xf32>
    %18 = arith.addf %0, %17 : vector<32x256xf32>
    %c0_12 = arith.constant 0 : index
    %c0_13 = arith.constant 0 : index
    %19 = vector.load %arg3[%c0_12, %c0_13] : memref<256x32xf32, #tpu.memory_space<vmem>>, vector<256x32xf32>
    %cst_14 = arith.constant dense<0.000000e+00> : vector<32x32xf32>
    %20 = tpu.matmul %18, %19, %cst_14 {dimension_numbers = #tpu.dot_dimension_numbers<[1], [0], [0], [1], [0, 0, 1, 1], [], []>} : vector<32x256xf32>, vector<256x32xf32>, vector<32x32xf32> -> vector<32x32xf32>
    %c0_15 = arith.constant 0 : index
    %c0_16 = arith.constant 0 : index
    %21 = vector.load %arg9[%c0_15, %c0_16] : memref<32x32xf32, #tpu.memory_space<vmem>>, vector<32x32xf32>
    %cst_17 = arith.constant dense<0.000000e+00> : vector<32x32xf32>
    %22 = tpu.matmul %21, %20, %cst_17 {dimension_numbers = #tpu.dot_dimension_numbers<[1], [0], [0], [1], [0, 0, 1, 1], [], []>} : vector<32x32xf32>, vector<32x32xf32>, vector<32x32xf32> -> vector<32x32xf32>
    %c0_18 = arith.constant 0 : index
    %c0_19 = arith.constant 0 : index
    %23 = vector.load %arg10[%c0_18, %c0_19] : memref<32x1xf32, #tpu.memory_space<vmem>>, vector<32x1xf32>
    %24 = vector.broadcast %23 : vector<32x1xf32> to vector<32x32xf32>
    %25 = arith.addf %22, %24 : vector<32x32xf32>
    %cst_20 = arith.constant 0.000000e+00 : f32
    %26 = vector.broadcast %cst_20 : f32 to vector<32x32xf32>
    %27 = arith.cmpf oge, %25, %26 : vector<32x32xf32>
    %cst_21 = arith.constant 2.000000e-01 : f32
    %28 = vector.broadcast %cst_21 : f32 to vector<32x32xf32>
    %29 = arith.mulf %28, %25 : vector<32x32xf32>
    %30 = arith.select %27, %25, %29 : vector<32x32xi1>, vector<32x32xf32>
    %c0_22 = arith.constant 0 : index
    %c0_23 = arith.constant 0 : index
    %31 = vector.load %arg11[%c0_22, %c0_23] : memref<8x32xf32, #tpu.memory_space<vmem>>, vector<8x32xf32>
    %cst_24 = arith.constant dense<0.000000e+00> : vector<8x32xf32>
    %32 = tpu.matmul %31, %30, %cst_24 {dimension_numbers = #tpu.dot_dimension_numbers<[1], [0], [0], [1], [0, 0, 1, 1], [], []>} : vector<8x32xf32>, vector<32x32xf32>, vector<8x32xf32> -> vector<8x32xf32>
    %c0_25 = arith.constant 0 : index
    %c0_26 = arith.constant 0 : index
    %33 = vector.load %arg4[%c0_25, %c0_26] : memref<32x256xf32, #tpu.memory_space<vmem>>, vector<32x256xf32>
    %cst_27 = arith.constant dense<0.000000e+00> : vector<8x256xf32>
    %34 = tpu.matmul %32, %33, %cst_27 {dimension_numbers = #tpu.dot_dimension_numbers<[1], [0], [0], [1], [0, 0, 1, 1], [], []>} : vector<8x32xf32>, vector<32x256xf32>, vector<8x256xf32> -> vector<8x256xf32>
    %c0_28 = arith.constant 0 : index
    %c0_29 = arith.constant 0 : index
    %35 = vector.load %arg12[%c0_28, %c0_29] : memref<8x32xf32, #tpu.memory_space<vmem>>, vector<8x32xf32>
    %cst_30 = arith.constant dense<0.000000e+00> : vector<8x256xf32>
    %36 = tpu.matmul %35, %18, %cst_30 {dimension_numbers = #tpu.dot_dimension_numbers<[1], [0], [0], [1], [0, 0, 1, 1], [], []>} : vector<8x32xf32>, vector<32x256xf32>, vector<8x256xf32> -> vector<8x256xf32>
    %37 = arith.addf %36, %34 : vector<8x256xf32>
    %c0_31 = arith.constant 0 : index
    %c0_32 = arith.constant 0 : index
    %38 = vector.load %arg13[%c0_31, %c0_32] : memref<8x1xf32, #tpu.memory_space<vmem>>, vector<8x1xf32>
    %39 = vector.broadcast %38 : vector<8x1xf32> to vector<8x256xf32>
    %40 = arith.addf %37, %39 : vector<8x256xf32>
    %41 = arith.negf %40 : vector<8x256xf32>
    %42 = math.exp %41 : vector<8x256xf32>
    %cst_33 = arith.constant 1.000000e+00 : f32
    %43 = vector.broadcast %cst_33 : f32 to vector<8x256xf32>
    %44 = arith.addf %43, %42 : vector<8x256xf32>
    %45 = arith.divf %43, %44 : vector<8x256xf32>
    %c0_34 = arith.constant 0 : index
    %c0_35 = arith.constant 0 : index
    %46 = vector.load %arg5[%c0_34, %c0_35] : memref<256x8xf32, #tpu.memory_space<vmem>>, vector<256x8xf32>
    %cst_36 = arith.constant dense<0.000000e+00> : vector<256x256xf32>
    %47 = tpu.matmul %46, %45, %cst_36 {dimension_numbers = #tpu.dot_dimension_numbers<[1], [0], [0], [1], [0, 0, 1, 1], [], []>} : vector<256x8xf32>, vector<8x256xf32>, vector<256x256xf32> -> vector<256x256xf32>
    %c0_37 = arith.constant 0 : index
    %c0_38 = arith.constant 0 : index
    %48 = vector.load %arg6[%c0_37, %c0_38] : memref<256x256xf32, #tpu.memory_space<vmem>>, vector<256x256xf32>
    %49 = arith.mulf %47, %48 : vector<256x256xf32>
    %cst_39 = arith.constant dense<0.000000e+00> : vector<32x256xf32>
    %50 = tpu.matmul %18, %49, %cst_39 {dimension_numbers = #tpu.dot_dimension_numbers<[1], [0], [0], [1], [0, 0, 1, 1], [], []>} : vector<32x256xf32>, vector<256x256xf32>, vector<32x256xf32> -> vector<32x256xf32>
    %cst_40 = arith.constant 0.000000e+00 : f32
    %51 = vector.broadcast %cst_40 : f32 to vector<32x256xf32>
    %52 = arith.cmpf oge, %50, %51 : vector<32x256xf32>
    %cst_41 = arith.constant 2.000000e-01 : f32
    %53 = vector.broadcast %cst_41 : f32 to vector<32x256xf32>
    %54 = arith.mulf %53, %50 : vector<32x256xf32>
    %55 = arith.select %52, %50, %54 : vector<32x256xi1>, vector<32x256xf32>
    %c0_42 = arith.constant 0 : index
    %c0_43 = arith.constant 0 : index
    %56 = vector.load %arg14[%c0_42, %c0_43] : memref<32x32xf32, #tpu.memory_space<vmem>>, vector<32x32xf32>
    %cst_44 = arith.constant dense<0.000000e+00> : vector<32x256xf32>
    %57 = tpu.matmul %56, %55, %cst_44 {dimension_numbers = #tpu.dot_dimension_numbers<[1], [0], [0], [1], [0, 0, 1, 1], [], []>} : vector<32x32xf32>, vector<32x256xf32>, vector<32x256xf32> -> vector<32x256xf32>
    %c0_45 = arith.constant 0 : index
    %c0_46 = arith.constant 0 : index
    %58 = vector.load %arg15[%c0_45, %c0_46] : memref<32x1xf32, #tpu.memory_space<vmem>>, vector<32x1xf32>
    %59 = vector.broadcast %58 : vector<32x1xf32> to vector<32x256xf32>
    %60 = arith.addf %57, %59 : vector<32x256xf32>
    %cst_47 = arith.constant 0.000000e+00 : f32
    %61 = vector.broadcast %cst_47 : f32 to vector<32x256xf32>
    %62 = arith.cmpf oge, %60, %61 : vector<32x256xf32>
    %cst_48 = arith.constant 2.000000e-01 : f32
    %63 = vector.broadcast %cst_48 : f32 to vector<32x256xf32>
    %64 = arith.mulf %63, %60 : vector<32x256xf32>
    %65 = arith.select %62, %60, %64 : vector<32x256xi1>, vector<32x256xf32>
    %c0_49 = arith.constant 0 : index
    %c0_50 = arith.constant 0 : index
    %66 = vector.load %arg16[%c0_49, %c0_50] : memref<32x256xf32, #tpu.memory_space<vmem>>, vector<32x256xf32>
    tpu.vector_store %arg16[%c0_49, %c0_50], %65 {strides = array<i32>} : memref<32x256xf32, #tpu.memory_space<vmem>>, vector<32x256xf32>,
    return
  }
  func.func @transform_0(%arg0: i32) -> (i32, i32) {
    %c0_i32 = arith.constant 0 : i32
    %c0_i32_0 = arith.constant 0 : i32
    return %c0_i32, %arg0 : i32, i32
  }
  func.func @transform_1(%arg0: i32) -> (i32, i32) {
    %c0_i32 = arith.constant 0 : i32
    %c0_i32_0 = arith.constant 0 : i32
    %c0_i32_1 = arith.constant 0 : i32
    return %c0_i32, %c0_i32_0 : i32, i32
  }
  func.func @transform_2(%arg0: i32) -> (i32, i32) {
    %c0_i32 = arith.constant 0 : i32
    %c0_i32_0 = arith.constant 0 : i32
    %c0_i32_1 = arith.constant 0 : i32
    return %c0_i32, %c0_i32_0 : i32, i32
  }
  func.func @transform_3(%arg0: i32) -> (i32, i32) {
    %c0_i32 = arith.constant 0 : i32
    %c0_i32_0 = arith.constant 0 : i32
    %c0_i32_1 = arith.constant 0 : i32
    return %c0_i32, %c0_i32_0 : i32, i32
  }
  func.func @transform_4(%arg0: i32) -> (i32, i32) {
    %c0_i32 = arith.constant 0 : i32
    %c0_i32_0 = arith.constant 0 : i32
    %c0_i32_1 = arith.constant 0 : i32
    return %c0_i32, %c0_i32_0 : i32, i32
  }
  func.func @transform_5(%arg0: i32) -> (i32, i32) {
    %c0_i32 = arith.constant 0 : i32
    %c0_i32_0 = arith.constant 0 : i32
    %c0_i32_1 = arith.constant 0 : i32
    return %c0_i32, %c0_i32_0 : i32, i32
  }
  func.func @transform_6(%arg0: i32) -> (i32, i32) {
    %c0_i32 = arith.constant 0 : i32
    %c0_i32_0 = arith.constant 0 : i32
    %c0_i32_1 = arith.constant 0 : i32
    return %c0_i32, %c0_i32_0 : i32, i32
  }
  func.func @transform_7(%arg0: i32) -> (i32, i32) {
    %c0_i32 = arith.constant 0 : i32
    %c0_i32_0 = arith.constant 0 : i32
    %c0_i32_1 = arith.constant 0 : i32
    return %c0_i32, %c0_i32_0 : i32, i32
  }
  func.func @transform_8(%arg0: i32) -> (i32, i32) {
    %c0_i32 = arith.constant 0 : i32
    %c0_i32_0 = arith.constant 0 : i32
    %c0_i32_1 = arith.constant 0 : i32
    return %c0_i32, %c0_i32_0 : i32, i32
  }
  func.func @transform_9(%arg0: i32) -> (i32, i32) {
    %c0_i32 = arith.constant 0 : i32
    %c0_i32_0 = arith.constant 0 : i32
    %c0_i32_1 = arith.constant 0 : i32
    return %c0_i32, %c0_i32_0 : i32, i32
  }
  func.func @transform_10(%arg0: i32) -> (i32, i32) {
    %c0_i32 = arith.constant 0 : i32
    %c0_i32_0 = arith.constant 0 : i32
    %c0_i32_1 = arith.constant 0 : i32
    return %c0_i32, %c0_i32_0 : i32, i32
  }
  func.func @transform_11(%arg0: i32) -> (i32, i32) {
    %c0_i32 = arith.constant 0 : i32
    %c0_i32_0 = arith.constant 0 : i32
    %c0_i32_1 = arith.constant 0 : i32
    return %c0_i32, %c0_i32_0 : i32, i32
  }
  func.func @transform_12(%arg0: i32) -> (i32, i32) {
    %c0_i32 = arith.constant 0 : i32
    %c0_i32_0 = arith.constant 0 : i32
    %c0_i32_1 = arith.constant 0 : i32
    return %c0_i32, %c0_i32_0 : i32, i32
  }
  func.func @transform_13(%arg0: i32) -> (i32, i32) {
    %c0_i32 = arith.constant 0 : i32
    %c0_i32_0 = arith.constant 0 : i32
    %c0_i32_1 = arith.constant 0 : i32
    return %c0_i32, %c0_i32_0 : i32, i32
  }
  func.func @transform_14(%arg0: i32) -> (i32, i32) {
    %c0_i32 = arith.constant 0 : i32
    %c0_i32_0 = arith.constant 0 : i32
    %c0_i32_1 = arith.constant 0 : i32
    return %c0_i32, %c0_i32_0 : i32, i32
  }
  func.func @transform_15(%arg0: i32) -> (i32, i32) {
    %c0_i32 = arith.constant 0 : i32
    %c0_i32_0 = arith.constant 0 : i32
    return %c0_i32, %arg0 : i32, i32
  }
}

</mosaic_0001>

<llo_original>
// kernel: tpu_custom_call.1
$region0: #{tpu_custom_call.1}
  #allocation0 [shape = 'u32[]', space=smem, size = 0x4, offset = 0x4, fixed_abs, tag = 'smem constant byte address 0x4 - core index']
  #allocation1 [shape = 'u32[144,128]{1,0:T(1,128)}', space=vmem, size = 0x12000, scoped, tag = 'internal scratch']
  %s0 = inlined_call_operand.vmem [shape: f32[32,512], index: 0, kind: input, shape index: {}]
  %s1 = inlined_call_operand.vmem [shape: f32[256,256], index: 1, kind: input, shape index: {}]
  %s2 = inlined_call_operand.vmem [shape: f32[256,32], index: 2, kind: input, shape index: {}]
  %s3 = inlined_call_operand.hbm [shape: f32[32,256], index: 3, kind: input, shape index: {}]
  %s4 = inlined_call_operand.vmem [shape: f32[256,8], index: 4, kind: input, shape index: {}]
  %s5 = inlined_call_operand.hbm [shape: f32[256,256], index: 5, kind: input, shape index: {}]
  %s6 = inlined_call_operand.hbm [shape: f32[32,32], index: 6, kind: input, shape index: {}]
  %s7 = inlined_call_operand.vmem [shape: f32[32,1], index: 7, kind: input, shape index: {}]
  %s8 = inlined_call_operand.hbm [shape: f32[32,32], index: 8, kind: input, shape index: {}]
  %s9 = inlined_call_operand.vmem [shape: f32[32,1], index: 9, kind: input, shape index: {}]
  %s10 = inlined_call_operand.hbm [shape: f32[8,32], index: 10, kind: input, shape index: {}]
  %s11 = inlined_call_operand.hbm [shape: f32[8,32], index: 11, kind: input, shape index: {}]
  %s12 = inlined_call_operand.vmem [shape: f32[8,1], index: 12, kind: input, shape index: {}]
  %s13 = inlined_call_operand.vmem [shape: f32[32,32], index: 13, kind: input, shape index: {}]
  %s14 = inlined_call_operand.vmem [shape: f32[32,1], index: 14, kind: input, shape index: {}]
  %s15 = inlined_call_operand.hbm [shape: f32[32,512], index: 15, kind: output, shape index: {}]
  %s16 = sld [smem:[#allocation0]]
  $region140: #{tpu_custom_call.1} parent=0
    _
  %s18 = ssub.s32 1, %s16
  %s19 = scalar_select 0, %s18, %s16
  $region1: #{tpu_custom_call.1} parent=0
    #allocation2 [shape = 'u8[65536]{0}', space=vmem, size = 0x10000, scoped, tag = 'input window, operand 0']
    #allocation3 [shape = 'u8[32768]{0}', space=vmem, size = 0x8000, scoped, tag = 'input window, operand 3, single buffered']
    #allocation4 [shape = 's32[2]{0}', space=sflag, size = 0x8, scoped, tag = 'scoped memory for tpu_custom_call.1']
    #allocation5 [shape = 's32[2]{0}', space=sflag, size = 0x8, scoped, tag = 'scoped memory for tpu_custom_call.1']
    #allocation6 [shape = 'u8[262144]{0}', space=vmem, size = 0x40000, scoped, tag = 'input window, operand 5, single buffered']
    #allocation7 [shape = 's32[1]{0}', space=sflag, size = 0x4, scoped, tag = 'scoped memory for tpu_custom_call.1']
    #allocation8 [shape = 'u8[16384]{0}', space=vmem, size = 0x4000, scoped, tag = 'input window, operand 6, single buffered']
    #allocation9 [shape = 'u8[16384]{0}', space=vmem, size = 0x4000, scoped, tag = 'input window, operand 8, single buffered']
    #allocation10 [shape = 's32[1]{0}', space=sflag, size = 0x4, scoped, tag = 'scoped memory for tpu_custom_call.1']
    #allocation11 [shape = 'u8[4096]{0}', space=vmem, size = 0x1000, scoped, tag = 'input window, operand 10, single buffered']
    #allocation12 [shape = 'u8[4096]{0}', space=vmem, size = 0x1000, scoped, tag = 'input window, operand 11, single buffered']
    #allocation13 [shape = 's32[1]{0}', space=sflag, size = 0x4, scoped, tag = 'scoped memory for tpu_custom_call.1']
    #allocation14 [shape = 'u8[65536]{0}', space=vmem, size = 0x10000, scoped, tag = 'output window, operand 0']
    %20 = vsyncpa [#allocation4], 0
    %21 = vsyncpa [#allocation7], 0
    %22 = vsyncpa [#allocation10], 0
    %23 = vsyncpa [#allocation13], 0
    %24 = vsyncpa [#allocation5], 0
    %s25 = scalar_lea.sflag [#allocation5], 1
    %26 = vsyncpa %s25, 0
    loop: start=0, step=1, limit=4
    $region2: #{tpu_custom_call.1} parent=1 // loop_pre_header
      _
    $region3: #{tpu_custom_call.1} parent=1 // loop_header
      %s28 = sphi 0, %s32
      %p29 = scmp.ge.s32.totalorder %s28, 4
      %s38 = sphi 0, %s40
      %s41 = sphi 0, %s38
      %s42 = sphi 0, %s41
      %s58 = sphi 0, %s42
      %s62 = sphi 0, %s62
      %s64 = sphi 0, %s62
      %s65 = sphi 0, %s64
      %s79 = sphi 0, %s65
      %s83 = sphi 0, %s83
      %s85 = sphi 0, %s83
      %s86 = sphi 0, %s85
      %s100 = sphi 0, %s86
      %s104 = sphi 0, %s104
      %s106 = sphi 0, %s104
      %s107 = sphi 0, %s106
      %s121 = sphi 0, %s107
      %s125 = sphi 0, %s125
      %s127 = sphi 0, %s125
      %s128 = sphi 0, %s127
      %s142 = sphi 0, %s128
      %s146 = sphi 0, %s146
      %s148 = sphi 0, %s146
      %s149 = sphi 0, %s148
      %s163 = sphi 0, %s149
      %s167 = sphi 0, %s167
      %s169 = sphi 0, %s167
      %s170 = sphi 0, %s169
      %s184 = sphi 0, %s170
      %s188 = sphi 0, %s188
      %s190 = sphi 0, %s188
      %s191 = sphi 0, %s190
      %s205 = sphi 0, %s191
      %s209 = sphi 0, %s209
      %s211 = sphi 0, %s209
      %s212 = sphi 0, %s211
      %s226 = sphi 0, %s212
      %s230 = sphi 0, %s230
      %s232 = sphi 0, %s230
      %s233 = sphi 0, %s232
      %s247 = sphi 0, %s233
      %s251 = sphi 0, %s251
      %s253 = sphi 0, %s251
      %s254 = sphi 0, %s253
      %s268 = sphi 0, %s254
      %s272 = sphi 0, %s272
      %s274 = sphi 0, %s272
      %s275 = sphi 0, %s274
      %s289 = sphi 0, %s275
      %s293 = sphi 0, %s293
      %s295 = sphi 0, %s293
      %s296 = sphi 0, %s295
      %s310 = sphi 0, %s296
      %s314 = sphi 0, %s314
      %s316 = sphi 0, %s314
      %s317 = sphi 0, %s316
      %s331 = sphi 0, %s317
      %s335 = sphi 0, %s335
      %s337 = sphi 0, %s335
      %s338 = sphi 0, %s337
      %s352 = sphi 0, %s338
      %s358 = sphi 0, %s360
      %s361 = sphi 0, %s358
      %s362 = sphi 0, %s361
      %s378 = sphi 0, %s362
    $region4: #{tpu_custom_call.1} parent=1 // loop_header_branch
      %31 = sbr.rel (%p29) target = $region8
    $region5: #{tpu_custom_call.1} parent=1 // loop_body
      %s33 = ssub.s32 %s28, 1
      %s34 = ssub.s32 %s28, 2
      %s35 = sadd.s32 %s28, 1
      %s36 = ssub.s32 %s28, %s35
      %p37 = scmp.eq.s32.totalorder %s36, 0
      %s39 = sadd.s32 %s38, 1
      %s40 = scalar_select %p37, %s38, %s39
      %p43 = pneg %p37
      %p44 = scmp.eq.s32.totalorder %s28, 1
      %p45 = por %p43, %p44
      %p46 = scmp.ne.s32.totalorder %s38, %s41
      %p47 = scmp.eq.s32.totalorder %s28, 0
      %p48 = por %p46, %p47
      %p49 = scmp.ne.s32.totalorder %s38, %s41
      %p50 = scmp.eq.s32.totalorder %s33, 1
      %p51 = por %p49, %p50
      %p52 = scmp.ne.s32.totalorder %s41, %s42
      %p53 = scmp.eq.s32.totalorder %s33, 0
      %p54 = por %p52, %p53
      %p55 = scmp.ne.s32.totalorder %s41, %s42
      %p56 = scmp.eq.s32.totalorder %s34, 1
      %p57 = por %p55, %p56
      %p59 = scmp.ne.s32.totalorder %s42, %s58
      %p60 = scmp.eq.s32.totalorder %s34, 0
      %p61 = por %p59, %p60
      %s63 = sadd.s32 %s62, 1
      %p66 = scmp.eq.s32.totalorder %s28, 1
      %p67 = scmp.ne.s32.totalorder %s62, %s64
      %p68 = scmp.eq.s32.totalorder %s28, 0
      %p69 = por %p67, %p68
      %p70 = scmp.ne.s32.totalorder %s62, %s64
      %p71 = scmp.eq.s32.totalorder %s33, 1
      %p72 = por %p70, %p71
      %p73 = scmp.ne.s32.totalorder %s64, %s65
      %p74 = scmp.eq.s32.totalorder %s33, 0
      %p75 = por %p73, %p74
      %p76 = scmp.ne.s32.totalorder %s64, %s65
      %p77 = scmp.eq.s32.totalorder %s34, 1
      %p78 = por %p76, %p77
      %p80 = scmp.ne.s32.totalorder %s65, %s79
      %p81 = scmp.eq.s32.totalorder %s34, 0
      %p82 = por %p80, %p81
      %s84 = sadd.s32 %s83, 1
      %p87 = scmp.eq.s32.totalorder %s28, 1
      %p88 = scmp.ne.s32.totalorder %s83, %s85
      %p89 = scmp.eq.s32.totalorder %s28, 0
      %p90 = por %p88, %p89
      %p91 = scmp.ne.s32.totalorder %s83, %s85
      %p92 = scmp.eq.s32.totalorder %s33, 1
      %p93 = por %p91, %p92
      %p94 = scmp.ne.s32.totalorder %s85, %s86
      %p95 = scmp.eq.s32.totalorder %s33, 0
      %p96 = por %p94, %p95
      %p97 = scmp.ne.s32.totalorder %s85, %s86
      %p98 = scmp.eq.s32.totalorder %s34, 1
      %p99 = por %p97, %p98
      %p101 = scmp.ne.s32.totalorder %s86, %s100
      %p102 = scmp.eq.s32.totalorder %s34, 0
      %p103 = por %p101, %p102
      %s105 = sadd.s32 %s104, 1
      %p108 = scmp.eq.s32.totalorder %s28, 1
      %p109 = scmp.ne.s32.totalorder %s104, %s106
      %p110 = scmp.eq.s32.totalorder %s28, 0
      %p111 = por %p109, %p110
      %p112 = scmp.ne.s32.totalorder %s104, %s106
      %p113 = scmp.eq.s32.totalorder %s33, 1
      %p114 = por %p112, %p113
      %p115 = scmp.ne.s32.totalorder %s106, %s107
      %p116 = scmp.eq.s32.totalorder %s33, 0
      %p117 = por %p115, %p116
      %p118 = scmp.ne.s32.totalorder %s106, %s107
      %p119 = scmp.eq.s32.totalorder %s34, 1
      %p120 = por %p118, %p119
      %p122 = scmp.ne.s32.totalorder %s107, %s121
      %p123 = scmp.eq.s32.totalorder %s34, 0
      %p124 = por %p122, %p123
      %s126 = sadd.s32 %s125, 1
      %p129 = scmp.eq.s32.totalorder %s28, 1
      %p130 = scmp.ne.s32.totalorder %s125, %s127
      %p131 = scmp.eq.s32.totalorder %s28, 0
      %p132 = por %p130, %p131
      %p133 = scmp.ne.s32.totalorder %s125, %s127
      %p134 = scmp.eq.s32.totalorder %s33, 1
      %p135 = por %p133, %p134
      %p136 = scmp.ne.s32.totalorder %s127, %s128
      %p137 = scmp.eq.s32.totalorder %s33, 0
      %p138 = por %p136, %p137
      %p139 = scmp.ne.s32.totalorder %s127, %s128
      %p140 = scmp.eq.s32.totalorder %s34, 1
      %p141 = por %p139, %p140
      %p143 = scmp.ne.s32.totalorder %s128, %s142
      %p144 = scmp.eq.s32.totalorder %s34, 0
      %p145 = por %p143, %p144
      %s147 = sadd.s32 %s146, 1
      %p150 = scmp.eq.s32.totalorder %s28, 1
      %p151 = scmp.ne.s32.totalorder %s146, %s148
      %p152 = scmp.eq.s32.totalorder %s28, 0
      %p153 = por %p151, %p152
      %p154 = scmp.ne.s32.totalorder %s146, %s148
      %p155 = scmp.eq.s32.totalorder %s33, 1
      %p156 = por %p154, %p155
      %p157 = scmp.ne.s32.totalorder %s148, %s149
      %p158 = scmp.eq.s32.totalorder %s33, 0
      %p159 = por %p157, %p158
      %p160 = scmp.ne.s32.totalorder %s148, %s149
      %p161 = scmp.eq.s32.totalorder %s34, 1
      %p162 = por %p160, %p161
      %p164 = scmp.ne.s32.totalorder %s149, %s163
      %p165 = scmp.eq.s32.totalorder %s34, 0
      %p166 = por %p164, %p165
      %s168 = sadd.s32 %s167, 1
      %p171 = scmp.eq.s32.totalorder %s28, 1
      %p172 = scmp.ne.s32.totalorder %s167, %s169
      %p173 = scmp.eq.s32.totalorder %s28, 0
      %p174 = por %p172, %p173
      %p175 = scmp.ne.s32.totalorder %s167, %s169
      %p176 = scmp.eq.s32.totalorder %s33, 1
      %p177 = por %p175, %p176
      %p178 = scmp.ne.s32.totalorder %s169, %s170
      %p179 = scmp.eq.s32.totalorder %s33, 0
      %p180 = por %p178, %p179
      %p181 = scmp.ne.s32.totalorder %s169, %s170
      %p182 = scmp.eq.s32.totalorder %s34, 1
      %p183 = por %p181, %p182
      %p185 = scmp.ne.s32.totalorder %s170, %s184
      %p186 = scmp.eq.s32.totalorder %s34, 0
      %p187 = por %p185, %p186
      %s189 = sadd.s32 %s188, 1
      %p192 = scmp.eq.s32.totalorder %s28, 1
      %p193 = scmp.ne.s32.totalorder %s188, %s190
      %p194 = scmp.eq.s32.totalorder %s28, 0
      %p195 = por %p193, %p194
      %p196 = scmp.ne.s32.totalorder %s188, %s190
      %p197 = scmp.eq.s32.totalorder %s33, 1
      %p198 = por %p196, %p197
      %p199 = scmp.ne.s32.totalorder %s190, %s191
      %p200 = scmp.eq.s32.totalorder %s33, 0
      %p201 = por %p199, %p200
      %p202 = scmp.ne.s32.totalorder %s190, %s191
      %p203 = scmp.eq.s32.totalorder %s34, 1
      %p204 = por %p202, %p203
      %p206 = scmp.ne.s32.totalorder %s191, %s205
      %p207 = scmp.eq.s32.totalorder %s34, 0
      %p208 = por %p206, %p207
      %s210 = sadd.s32 %s209, 1
      %p213 = scmp.eq.s32.totalorder %s28, 1
      %p214 = scmp.ne.s32.totalorder %s209, %s211
      %p215 = scmp.eq.s32.totalorder %s28, 0
      %p216 = por %p214, %p215
      %p217 = scmp.ne.s32.totalorder %s209, %s211
      %p218 = scmp.eq.s32.totalorder %s33, 1
      %p219 = por %p217, %p218
      %p220 = scmp.ne.s32.totalorder %s211, %s212
      %p221 = scmp.eq.s32.totalorder %s33, 0
      %p222 = por %p220, %p221
      %p223 = scmp.ne.s32.totalorder %s211, %s212
      %p224 = scmp.eq.s32.totalorder %s34, 1
      %p225 = por %p223, %p224
      %p227 = scmp.ne.s32.totalorder %s212, %s226
      %p228 = scmp.eq.s32.totalorder %s34, 0
      %p229 = por %p227, %p228
      %s231 = sadd.s32 %s230, 1
      %p234 = scmp.eq.s32.totalorder %s28, 1
      %p235 = scmp.ne.s32.totalorder %s230, %s232
      %p236 = scmp.eq.s32.totalorder %s28, 0
      %p237 = por %p235, %p236
      %p238 = scmp.ne.s32.totalorder %s230, %s232
      %p239 = scmp.eq.s32.totalorder %s33, 1
      %p240 = por %p238, %p239
      %p241 = scmp.ne.s32.totalorder %s232, %s233
      %p242 = scmp.eq.s32.totalorder %s33, 0
      %p243 = por %p241, %p242
      %p244 = scmp.ne.s32.totalorder %s232, %s233
      %p245 = scmp.eq.s32.totalorder %s34, 1
      %p246 = por %p244, %p245
      %p248 = scmp.ne.s32.totalorder %s233, %s247
      %p249 = scmp.eq.s32.totalorder %s34, 0
      %p250 = por %p248, %p249
      %s252 = sadd.s32 %s251, 1
      %p255 = scmp.eq.s32.totalorder %s28, 1
      %p256 = scmp.ne.s32.totalorder %s251, %s253
      %p257 = scmp.eq.s32.totalorder %s28, 0
      %p258 = por %p256, %p257
      %p259 = scmp.ne.s32.totalorder %s251, %s253
      %p260 = scmp.eq.s32.totalorder %s33, 1
      %p261 = por %p259, %p260
      %p262 = scmp.ne.s32.totalorder %s253, %s254
      %p263 = scmp.eq.s32.totalorder %s33, 0
      %p264 = por %p262, %p263
      %p265 = scmp.ne.s32.totalorder %s253, %s254
      %p266 = scmp.eq.s32.totalorder %s34, 1
      %p267 = por %p265, %p266
      %p269 = scmp.ne.s32.totalorder %s254, %s268
      %p270 = scmp.eq.s32.totalorder %s34, 0
      %p271 = por %p269, %p270
      %s273 = sadd.s32 %s272, 1
      %p276 = scmp.eq.s32.totalorder %s28, 1
      %p277 = scmp.ne.s32.totalorder %s272, %s274
      %p278 = scmp.eq.s32.totalorder %s28, 0
      %p279 = por %p277, %p278
      %p280 = scmp.ne.s32.totalorder %s272, %s274
      %p281 = scmp.eq.s32.totalorder %s33, 1
      %p282 = por %p280, %p281
      %p283 = scmp.ne.s32.totalorder %s274, %s275
      %p284 = scmp.eq.s32.totalorder %s33, 0
      %p285 = por %p283, %p284
      %p286 = scmp.ne.s32.totalorder %s274, %s275
      %p287 = scmp.eq.s32.totalorder %s34, 1
      %p288 = por %p286, %p287
      %p290 = scmp.ne.s32.totalorder %s275, %s289
      %p291 = scmp.eq.s32.totalorder %s34, 0
      %p292 = por %p290, %p291
      %s294 = sadd.s32 %s293, 1
      %p297 = scmp.eq.s32.totalorder %s28, 1
      %p298 = scmp.ne.s32.totalorder %s293, %s295
      %p299 = scmp.eq.s32.totalorder %s28, 0
      %p300 = por %p298, %p299
      %p301 = scmp.ne.s32.totalorder %s293, %s295
      %p302 = scmp.eq.s32.totalorder %s33, 1
      %p303 = por %p301, %p302
      %p304 = scmp.ne.s32.totalorder %s295, %s296
      %p305 = scmp.eq.s32.totalorder %s33, 0
      %p306 = por %p304, %p305
      %p307 = scmp.ne.s32.totalorder %s295, %s296
      %p308 = scmp.eq.s32.totalorder %s34, 1
      %p309 = por %p307, %p308
      %p311 = scmp.ne.s32.totalorder %s296, %s310
      %p312 = scmp.eq.s32.totalorder %s34, 0
      %p313 = por %p311, %p312
      %s315 = sadd.s32 %s314, 1
      %p318 = scmp.eq.s32.totalorder %s28, 1
      %p319 = scmp.ne.s32.totalorder %s314, %s316
      %p320 = scmp.eq.s32.totalorder %s28, 0
      %p321 = por %p319, %p320
      %p322 = scmp.ne.s32.totalorder %s314, %s316
      %p323 = scmp.eq.s32.totalorder %s33, 1
      %p324 = por %p322, %p323
      %p325 = scmp.ne.s32.totalorder %s316, %s317
      %p326 = scmp.eq.s32.totalorder %s33, 0
      %p327 = por %p325, %p326
      %p328 = scmp.ne.s32.totalorder %s316, %s317
      %p329 = scmp.eq.s32.totalorder %s34, 1
      %p330 = por %p328, %p329
      %p332 = scmp.ne.s32.totalorder %s317, %s331
      %p333 = scmp.eq.s32.totalorder %s34, 0
      %p334 = por %p332, %p333
      %s336 = sadd.s32 %s335, 1
      %p339 = scmp.eq.s32.totalorder %s28, 1
      %p340 = scmp.ne.s32.totalorder %s335, %s337
      %p341 = scmp.eq.s32.totalorder %s28, 0
      %p342 = por %p340, %p341
      %p343 = scmp.ne.s32.totalorder %s335, %s337
      %p344 = scmp.eq.s32.totalorder %s33, 1
      %p345 = por %p343, %p344
      %p346 = scmp.ne.s32.totalorder %s337, %s338
      %p347 = scmp.eq.s32.totalorder %s33, 0
      %p348 = por %p346, %p347
      %p349 = scmp.ne.s32.totalorder %s337, %s338
      %p350 = scmp.eq.s32.totalorder %s34, 1
      %p351 = por %p349, %p350
      %p353 = scmp.ne.s32.totalorder %s338, %s352
      %p354 = scmp.eq.s32.totalorder %s34, 0
      %p355 = por %p353, %p354
      %s356 = ssub.s32 %s28, %s35
      %p357 = scmp.eq.s32.totalorder %s356, 0
      %s359 = sadd.s32 %s358, 1
      %s360 = scalar_select %p357, %s358, %s359
      %p363 = pneg %p357
      %p364 = scmp.eq.s32.totalorder %s28, 1
      %p365 = por %p363, %p364
      %p366 = scmp.ne.s32.totalorder %s358, %s361
      %p367 = scmp.eq.s32.totalorder %s28, 0
      %p368 = por %p366, %p367
      %p369 = scmp.ne.s32.totalorder %s358, %s361
      %p370 = scmp.eq.s32.totalorder %s33, 1
      %p371 = por %p369, %p370
      %p372 = scmp.ne.s32.totalorder %s361, %s362
      %p373 = scmp.eq.s32.totalorder %s33, 0
      %p374 = por %p372, %p373
      %p375 = scmp.ne.s32.totalorder %s361, %s362
      %p376 = scmp.eq.s32.totalorder %s34, 1
      %p377 = por %p375, %p376
      %p379 = scmp.ne.s32.totalorder %s362, %s378
      %p380 = scmp.eq.s32.totalorder %s34, 0
      %p381 = por %p379, %p380
      %p382 = scmp.le.s32.totalorder 1, %s28
      %p383 = scmp.lt.s32.totalorder %s28, 3
      %p384 = pnand %p382, %p383
      %p385 = pneg %p384
      // Predicated region
      $region9: #{tpu_custom_call.1} parent=5 // pred_check
        _
      $region10: #{tpu_custom_call.1} parent=5 // pred_check_branch
        %387 = sbr.rel (%p384) target = $region12
      $region11: #{tpu_custom_call.1} parent=5 // pred_region
        %s388 = ssub.s32 %s28, 1
        // Predicated region
        $region13: #{tpu_custom_call.1} parent=11 // pred_check
          %p389 = pneg %p75
        $region14: #{tpu_custom_call.1} parent=11 // pred_check_branch
          %391 = sbr.rel (%p389) target = $region16
        $region15: #{tpu_custom_call.1} parent=11 // pred_region
          _
        $region16: #{tpu_custom_call.1} parent=11 // pred_fallthru
          _
        // Predicated region
        $region17: #{tpu_custom_call.1} parent=11 // pred_check
          %p392 = pneg %p96
        $region18: #{tpu_custom_call.1} parent=11 // pred_check_branch
          %394 = sbr.rel (%p392) target = $region20
        $region19: #{tpu_custom_call.1} parent=11 // pred_region
          _
        $region20: #{tpu_custom_call.1} parent=11 // pred_fallthru
          _
        // Predicated region
        $region21: #{tpu_custom_call.1} parent=11 // pred_check
          %p395 = pneg %p117
        $region22: #{tpu_custom_call.1} parent=11 // pred_check_branch
          %397 = sbr.rel (%p395) target = $region24
        $region23: #{tpu_custom_call.1} parent=11 // pred_region
          %s399 = ssub.s32 1024, 1024
          %400 = vsyncadd [#allocation4], %s399
          %s401 = sshll.u32 [#allocation3], 4
          %s402 = int_to_ptr.vmem [resolvable:$true] %s401
          %407 = dma.hbm_to_vmem [thread:$0]  %s3, 1024, %s402, [#allocation4], 256, 256, 16
        $region24: #{tpu_custom_call.1} parent=11 // pred_fallthru
          _
        // Predicated region
        $region25: #{tpu_custom_call.1} parent=11 // pred_check
          %p408 = pneg %p138
        $region26: #{tpu_custom_call.1} parent=11 // pred_check_branch
          %410 = sbr.rel (%p408) target = $region28
        $region27: #{tpu_custom_call.1} parent=11 // pred_region
          _
        $region28: #{tpu_custom_call.1} parent=11 // pred_fallthru
          _
        // Predicated region
        $region29: #{tpu_custom_call.1} parent=11 // pred_check
          %p411 = pneg %p159
        $region30: #{tpu_custom_call.1} parent=11 // pred_check_branch
          %413 = sbr.rel (%p411) target = $region32
        $region31: #{tpu_custom_call.1} parent=11 // pred_region
          %s415 = ssub.s32 8192, 8192
          %416 = vsyncadd [#allocation7], %s415
          %s417 = sshll.u32 [#allocation6], 4
          %s418 = int_to_ptr.vmem [resolvable:$true] %s417
          %423 = dma.hbm_to_vmem [thread:$0]  %s5, 8192, %s418, [#allocation7], 256, 256, 16
        $region32: #{tpu_custom_call.1} parent=11 // pred_fallthru
          _
        // Predicated region
        $region33: #{tpu_custom_call.1} parent=11 // pred_check
          %p424 = pneg %p180
        $region34: #{tpu_custom_call.1} parent=11 // pred_check_branch
          %426 = sbr.rel (%p424) target = $region36
        $region35: #{tpu_custom_call.1} parent=11 // pred_region
          %s428 = ssub.s32 512, 512
          %429 = vsyncadd [#allocation7], %s428
          %s430 = sshll.u32 [#allocation8], 4
          %s431 = int_to_ptr.vmem [resolvable:$true] %s430
          %436 = dma.hbm_to_vmem [thread:$0]  %s6, 512, %s431, [#allocation7], 128, 128, 8
        $region36: #{tpu_custom_call.1} parent=11 // pred_fallthru
          _
        // Predicated region
        $region37: #{tpu_custom_call.1} parent=11 // pred_check
          %p437 = pneg %p201
        $region38: #{tpu_custom_call.1} parent=11 // pred_check_branch
          %439 = sbr.rel (%p437) target = $region40
        $region39: #{tpu_custom_call.1} parent=11 // pred_region
          _
        $region40: #{tpu_custom_call.1} parent=11 // pred_fallthru
          _
        // Predicated region
        $region41: #{tpu_custom_call.1} parent=11 // pred_check
          %p440 = pneg %p222
        $region42: #{tpu_custom_call.1} parent=11 // pred_check_branch
          %442 = sbr.rel (%p440) target = $region44
        $region43: #{tpu_custom_call.1} parent=11 // pred_region
          %s444 = ssub.s32 512, 512
          %445 = vsyncadd [#allocation10], %s444
          %s446 = sshll.u32 [#allocation9], 4
          %s447 = int_to_ptr.vmem [resolvable:$true] %s446
          %452 = dma.hbm_to_vmem [thread:$0]  %s8, 512, %s447, [#allocation10], 128, 128, 8
        $region44: #{tpu_custom_call.1} parent=11 // pred_fallthru
          _
        // Predicated region
        $region45: #{tpu_custom_call.1} parent=11 // pred_check
          %p453 = pneg %p243
        $region46: #{tpu_custom_call.1} parent=11 // pred_check_branch
          %455 = sbr.rel (%p453) target = $region48
        $region47: #{tpu_custom_call.1} parent=11 // pred_region
          _
        $region48: #{tpu_custom_call.1} parent=11 // pred_fallthru
          _
        // Predicated region
        $region49: #{tpu_custom_call.1} parent=11 // pred_check
          %p456 = pneg %p264
        $region50: #{tpu_custom_call.1} parent=11 // pred_check_branch
          %458 = sbr.rel (%p456) target = $region52
        $region51: #{tpu_custom_call.1} parent=11 // pred_region
          %s460 = ssub.s32 128, 128
          %461 = vsyncadd [#allocation10], %s460
          %s463 = sshll.u32 [#allocation11], 4
          %s464 = int_to_ptr.vmem [resolvable:$true] %s463
          %466 = dma.hbm_to_vmem [thread:$0]  %s10, 128, %s464, [#allocation10]
        $region52: #{tpu_custom_call.1} parent=11 // pred_fallthru
          _
        // Predicated region
        $region53: #{tpu_custom_call.1} parent=11 // pred_check
          %p467 = pneg %p285
        $region54: #{tpu_custom_call.1} parent=11 // pred_check_branch
          %469 = sbr.rel (%p467) target = $region56
        $region55: #{tpu_custom_call.1} parent=11 // pred_region
          %s471 = ssub.s32 128, 128
          %472 = vsyncadd [#allocation13], %s471
          %s474 = sshll.u32 [#allocation12], 4
          %s475 = int_to_ptr.vmem [resolvable:$true] %s474
          %477 = dma.hbm_to_vmem [thread:$0]  %s11, 128, %s475, [#allocation13]
        $region56: #{tpu_custom_call.1} parent=11 // pred_fallthru
          _
        // Predicated region
        $region57: #{tpu_custom_call.1} parent=11 // pred_check
          %p478 = pneg %p306
        $region58: #{tpu_custom_call.1} parent=11 // pred_check_branch
          %480 = sbr.rel (%p478) target = $region60
        $region59: #{tpu_custom_call.1} parent=11 // pred_region
          _
        $region60: #{tpu_custom_call.1} parent=11 // pred_fallthru
          _
        // Predicated region
        $region61: #{tpu_custom_call.1} parent=11 // pred_check
          %p481 = pneg %p327
        $region62: #{tpu_custom_call.1} parent=11 // pred_check_branch
          %483 = sbr.rel (%p481) target = $region64
        $region63: #{tpu_custom_call.1} parent=11 // pred_region
          _
        $region64: #{tpu_custom_call.1} parent=11 // pred_fallthru
          _
        // Predicated region
        $region65: #{tpu_custom_call.1} parent=11 // pred_check
          %p484 = pneg %p348
        $region66: #{tpu_custom_call.1} parent=11 // pred_check_branch
          %486 = sbr.rel (%p484) target = $region68
        $region67: #{tpu_custom_call.1} parent=11 // pred_region
          _
        $region68: #{tpu_custom_call.1} parent=11 // pred_fallthru
          _
      $region12: #{tpu_custom_call.1} parent=5 // pred_fallthru
        _
      %p487 = scmp.lt.s32.totalorder %s28, 2
      // Predicated region
      $region69: #{tpu_custom_call.1} parent=5 // pred_check
        %p488 = pneg %p487
      $region70: #{tpu_custom_call.1} parent=5 // pred_check_branch
        %490 = sbr.rel (%p488) target = $region72
      $region71: #{tpu_custom_call.1} parent=5 // pred_region
        // Predicated region
        $region73: #{tpu_custom_call.1} parent=71 // pred_check
          %p491 = pneg %p48
        $region74: #{tpu_custom_call.1} parent=71 // pred_check_branch
          %493 = sbr.rel (%p491) target = $region76
        $region75: #{tpu_custom_call.1} parent=71 // pred_region
          %s494 = sand.u32 %s38, 1
          %s495 = sand.u32 %s38, 1
          %s496 = smul.addr %s495, 64
          %s497 = scalar_lea.vmem [#allocation2], %s496
          %s498 = smul.u32 2, %s28
          %s499 = smul.addr %s498, 8
          %s500 = scalar_lea.vmem %s0, %s499
          // Predicated region
          $region77: #{tpu_custom_call.1} parent=75 // pred_check
            _
          $region78: #{tpu_custom_call.1} parent=75 // pred_check_branch
            %502 = sbr.rel (0) target = $region80
          $region79: #{tpu_custom_call.1} parent=75 // pred_region
            // Predicated region
            $region81: #{tpu_custom_call.1} parent=79 // pred_check
              _
            $region82: #{tpu_custom_call.1} parent=79 // pred_check_branch
              %504 = sbr.rel (0) target = $region84
            $region83: #{tpu_custom_call.1} parent=79 // pred_region
              loop: start=0, step=1, limit=1
              $region85: #{tpu_custom_call.1} parent=83 // loop_pre_header
                _
              $region86: #{tpu_custom_call.1} parent=83 // loop_header
                %s506 = sphi 0, %s510
                %p507 = scmp.ge.s32.totalorder %s506, 1
                %s511 = sphi %s500, %s500
                %s512 = sphi %s497, %s497
              $region87: #{tpu_custom_call.1} parent=83 // loop_header_branch
                %509 = sbr.rel (%p507) target = $region91
              $region88: #{tpu_custom_call.1} parent=83 // loop_body
                %v513 = vld [vmem:[%s511] sm:$0xff]
                %514 = vst [vmem:[%s512] sm:$0xff] %v513
                %v515 = vld [vmem:[%s511 + $0x8] sm:$0xff]
                %516 = vst [vmem:[%s512 + $0x8] sm:$0xff] %v515
                %v517 = vld [vmem:[%s511 + $0x20] sm:$0xff]
                %518 = vst [vmem:[%s512 + $0x10] sm:$0xff] %v517
                %v519 = vld [vmem:[%s511 + $0x28] sm:$0xff]
                %520 = vst [vmem:[%s512 + $0x18] sm:$0xff] %v519
                %v521 = vld [vmem:[%s511 + $0x40] sm:$0xff]
                %522 = vst [vmem:[%s512 + $0x20] sm:$0xff] %v521
                %v523 = vld [vmem:[%s511 + $0x48] sm:$0xff]
                %524 = vst [vmem:[%s512 + $0x28] sm:$0xff] %v523
                %v525 = vld [vmem:[%s511 + $0x60] sm:$0xff]
                %526 = vst [vmem:[%s512 + $0x30] sm:$0xff] %v525
                %v527 = vld [vmem:[%s511 + $0x68] sm:$0xff]
                %528 = vst [vmem:[%s512 + $0x38] sm:$0xff] %v527
              $region89: #{tpu_custom_call.1} parent=83 // loop_footer
                %s510 = sadd.s32 1, %s506
              $region90: #{tpu_custom_call.1} parent=83 // loop_footer_branch
                %505 = sbr.rel target = $region86
              $region91: #{tpu_custom_call.1} parent=83 // loop_exit
                _
            $region84: #{tpu_custom_call.1} parent=79 // pred_fallthru
              _
            // Predicated region
            $region92: #{tpu_custom_call.1} parent=79 // pred_check
              _
            $region93: #{tpu_custom_call.1} parent=79 // pred_check_branch
              %530 = sbr.rel target = $region95
            $region94: #{tpu_custom_call.1} parent=79 // pred_region
              _
            $region95: #{tpu_custom_call.1} parent=79 // pred_fallthru
              _
          $region80: #{tpu_custom_call.1} parent=75 // pred_fallthru
            _
          %531 = vnop
        $region76: #{tpu_custom_call.1} parent=71 // pred_fallthru
          _
      $region72: #{tpu_custom_call.1} parent=5 // pred_fallthru
        _
      %p532 = scmp.le.s32.totalorder 1, %s28
      %p533 = scmp.lt.s32.totalorder %s28, 3
      %p534 = pnand %p532, %p533
      %p535 = pneg %p534
      // Predicated region
      $region96: #{tpu_custom_call.1} parent=5 // pred_check
        _
      $region97: #{tpu_custom_call.1} parent=5 // pred_check_branch
        %537 = sbr.rel (%p534) target = $region99
      $region98: #{tpu_custom_call.1} parent=5 // pred_region
        %s538 = ssub.s32 %s28, 1
        %s539 = sand.u32 %s41, 1
        %s540 = sand.u32 %s41, 1
        %s541 = smul.addr %s540, 64
        %s542 = scalar_lea.vmem [#allocation2], %s541
        // Predicated region
        $region100: #{tpu_custom_call.1} parent=98 // pred_check
          %p543 = pneg %p54
        $region101: #{tpu_custom_call.1} parent=98 // pred_check_branch
          %545 = sbr.rel (%p543) target = $region103
        $region102: #{tpu_custom_call.1} parent=98 // pred_region
          _
        $region103: #{tpu_custom_call.1} parent=98 // pred_fallthru
          _
        // Predicated region
        $region104: #{tpu_custom_call.1} parent=98 // pred_check
          %p546 = pneg %p117
        $region105: #{tpu_custom_call.1} parent=98 // pred_check_branch
          %548 = sbr.rel (%p546) target = $region107
        $region106: #{tpu_custom_call.1} parent=98 // pred_region
          %549 = dma.done [#allocation4], 1024
        $region107: #{tpu_custom_call.1} parent=98 // pred_fallthru
          _
        // Predicated region
        $region108: #{tpu_custom_call.1} parent=98 // pred_check
          %p550 = pneg %p159
        $region109: #{tpu_custom_call.1} parent=98 // pred_check_branch
          %552 = sbr.rel (%p550) target = $region111
        $region110: #{tpu_custom_call.1} parent=98 // pred_region
          %553 = dma.done [#allocation7], 8192
        $region111: #{tpu_custom_call.1} parent=98 // pred_fallthru
          _
        // Predicated region
        $region112: #{tpu_custom_call.1} parent=98 // pred_check
          %p554 = pneg %p180
        $region113: #{tpu_custom_call.1} parent=98 // pred_check_branch
          %556 = sbr.rel (%p554) target = $region115
        $region114: #{tpu_custom_call.1} parent=98 // pred_region
          %557 = dma.done [#allocation7], 512
        $region115: #{tpu_custom_call.1} parent=98 // pred_fallthru
          _
        // Predicated region
        $region116: #{tpu_custom_call.1} parent=98 // pred_check
          %p558 = pneg %p222
        $region117: #{tpu_custom_call.1} parent=98 // pred_check_branch
          %560 = sbr.rel (%p558) target = $region119
        $region118: #{tpu_custom_call.1} parent=98 // pred_region
          %561 = dma.done [#allocation10], 512
        $region119: #{tpu_custom_call.1} parent=98 // pred_fallthru
          _
        // Predicated region
        $region120: #{tpu_custom_call.1} parent=98 // pred_check
          %p562 = pneg %p264
        $region121: #{tpu_custom_call.1} parent=98 // pred_check_branch
          %564 = sbr.rel (%p562) target = $region123
        $region122: #{tpu_custom_call.1} parent=98 // pred_region
          %565 = dma.done [#allocation10], 128
        $region123: #{tpu_custom_call.1} parent=98 // pred_fallthru
          _
        // Predicated region
        $region124: #{tpu_custom_call.1} parent=98 // pred_check
          %p566 = pneg %p285
        $region125: #{tpu_custom_call.1} parent=98 // pred_check_branch
          %568 = sbr.rel (%p566) target = $region127
        $region126: #{tpu_custom_call.1} parent=98 // pred_region
          %569 = dma.done [#allocation13], 128
        $region127: #{tpu_custom_call.1} parent=98 // pred_fallthru
          _
        %s570 = sand.u32 %s41, 1
        %s571 = sand.u32 %s41, 1
        %s572 = smul.addr %s571, 64
        %s573 = scalar_lea.vmem [#allocation2], %s572
        %p574 = pneg %p54
        %p575 = pneg %p51
        %p576 = pneg %p75
        %p577 = pneg %p72
        %p578 = pneg %p96
        %p579 = pneg %p93
        %p580 = pneg %p117
        %p581 = pneg %p114
        %p582 = pneg %p138
        %p583 = pneg %p135
        %p584 = pneg %p159
        %p585 = pneg %p156
        %p586 = pneg %p180
        %p587 = pneg %p177
        %p588 = pneg %p201
        %p589 = pneg %p198
        %p590 = pneg %p222
        %p591 = pneg %p219
        %p592 = pneg %p243
        %p593 = pneg %p240
        %p594 = pneg %p264
        %p595 = pneg %p261
        %p596 = pneg %p285
        %p597 = pneg %p282
        %p598 = pneg %p306
        %p599 = pneg %p303
        %p600 = pneg %p327
        %p601 = pneg %p324
        %p602 = pneg %p348
        %p603 = pneg %p345
        %p604 = pneg %p374
        %p605 = pneg %p371
        %s606 = sand.u32 %s361, 1
        %s607 = scalar_lea.sflag [#allocation5], %s606
        %s608 = sand.u32 %s361, 1
        %s609 = smul.addr %s608, 64
        %s610 = scalar_lea.vmem [#allocation14], %s609
        %s611 = smul.u32 2, %s33
        %s612 = smul.u32 2, %s33
        %v613 = vld [vmem:[%s542] sm:$0xff]
        %v614 = vld [vmem:[%s542 + $0x8] sm:$0xff]
        %v615 = vld [vmem:[%s542 + $0x10] sm:$0xff]
        %v616 = vld [vmem:[%s542 + $0x18] sm:$0xff]
        %v617 = vld [vmem:[%s542 + $0x20] sm:$0xff]
        %v618 = vld [vmem:[%s542 + $0x28] sm:$0xff]
        %v619 = vld [vmem:[%s542 + $0x30] sm:$0xff]
        %v620 = vld [vmem:[%s542 + $0x38] sm:$0xff]
        %v621 = vld [vmem:[%s1] sm:$0xff]
        %v622 = vld [vmem:[%s1 + $0x8] sm:$0xff]
        %v623 = vld [vmem:[%s1 + $0x10] sm:$0xff]
        %v624 = vld [vmem:[%s1 + $0x18] sm:$0xff]
        %v625 = vld [vmem:[%s1 + $0x20] sm:$0xff]
        %v626 = vld [vmem:[%s1 + $0x28] sm:$0xff]
        %v627 = vld [vmem:[%s1 + $0x30] sm:$0xff]
        %v628 = vld [vmem:[%s1 + $0x38] sm:$0xff]
        %v629 = vld [vmem:[%s1 + $0x40] sm:$0xff]
        %v630 = vld [vmem:[%s1 + $0x48] sm:$0xff]
        %v631 = vld [vmem:[%s1 + $0x50] sm:$0xff]
        %v632 = vld [vmem:[%s1 + $0x58] sm:$0xff]
        %v633 = vld [vmem:[%s1 + $0x60] sm:$0xff]
        %v634 = vld [vmem:[%s1 + $0x68] sm:$0xff]
        %v635 = vld [vmem:[%s1 + $0x70] sm:$0xff]
        %v636 = vld [vmem:[%s1 + $0x78] sm:$0xff]
        %v637 = vld [vmem:[%s1 + $0x80] sm:$0xff]
        %v638 = vld [vmem:[%s1 + $0x88] sm:$0xff]
        %v639 = vld [vmem:[%s1 + $0x90] sm:$0xff]
        %v640 = vld [vmem:[%s1 + $0x98] sm:$0xff]
        %v641 = vld [vmem:[%s1 + $0xa0] sm:$0xff]
        %v642 = vld [vmem:[%s1 + $0xa8] sm:$0xff]
        %v643 = vld [vmem:[%s1 + $0xb0] sm:$0xff]
        %v644 = vld [vmem:[%s1 + $0xb8] sm:$0xff]
        %v645 = vld [vmem:[%s1 + $0xc0] sm:$0xff]
        %v646 = vld [vmem:[%s1 + $0xc8] sm:$0xff]
        %v647 = vld [vmem:[%s1 + $0xd0] sm:$0xff]
        %v648 = vld [vmem:[%s1 + $0xd8] sm:$0xff]
        %v649 = vld [vmem:[%s1 + $0xe0] sm:$0xff]
        %v650 = vld [vmem:[%s1 + $0xe8] sm:$0xff]
        %v651 = vld [vmem:[%s1 + $0xf0] sm:$0xff]
        %v652 = vld [vmem:[%s1 + $0xf8] sm:$0xff]
        %v653 = vld [vmem:[%s1 + $0x100] sm:$0xff]
        %v654 = vld [vmem:[%s1 + $0x108] sm:$0xff]
        %v655 = vld [vmem:[%s1 + $0x110] sm:$0xff]
        %v656 = vld [vmem:[%s1 + $0x118] sm:$0xff]
        %v657 = vld [vmem:[%s1 + $0x120] sm:$0xff]
        %v658 = vld [vmem:[%s1 + $0x128] sm:$0xff]
        %v659 = vld [vmem:[%s1 + $0x130] sm:$0xff]
        %v660 = vld [vmem:[%s1 + $0x138] sm:$0xff]
        %v661 = vld [vmem:[%s1 + $0x140] sm:$0xff]
        %v662 = vld [vmem:[%s1 + $0x148] sm:$0xff]
        %v663 = vld [vmem:[%s1 + $0x150] sm:$0xff]
        %v664 = vld [vmem:[%s1 + $0x158] sm:$0xff]
        %v665 = vld [vmem:[%s1 + $0x160] sm:$0xff]
        %v666 = vld [vmem:[%s1 + $0x168] sm:$0xff]
        %v667 = vld [vmem:[%s1 + $0x170] sm:$0xff]
        %v668 = vld [vmem:[%s1 + $0x178] sm:$0xff]
        %v669 = vld [vmem:[%s1 + $0x180] sm:$0xff]
        %v670 = vld [vmem:[%s1 + $0x188] sm:$0xff]
        %v671 = vld [vmem:[%s1 + $0x190] sm:$0xff]
        %v672 = vld [vmem:[%s1 + $0x198] sm:$0xff]
        %v673 = vld [vmem:[%s1 + $0x1a0] sm:$0xff]
        %v674 = vld [vmem:[%s1 + $0x1a8] sm:$0xff]
        %v675 = vld [vmem:[%s1 + $0x1b0] sm:$0xff]
        %v676 = vld [vmem:[%s1 + $0x1b8] sm:$0xff]
        %v677 = vld [vmem:[%s1 + $0x1c0] sm:$0xff]
        %v678 = vld [vmem:[%s1 + $0x1c8] sm:$0xff]
        %v679 = vld [vmem:[%s1 + $0x1d0] sm:$0xff]
        %v680 = vld [vmem:[%s1 + $0x1d8] sm:$0xff]
        %v681 = vld [vmem:[%s1 + $0x1e0] sm:$0xff]
        %v682 = vld [vmem:[%s1 + $0x1e8] sm:$0xff]
        %v683 = vld [vmem:[%s1 + $0x1f0] sm:$0xff]
        %v684 = vld [vmem:[%s1 + $0x1f8] sm:$0xff]
        %685 = vmatprep.subr.mxu0 %v622
        %686 = vmatpush1.msra.mxu0 %v621
        %687 = vmatprep.subr.mxu0 %v624
        %688 = vmatpush1.msra.mxu0 %v623
        %689 = vmatprep.subr.mxu0 %v626
        %690 = vmatpush1.msra.mxu0 %v625
        %691 = vmatprep.subr.mxu0 %v628
        %692 = vmatpush1.msra.mxu0 %v627
        %693 = vmatprep.subr.mxu0 %v630
        %694 = vmatpush1.msra.mxu0 %v629
        %695 = vmatprep.subr.mxu0 %v632
        %696 = vmatpush1.msra.mxu0 %v631
        %697 = vmatprep.subr.mxu0 %v634
        %698 = vmatpush1.msra.mxu0 %v633
        %699 = vmatprep.subr.mxu0 %v636
        %700 = vmatpush1.msra.mxu0 %v635
        %701 = vmatprep.subr.mxu0 %v638
        %702 = vmatpush1.msra.mxu0 %v637
        %703 = vmatprep.subr.mxu0 %v640
        %704 = vmatpush1.msra.mxu0 %v639
        %705 = vmatprep.subr.mxu0 %v642
        %706 = vmatpush1.msra.mxu0 %v641
        %707 = vmatprep.subr.mxu0 %v644
        %708 = vmatpush1.msra.mxu0 %v643
        %709 = vmatprep.subr.mxu0 %v646
        %710 = vmatpush1.msra.mxu0 %v645
        %711 = vmatprep.subr.mxu0 %v648
        %712 = vmatpush1.msra.mxu0 %v647
        %713 = vmatprep.subr.mxu0 %v650
        %714 = vmatpush1.msra.mxu0 %v649
        %715 = vmatprep.subr.mxu0 %v652
        %716 = vmatpush1.msra.mxu0 %v651
        %717 = vmatprep.subr.mxu0 %v654
        %718 = vmatpush1.msra.mxu0 %v653
        %719 = vmatprep.subr.mxu0 %v656
        %720 = vmatpush1.msra.mxu0 %v655
        %721 = vmatprep.subr.mxu0 %v658
        %722 = vmatpush1.msra.mxu0 %v657
        %723 = vmatprep.subr.mxu0 %v660
        %724 = vmatpush1.msra.mxu0 %v659
        %725 = vmatprep.subr.mxu0 %v662
        %726 = vmatpush1.msra.mxu0 %v661
        %727 = vmatprep.subr.mxu0 %v664
        %728 = vmatpush1.msra.mxu0 %v663
        %729 = vmatprep.subr.mxu0 %v666
        %730 = vmatpush1.msra.mxu0 %v665
        %731 = vmatprep.subr.mxu0 %v668
        %732 = vmatpush1.msra.mxu0 %v667
        %733 = vmatprep.subr.mxu0 %v670
        %734 = vmatpush1.msra.mxu0 %v669
        %735 = vmatprep.subr.mxu0 %v672
        %736 = vmatpush1.msra.mxu0 %v671
        %737 = vmatprep.subr.mxu0 %v674
        %738 = vmatpush1.msra.mxu0 %v673
        %739 = vmatprep.subr.mxu0 %v676
        %740 = vmatpush1.msra.mxu0 %v675
        %741 = vmatprep.subr.mxu0 %v678
        %742 = vmatpush1.msra.mxu0 %v677
        %743 = vmatprep.subr.mxu0 %v680
        %744 = vmatpush1.msra.mxu0 %v679
        %745 = vmatprep.subr.mxu0 %v682
        %746 = vmatpush1.msra.mxu0 %v681
        %747 = vmatprep.subr.mxu0 %v684
        %748 = vmatpush1.msra.mxu0 %v683
        %749 = vmatprep.mubr.f32.mxu0 %v614
        %750 = vmatmul.mubr.f32.gmra.mrb[0].mxu0 %v613
        %v751 = vpop.f32.mrb[0].mxu0
        %v752 = vadd.f32 0.0, %v751
        %v753 = vpop.f32.mrb[0].mxu0
        %v754 = vadd.f32 0.0, %v753
        %755 = vmatprep.mubr.f32.mxu0 %v616
        %756 = vmatmul.mubr.f32.gmra.mrb[0].mxu0 %v615
        %v757 = vpop.f32.mrb[0].mxu0
        %v758 = vadd.f32 0.0, %v757
        %v759 = vpop.f32.mrb[0].mxu0
        %v760 = vadd.f32 0.0, %v759
        %761 = vmatprep.mubr.f32.mxu0 %v618
        %762 = vmatmul.mubr.f32.gmra.mrb[0].mxu0 %v617
        %v763 = vpop.f32.mrb[0].mxu0
        %v764 = vadd.f32 0.0, %v763
        %v765 = vpop.f32.mrb[0].mxu0
        %v766 = vadd.f32 0.0, %v765
        %767 = vmatprep.mubr.f32.mxu0 %v620
        %768 = vmatmul.mubr.f32.gmra.mrb[0].mxu0 %v619
        %v769 = vpop.f32.mrb[0].mxu0
        %v770 = vadd.f32 0.0, %v769
        %v771 = vpop.f32.mrb[0].mxu0
        %v772 = vadd.f32 0.0, %v771
        %773 = vdwg.mxu0
        %vm774 = vcmp.ge.f32.partialorder %v752, 0.0
        %vm775 = vcmp.ge.f32.partialorder %v754, 0.0
        %vm776 = vcmp.ge.f32.partialorder %v758, 0.0
        %vm777 = vcmp.ge.f32.partialorder %v760, 0.0
        %vm778 = vcmp.ge.f32.partialorder %v764, 0.0
        %vm779 = vcmp.ge.f32.partialorder %v766, 0.0
        %vm780 = vcmp.ge.f32.partialorder %v770, 0.0
        %vm781 = vcmp.ge.f32.partialorder %v772, 0.0
        %v782 = vmul.f32 %v752, 0.2
        %v783 = vmul.f32 %v754, 0.2
        %v784 = vmul.f32 %v758, 0.2
        %v785 = vmul.f32 %v760, 0.2
        %v786 = vmul.f32 %v764, 0.2
        %v787 = vmul.f32 %v766, 0.2
        %v788 = vmul.f32 %v770, 0.2
        %v789 = vmul.f32 %v772, 0.2
        %v790 = vsel %vm774, %v752, %v782
        %v791 = vsel %vm775, %v754, %v783
        %v792 = vsel %vm776, %v758, %v784
        %v793 = vsel %vm777, %v760, %v785
        %v794 = vsel %vm778, %v764, %v786
        %v795 = vsel %vm779, %v766, %v787
        %v796 = vsel %vm780, %v770, %v788
        %v797 = vsel %vm781, %v772, %v789
        %v798 = vld [vmem:[#allocation8] sm:$0xff]
        %v799 = vld [vmem:[#allocation8 + $0x8] sm:$0xff]
        %v800 = vld [vmem:[#allocation8 + $0x10] sm:$0xff]
        %v801 = vld [vmem:[#allocation8 + $0x18] sm:$0xff]
        %v802 = vld [vmem:[%s7] sm:$0xff]
        %v803 = vld [vmem:[%s7 + $0x8] sm:$0xff]
        %v804 = vld [vmem:[%s7 + $0x10] sm:$0xff]
        %v805 = vld [vmem:[%s7 + $0x18] sm:$0xff]
        %807 = vset.pattern.permute.xlu0 0
        %808 = vperm.xlu0 %807, %v802
        %v809 = vpop.permute.xlu0 %808
        %812 = vset.pattern.permute.xlu0 0
        %813 = vperm.xlu0 %812, %v803
        %v814 = vpop.permute.xlu0 %813
        %817 = vset.pattern.permute.xlu0 0
        %818 = vperm.xlu0 %817, %v804
        %v819 = vpop.permute.xlu0 %818
        %822 = vset.pattern.permute.xlu0 0
        %823 = vperm.xlu0 %822, %v805
        %v824 = vpop.permute.xlu0 %823
        %vm826 = vcmask 261120
        %v828 = vsel %vm826, %v798, 0
        %v831 = vsel %vm826, %v799, 0
        %v834 = vsel %vm826, %v800, 0
        %v837 = vsel %vm826, %v801, 0
        %839 = vmatprep.subr.mxu0 %v791
        %840 = vmatpush1.msra.mxu0 %v790
        %841 = vmatprep.subr.mxu0 %v793
        %842 = vmatpush1.msra.mxu0 %v792
        %843 = vmatprep.subr.mxu0 %v795
        %844 = vmatpush1.msra.mxu0 %v794
        %845 = vmatprep.subr.mxu0 %v797
        %846 = vmatpush1.msra.mxu0 %v796
        %847 = vmatprep.subr.mxu0 0.0
        %848 = vmatpush1.msra.mxu0 0.0
        %849 = vmatprep.subr.mxu0 0.0
        %850 = vmatpush1.msra.mxu0 0.0
        %851 = vmatprep.subr.mxu0 0.0
        %852 = vmatpush1.msra.mxu0 0.0
        %853 = vmatprep.subr.mxu0 0.0
        %854 = vmatpush1.msra.mxu0 0.0
        %855 = vmatprep.subr.mxu0 0.0
        %856 = vmatpush1.msra.mxu0 0.0
        %857 = vmatprep.subr.mxu0 0.0
        %858 = vmatpush1.msra.mxu0 0.0
        %859 = vmatprep.subr.mxu0 0.0
        %860 = vmatpush1.msra.mxu0 0.0
        %861 = vmatprep.subr.mxu0 0.0
        %862 = vmatpush1.msra.mxu0 0.0
        %863 = vmatprep.subr.mxu0 0.0
        %864 = vmatpush1.msra.mxu0 0.0
        %865 = vmatprep.subr.mxu0 0.0
        %866 = vmatpush1.msra.mxu0 0.0
        %867 = vmatprep.subr.mxu0 0.0
        %868 = vmatpush1.msra.mxu0 0.0
        %869 = vmatprep.subr.mxu0 0.0
        %870 = vmatpush1.msra.mxu0 0.0
        %871 = vmatprep.subr.mxu0 0.0
        %872 = vmatpush1.msra.mxu0 0.0
        %873 = vmatprep.subr.mxu0 0.0
        %874 = vmatpush1.msra.mxu0 0.0
        %875 = vmatprep.subr.mxu0 0.0
        %876 = vmatpush1.msra.mxu0 0.0
        %877 = vmatprep.subr.mxu0 0.0
        %878 = vmatpush1.msra.mxu0 0.0
        %879 = vmatprep.subr.mxu0 0.0
        %880 = vmatpush1.msra.mxu0 0.0
        %881 = vmatprep.subr.mxu0 0.0
        %882 = vmatpush1.msra.mxu0 0.0
        %883 = vmatprep.subr.mxu0 0.0
        %884 = vmatpush1.msra.mxu0 0.0
        %885 = vmatprep.subr.mxu0 0.0
        %886 = vmatpush1.msra.mxu0 0.0
        %887 = vmatprep.subr.mxu0 0.0
        %888 = vmatpush1.msra.mxu0 0.0
        %889 = vmatprep.subr.mxu0 0.0
        %890 = vmatpush1.msra.mxu0 0.0
        %891 = vmatprep.subr.mxu0 0.0
        %892 = vmatpush1.msra.mxu0 0.0
        %893 = vmatprep.subr.mxu0 0.0
        %894 = vmatpush1.msra.mxu0 0.0
        %895 = vmatprep.subr.mxu0 0.0
        %896 = vmatpush1.msra.mxu0 0.0
        %897 = vmatprep.subr.mxu0 0.0
        %898 = vmatpush1.msra.mxu0 0.0
        %899 = vmatprep.subr.mxu0 0.0
        %900 = vmatpush1.msra.mxu0 0.0
        %901 = vmatprep.subr.mxu0 0.0
        %902 = vmatpush1.msra.mxu0 0.0
        %903 = vmatprep.mubr.f32.mxu0 0.0
        %904 = vmatmul.mubr.f32.gmra.mrb[0].mxu0 %v828
        %v905 = vpop.f32.mrb[0].mxu0
        %v906 = vadd.f32 %v809, %v905
        %v907 = vpop.f32.mrb[0].mxu0
        %v908 = vadd.f32 %v809, %v907
        %909 = vmatprep.mubr.f32.mxu0 0.0
        %910 = vmatmul.mubr.f32.gmra.mrb[0].mxu0 %v831
        %v911 = vpop.f32.mrb[0].mxu0
        %v912 = vadd.f32 %v814, %v911
        %v913 = vpop.f32.mrb[0].mxu0
        %v914 = vadd.f32 %v814, %v913
        %915 = vmatprep.mubr.f32.mxu0 0.0
        %916 = vmatmul.mubr.f32.gmra.mrb[0].mxu0 %v834
        %v917 = vpop.f32.mrb[0].mxu0
        %v918 = vadd.f32 %v819, %v917
        %v919 = vpop.f32.mrb[0].mxu0
        %v920 = vadd.f32 %v819, %v919
        %921 = vmatprep.mubr.f32.mxu0 0.0
        %922 = vmatmul.mubr.f32.gmra.mrb[0].mxu0 %v837
        %v923 = vpop.f32.mrb[0].mxu0
        %v924 = vadd.f32 %v824, %v923
        %v925 = vpop.f32.mrb[0].mxu0
        %v926 = vadd.f32 %v824, %v925
        %927 = vdwg.mxu0
        %vm928 = vcmp.ge.f32.partialorder %v906, 0.0
        %vm929 = vcmp.ge.f32.partialorder %v908, 0.0
        %vm930 = vcmp.ge.f32.partialorder %v912, 0.0
        %vm931 = vcmp.ge.f32.partialorder %v914, 0.0
        %vm932 = vcmp.ge.f32.partialorder %v918, 0.0
        %vm933 = vcmp.ge.f32.partialorder %v920, 0.0
        %vm934 = vcmp.ge.f32.partialorder %v924, 0.0
        %vm935 = vcmp.ge.f32.partialorder %v926, 0.0
        %v936 = vmul.f32 %v906, 0.2
        %v937 = vmul.f32 %v908, 0.2
        %v938 = vmul.f32 %v912, 0.2
        %v939 = vmul.f32 %v914, 0.2
        %v940 = vmul.f32 %v918, 0.2
        %v941 = vmul.f32 %v920, 0.2
        %v942 = vmul.f32 %v924, 0.2
        %v943 = vmul.f32 %v926, 0.2
        %v944 = vsel %vm928, %v906, %v936
        %v945 = vsel %vm929, %v908, %v937
        %v946 = vsel %vm930, %v912, %v938
        %v947 = vsel %vm931, %v914, %v939
        %v948 = vsel %vm932, %v918, %v940
        %v949 = vsel %vm933, %v920, %v941
        %v950 = vsel %vm934, %v924, %v942
        %v951 = vsel %vm935, %v926, %v943
        %v952 = vadd.f32 %v613, %v944
        %v953 = vadd.f32 %v614, %v945
        %v954 = vadd.f32 %v615, %v946
        %v955 = vadd.f32 %v616, %v947
        %v956 = vadd.f32 %v617, %v948
        %v957 = vadd.f32 %v618, %v949
        %v958 = vadd.f32 %v619, %v950
        %v959 = vadd.f32 %v620, %v951
        %v960 = vld [vmem:[%s2] sm:$0xff]
        %v961 = vld [vmem:[%s2 + $0x8] sm:$0xff]
        %v962 = vld [vmem:[%s2 + $0x10] sm:$0xff]
        %v963 = vld [vmem:[%s2 + $0x18] sm:$0xff]
        %v964 = vld [vmem:[%s2 + $0x20] sm:$0xff]
        %v965 = vld [vmem:[%s2 + $0x28] sm:$0xff]
        %v966 = vld [vmem:[%s2 + $0x30] sm:$0xff]
        %v967 = vld [vmem:[%s2 + $0x38] sm:$0xff]
        %v968 = vld [vmem:[%s2 + $0x40] sm:$0xff]
        %v969 = vld [vmem:[%s2 + $0x48] sm:$0xff]
        %v970 = vld [vmem:[%s2 + $0x50] sm:$0xff]
        %v971 = vld [vmem:[%s2 + $0x58] sm:$0xff]
        %v972 = vld [vmem:[%s2 + $0x60] sm:$0xff]
        %v973 = vld [vmem:[%s2 + $0x68] sm:$0xff]
        %v974 = vld [vmem:[%s2 + $0x70] sm:$0xff]
        %v975 = vld [vmem:[%s2 + $0x78] sm:$0xff]
        %v976 = vld [vmem:[%s2 + $0x80] sm:$0xff]
        %v977 = vld [vmem:[%s2 + $0x88] sm:$0xff]
        %v978 = vld [vmem:[%s2 + $0x90] sm:$0xff]
        %v979 = vld [vmem:[%s2 + $0x98] sm:$0xff]
        %v980 = vld [vmem:[%s2 + $0xa0] sm:$0xff]
        %v981 = vld [vmem:[%s2 + $0xa8] sm:$0xff]
        %v982 = vld [vmem:[%s2 + $0xb0] sm:$0xff]
        %v983 = vld [vmem:[%s2 + $0xb8] sm:$0xff]
        %v984 = vld [vmem:[%s2 + $0xc0] sm:$0xff]
        %v985 = vld [vmem:[%s2 + $0xc8] sm:$0xff]
        %v986 = vld [vmem:[%s2 + $0xd0] sm:$0xff]
        %v987 = vld [vmem:[%s2 + $0xd8] sm:$0xff]
        %v988 = vld [vmem:[%s2 + $0xe0] sm:$0xff]
        %v989 = vld [vmem:[%s2 + $0xe8] sm:$0xff]
        %v990 = vld [vmem:[%s2 + $0xf0] sm:$0xff]
        %v991 = vld [vmem:[%s2 + $0xf8] sm:$0xff]
        %992 = vmatprep.subr.mxu0 0.0
        %993 = vmatpush1.msra.mxu0 %v960
        %994 = vmatprep.subr.mxu0 0.0
        %995 = vmatpush1.msra.mxu0 %v961
        %996 = vmatprep.subr.mxu0 0.0
        %997 = vmatpush1.msra.mxu0 %v962
        %998 = vmatprep.subr.mxu0 0.0
        %999 = vmatpush1.msra.mxu0 %v963
        %1000 = vmatprep.subr.mxu0 0.0
        %1001 = vmatpush1.msra.mxu0 %v964
        %1002 = vmatprep.subr.mxu0 0.0
        %1003 = vmatpush1.msra.mxu0 %v965
        %1004 = vmatprep.subr.mxu0 0.0
        %1005 = vmatpush1.msra.mxu0 %v966
        %1006 = vmatprep.subr.mxu0 0.0
        %1007 = vmatpush1.msra.mxu0 %v967
        %1008 = vmatprep.subr.mxu0 0.0
        %1009 = vmatpush1.msra.mxu0 %v968
        %1010 = vmatprep.subr.mxu0 0.0
        %1011 = vmatpush1.msra.mxu0 %v969
        %1012 = vmatprep.subr.mxu0 0.0
        %1013 = vmatpush1.msra.mxu0 %v970
        %1014 = vmatprep.subr.mxu0 0.0
        %1015 = vmatpush1.msra.mxu0 %v971
        %1016 = vmatprep.subr.mxu0 0.0
        %1017 = vmatpush1.msra.mxu0 %v972
        %1018 = vmatprep.subr.mxu0 0.0
        %1019 = vmatpush1.msra.mxu0 %v973
        %1020 = vmatprep.subr.mxu0 0.0
        %1021 = vmatpush1.msra.mxu0 %v974
        %1022 = vmatprep.subr.mxu0 0.0
        %1023 = vmatpush1.msra.mxu0 %v975
        %1024 = vmatprep.subr.mxu0 0.0
        %1025 = vmatpush1.msra.mxu0 %v976
        %1026 = vmatprep.subr.mxu0 0.0
        %1027 = vmatpush1.msra.mxu0 %v977
        %1028 = vmatprep.subr.mxu0 0.0
        %1029 = vmatpush1.msra.mxu0 %v978
        %1030 = vmatprep.subr.mxu0 0.0
        %1031 = vmatpush1.msra.mxu0 %v979
        %1032 = vmatprep.subr.mxu0 0.0
        %1033 = vmatpush1.msra.mxu0 %v980
        %1034 = vmatprep.subr.mxu0 0.0
        %1035 = vmatpush1.msra.mxu0 %v981
        %1036 = vmatprep.subr.mxu0 0.0
        %1037 = vmatpush1.msra.mxu0 %v982
        %1038 = vmatprep.subr.mxu0 0.0
        %1039 = vmatpush1.msra.mxu0 %v983
        %1040 = vmatprep.subr.mxu0 0.0
        %1041 = vmatpush1.msra.mxu0 %v984
        %1042 = vmatprep.subr.mxu0 0.0
        %1043 = vmatpush1.msra.mxu0 %v985
        %1044 = vmatprep.subr.mxu0 0.0
        %1045 = vmatpush1.msra.mxu0 %v986
        %1046 = vmatprep.subr.mxu0 0.0
        %1047 = vmatpush1.msra.mxu0 %v987
        %1048 = vmatprep.subr.mxu0 0.0
        %1049 = vmatpush1.msra.mxu0 %v988
        %1050 = vmatprep.subr.mxu0 0.0
        %1051 = vmatpush1.msra.mxu0 %v989
        %1052 = vmatprep.subr.mxu0 0.0
        %1053 = vmatpush1.msra.mxu0 %v990
        %1054 = vmatprep.subr.mxu0 0.0
        %1055 = vmatpush1.msra.mxu0 %v991
        %1056 = vmatprep.mubr.f32.mxu0 %v953
        %1057 = vmatmul.mubr.f32.gmra.mrb[0].mxu0 %v952
        %v1058 = vpop.f32.mrb[0].mxu0
        %v1059 = vadd.f32 0.0, %v1058
        %v1060 = vpop.f32.mrb[0].mxu0
        %1061 = vmatprep.mubr.f32.mxu0 %v955
        %1062 = vmatmul.mubr.f32.gmra.mrb[0].mxu0 %v954
        %v1063 = vpop.f32.mrb[0].mxu0
        %v1064 = vadd.f32 0.0, %v1063
        %v1065 = vpop.f32.mrb[0].mxu0
        %1066 = vmatprep.mubr.f32.mxu0 %v957
        %1067 = vmatmul.mubr.f32.gmra.mrb[0].mxu0 %v956
        %v1068 = vpop.f32.mrb[0].mxu0
        %v1069 = vadd.f32 0.0, %v1068
        %v1070 = vpop.f32.mrb[0].mxu0
        %1071 = vmatprep.mubr.f32.mxu0 %v959
        %1072 = vmatmul.mubr.f32.gmra.mrb[0].mxu0 %v958
        %v1073 = vpop.f32.mrb[0].mxu0
        %v1074 = vadd.f32 0.0, %v1073
        %v1075 = vpop.f32.mrb[0].mxu0
        %1076 = vdwg.mxu0
        %v1077 = vld [vmem:[#allocation9] sm:$0xff]
        %v1078 = vld [vmem:[#allocation9 + $0x8] sm:$0xff]
        %v1079 = vld [vmem:[#allocation9 + $0x10] sm:$0xff]
        %v1080 = vld [vmem:[#allocation9 + $0x18] sm:$0xff]
        %v1081 = vld [vmem:[%s9] sm:$0xff]
        %v1082 = vld [vmem:[%s9 + $0x8] sm:$0xff]
        %v1083 = vld [vmem:[%s9 + $0x10] sm:$0xff]
        %v1084 = vld [vmem:[%s9 + $0x18] sm:$0xff]
        %1086 = vset.pattern.permute.xlu0 0
        %1087 = vperm.xlu0 %1086, %v1081
        %v1088 = vpop.permute.xlu0 %1087
        %1091 = vset.pattern.permute.xlu0 0
        %1092 = vperm.xlu0 %1091, %v1082
        %v1093 = vpop.permute.xlu0 %1092
        %1096 = vset.pattern.permute.xlu0 0
        %1097 = vperm.xlu0 %1096, %v1083
        %v1098 = vpop.permute.xlu0 %1097
        %1101 = vset.pattern.permute.xlu0 0
        %1102 = vperm.xlu0 %1101, %v1084
        %v1103 = vpop.permute.xlu0 %1102
        %v1106 = vsel %vm826, %v1077, 0
        %v1109 = vsel %vm826, %v1078, 0
        %v1112 = vsel %vm826, %v1079, 0
        %v1115 = vsel %vm826, %v1080, 0
        %1117 = vmatprep.subr.mxu0 0.0
        %1118 = vmatpush1.msra.mxu0 %v1059
        %1119 = vmatprep.subr.mxu0 0.0
        %1120 = vmatpush1.msra.mxu0 %v1064
        %1121 = vmatprep.subr.mxu0 0.0
        %1122 = vmatpush1.msra.mxu0 %v1069
        %1123 = vmatprep.subr.mxu0 0.0
        %1124 = vmatpush1.msra.mxu0 %v1074
        %1125 = vmatprep.subr.mxu0 0.0
        %1126 = vmatpush1.msra.mxu0 0.0
        %1127 = vmatprep.subr.mxu0 0.0
        %1128 = vmatpush1.msra.mxu0 0.0
        %1129 = vmatprep.subr.mxu0 0.0
        %1130 = vmatpush1.msra.mxu0 0.0
        %1131 = vmatprep.subr.mxu0 0.0
        %1132 = vmatpush1.msra.mxu0 0.0
        %1133 = vmatprep.subr.mxu0 0.0
        %1134 = vmatpush1.msra.mxu0 0.0
        %1135 = vmatprep.subr.mxu0 0.0
        %1136 = vmatpush1.msra.mxu0 0.0
        %1137 = vmatprep.subr.mxu0 0.0
        %1138 = vmatpush1.msra.mxu0 0.0
        %1139 = vmatprep.subr.mxu0 0.0
        %1140 = vmatpush1.msra.mxu0 0.0
        %1141 = vmatprep.subr.mxu0 0.0
        %1142 = vmatpush1.msra.mxu0 0.0
        %1143 = vmatprep.subr.mxu0 0.0
        %1144 = vmatpush1.msra.mxu0 0.0
        %1145 = vmatprep.subr.mxu0 0.0
        %1146 = vmatpush1.msra.mxu0 0.0
        %1147 = vmatprep.subr.mxu0 0.0
        %1148 = vmatpush1.msra.mxu0 0.0
        %1149 = vmatprep.subr.mxu0 0.0
        %1150 = vmatpush1.msra.mxu0 0.0
        %1151 = vmatprep.subr.mxu0 0.0
        %1152 = vmatpush1.msra.mxu0 0.0
        %1153 = vmatprep.subr.mxu0 0.0
        %1154 = vmatpush1.msra.mxu0 0.0
        %1155 = vmatprep.subr.mxu0 0.0
        %1156 = vmatpush1.msra.mxu0 0.0
        %1157 = vmatprep.subr.mxu0 0.0
        %1158 = vmatpush1.msra.mxu0 0.0
        %1159 = vmatprep.subr.mxu0 0.0
        %1160 = vmatpush1.msra.mxu0 0.0
        %1161 = vmatprep.subr.mxu0 0.0
        %1162 = vmatpush1.msra.mxu0 0.0
        %1163 = vmatprep.subr.mxu0 0.0
        %1164 = vmatpush1.msra.mxu0 0.0
        %1165 = vmatprep.subr.mxu0 0.0
        %1166 = vmatpush1.msra.mxu0 0.0
        %1167 = vmatprep.subr.mxu0 0.0
        %1168 = vmatpush1.msra.mxu0 0.0
        %1169 = vmatprep.subr.mxu0 0.0
        %1170 = vmatpush1.msra.mxu0 0.0
        %1171 = vmatprep.subr.mxu0 0.0
        %1172 = vmatpush1.msra.mxu0 0.0
        %1173 = vmatprep.subr.mxu0 0.0
        %1174 = vmatpush1.msra.mxu0 0.0
        %1175 = vmatprep.subr.mxu0 0.0
        %1176 = vmatpush1.msra.mxu0 0.0
        %1177 = vmatprep.subr.mxu0 0.0
        %1178 = vmatpush1.msra.mxu0 0.0
        %1179 = vmatprep.subr.mxu0 0.0
        %1180 = vmatpush1.msra.mxu0 0.0
        %1181 = vmatprep.mubr.f32.mxu0 0.0
        %1182 = vmatmul.mubr.f32.gmra.mrb[0].mxu0 %v1106
        %v1183 = vpop.f32.mrb[0].mxu0
        %v1184 = vadd.f32 %v1088, %v1183
        %v1185 = vpop.f32.mrb[0].mxu0
        %1186 = vmatprep.mubr.f32.mxu0 0.0
        %1187 = vmatmul.mubr.f32.gmra.mrb[0].mxu0 %v1109
        %v1188 = vpop.f32.mrb[0].mxu0
        %v1189 = vadd.f32 %v1093, %v1188
        %v1190 = vpop.f32.mrb[0].mxu0
        %1191 = vmatprep.mubr.f32.mxu0 0.0
        %1192 = vmatmul.mubr.f32.gmra.mrb[0].mxu0 %v1112
        %v1193 = vpop.f32.mrb[0].mxu0
        %v1194 = vadd.f32 %v1098, %v1193
        %v1195 = vpop.f32.mrb[0].mxu0
        %1196 = vmatprep.mubr.f32.mxu0 0.0
        %1197 = vmatmul.mubr.f32.gmra.mrb[0].mxu0 %v1115
        %v1198 = vpop.f32.mrb[0].mxu0
        %v1199 = vadd.f32 %v1103, %v1198
        %v1200 = vpop.f32.mrb[0].mxu0
        %1201 = vdwg.mxu0
        %vm1202 = vcmp.ge.f32.partialorder %v1184, 0.0
        %vm1203 = vcmp.ge.f32.partialorder %v1189, 0.0
        %vm1204 = vcmp.ge.f32.partialorder %v1194, 0.0
        %vm1205 = vcmp.ge.f32.partialorder %v1199, 0.0
        %v1206 = vmul.f32 %v1184, 0.2
        %v1207 = vmul.f32 %v1189, 0.2
        %v1208 = vmul.f32 %v1194, 0.2
        %v1209 = vmul.f32 %v1199, 0.2
        %v1210 = vsel %vm1202, %v1184, %v1206
        %v1211 = vsel %vm1203, %v1189, %v1207
        %v1212 = vsel %vm1204, %v1194, %v1208
        %v1213 = vsel %vm1205, %v1199, %v1209
        %v1214 = vld [vmem:[#allocation11] sm:$0xff]
        %v1216 = vsel %vm826, %v1214, 0
        %1218 = vmatprep.subr.mxu0 0.0
        %1219 = vmatpush1.msra.mxu0 %v1210
        %1220 = vmatprep.subr.mxu0 0.0
        %1221 = vmatpush1.msra.mxu0 %v1211
        %1222 = vmatprep.subr.mxu0 0.0
        %1223 = vmatpush1.msra.mxu0 %v1212
        %1224 = vmatprep.subr.mxu0 0.0
        %1225 = vmatpush1.msra.mxu0 %v1213
        %1226 = vmatprep.subr.mxu0 0.0
        %1227 = vmatpush1.msra.mxu0 0.0
        %1228 = vmatprep.subr.mxu0 0.0
        %1229 = vmatpush1.msra.mxu0 0.0
        %1230 = vmatprep.subr.mxu0 0.0
        %1231 = vmatpush1.msra.mxu0 0.0
        %1232 = vmatprep.subr.mxu0 0.0
        %1233 = vmatpush1.msra.mxu0 0.0
        %1234 = vmatprep.subr.mxu0 0.0
        %1235 = vmatpush1.msra.mxu0 0.0
        %1236 = vmatprep.subr.mxu0 0.0
        %1237 = vmatpush1.msra.mxu0 0.0
        %1238 = vmatprep.subr.mxu0 0.0
        %1239 = vmatpush1.msra.mxu0 0.0
        %1240 = vmatprep.subr.mxu0 0.0
        %1241 = vmatpush1.msra.mxu0 0.0
        %1242 = vmatprep.subr.mxu0 0.0
        %1243 = vmatpush1.msra.mxu0 0.0
        %1244 = vmatprep.subr.mxu0 0.0
        %1245 = vmatpush1.msra.mxu0 0.0
        %1246 = vmatprep.subr.mxu0 0.0
        %1247 = vmatpush1.msra.mxu0 0.0
        %1248 = vmatprep.subr.mxu0 0.0
        %1249 = vmatpush1.msra.mxu0 0.0
        %1250 = vmatprep.subr.mxu0 0.0
        %1251 = vmatpush1.msra.mxu0 0.0
        %1252 = vmatprep.subr.mxu0 0.0
        %1253 = vmatpush1.msra.mxu0 0.0
        %1254 = vmatprep.subr.mxu0 0.0
        %1255 = vmatpush1.msra.mxu0 0.0
        %1256 = vmatprep.subr.mxu0 0.0
        %1257 = vmatpush1.msra.mxu0 0.0
        %1258 = vmatprep.subr.mxu0 0.0
        %1259 = vmatpush1.msra.mxu0 0.0
        %1260 = vmatprep.subr.mxu0 0.0
        %1261 = vmatpush1.msra.mxu0 0.0
        %1262 = vmatprep.subr.mxu0 0.0
        %1263 = vmatpush1.msra.mxu0 0.0
        %1264 = vmatprep.subr.mxu0 0.0
        %1265 = vmatpush1.msra.mxu0 0.0
        %1266 = vmatprep.subr.mxu0 0.0
        %1267 = vmatpush1.msra.mxu0 0.0
        %1268 = vmatprep.subr.mxu0 0.0
        %1269 = vmatpush1.msra.mxu0 0.0
        %1270 = vmatprep.subr.mxu0 0.0
        %1271 = vmatpush1.msra.mxu0 0.0
        %1272 = vmatprep.subr.mxu0 0.0
        %1273 = vmatpush1.msra.mxu0 0.0
        %1274 = vmatprep.subr.mxu0 0.0
        %1275 = vmatpush1.msra.mxu0 0.0
        %1276 = vmatprep.subr.mxu0 0.0
        %1277 = vmatpush1.msra.mxu0 0.0
        %1278 = vmatprep.subr.mxu0 0.0
        %1279 = vmatpush1.msra.mxu0 0.0
        %1280 = vmatprep.subr.mxu0 0.0
        %1281 = vmatpush1.msra.mxu0 0.0
        %1282 = vmatprep.mubr.f32.mxu0 0.0
        %1283 = vmatmul.mubr.f32.gmra.mrb[0].mxu0 %v1216
        %v1284 = vpop.f32.mrb[0].mxu0
        %v1285 = vadd.f32 0.0, %v1284
        %v1286 = vpop.f32.mrb[0].mxu0
        %1287 = vdwg.mxu0
        %v1288 = vld [vmem:[#allocation3] sm:$0xff]
        %v1289 = vld [vmem:[#allocation3 + $0x8] sm:$0xff]
        %v1290 = vld [vmem:[#allocation3 + $0x10] sm:$0xff]
        %v1291 = vld [vmem:[#allocation3 + $0x18] sm:$0xff]
        %v1292 = vld [vmem:[#allocation3 + $0x20] sm:$0xff]
        %v1293 = vld [vmem:[#allocation3 + $0x28] sm:$0xff]
        %v1294 = vld [vmem:[#allocation3 + $0x30] sm:$0xff]
        %v1295 = vld [vmem:[#allocation3 + $0x38] sm:$0xff]
        %v1297 = vsel %vm826, %v1285, 0
        %1299 = vmatprep.subr.mxu0 %v1289
        %1300 = vmatpush1.msra.mxu0 %v1288
        %1301 = vmatprep.subr.mxu0 %v1291
        %1302 = vmatpush1.msra.mxu0 %v1290
        %1303 = vmatprep.subr.mxu0 %v1293
        %1304 = vmatpush1.msra.mxu0 %v1292
        %1305 = vmatprep.subr.mxu0 %v1295
        %1306 = vmatpush1.msra.mxu0 %v1294
        %1307 = vmatprep.subr.mxu0 0.0
        %1308 = vmatpush1.msra.mxu0 0.0
        %1309 = vmatprep.subr.mxu0 0.0
        %1310 = vmatpush1.msra.mxu0 0.0
        %1311 = vmatprep.subr.mxu0 0.0
        %1312 = vmatpush1.msra.mxu0 0.0
        %1313 = vmatprep.subr.mxu0 0.0
        %1314 = vmatpush1.msra.mxu0 0.0
        %1315 = vmatprep.subr.mxu0 0.0
        %1316 = vmatpush1.msra.mxu0 0.0
        %1317 = vmatprep.subr.mxu0 0.0
        %1318 = vmatpush1.msra.mxu0 0.0
        %1319 = vmatprep.subr.mxu0 0.0
        %1320 = vmatpush1.msra.mxu0 0.0
        %1321 = vmatprep.subr.mxu0 0.0
        %1322 = vmatpush1.msra.mxu0 0.0
        %1323 = vmatprep.subr.mxu0 0.0
        %1324 = vmatpush1.msra.mxu0 0.0
        %1325 = vmatprep.subr.mxu0 0.0
        %1326 = vmatpush1.msra.mxu0 0.0
        %1327 = vmatprep.subr.mxu0 0.0
        %1328 = vmatpush1.msra.mxu0 0.0
        %1329 = vmatprep.subr.mxu0 0.0
        %1330 = vmatpush1.msra.mxu0 0.0
        %1331 = vmatprep.subr.mxu0 0.0
        %1332 = vmatpush1.msra.mxu0 0.0
        %1333 = vmatprep.subr.mxu0 0.0
        %1334 = vmatpush1.msra.mxu0 0.0
        %1335 = vmatprep.subr.mxu0 0.0
        %1336 = vmatpush1.msra.mxu0 0.0
        %1337 = vmatprep.subr.mxu0 0.0
        %1338 = vmatpush1.msra.mxu0 0.0
        %1339 = vmatprep.subr.mxu0 0.0
        %1340 = vmatpush1.msra.mxu0 0.0
        %1341 = vmatprep.subr.mxu0 0.0
        %1342 = vmatpush1.msra.mxu0 0.0
        %1343 = vmatprep.subr.mxu0 0.0
        %1344 = vmatpush1.msra.mxu0 0.0
        %1345 = vmatprep.subr.mxu0 0.0
        %1346 = vmatpush1.msra.mxu0 0.0
        %1347 = vmatprep.subr.mxu0 0.0
        %1348 = vmatpush1.msra.mxu0 0.0
        %1349 = vmatprep.subr.mxu0 0.0
        %1350 = vmatpush1.msra.mxu0 0.0
        %1351 = vmatprep.subr.mxu0 0.0
        %1352 = vmatpush1.msra.mxu0 0.0
        %1353 = vmatprep.subr.mxu0 0.0
        %1354 = vmatpush1.msra.mxu0 0.0
        %1355 = vmatprep.subr.mxu0 0.0
        %1356 = vmatpush1.msra.mxu0 0.0
        %1357 = vmatprep.subr.mxu0 0.0
        %1358 = vmatpush1.msra.mxu0 0.0
        %1359 = vmatprep.subr.mxu0 0.0
        %1360 = vmatpush1.msra.mxu0 0.0
        %1361 = vmatprep.subr.mxu0 0.0
        %1362 = vmatpush1.msra.mxu0 0.0
        %1363 = vmatprep.mubr.f32.mxu0 0.0
        %1364 = vmatmul.mubr.f32.gmra.mrb[0].mxu0 %v1297
        %v1365 = vpop.f32.mrb[0].mxu0
        %v1366 = vadd.f32 0.0, %v1365
        %v1367 = vpop.f32.mrb[0].mxu0
        %v1368 = vadd.f32 0.0, %v1367
        %1369 = vdwg.mxu0
        %v1370 = vld [vmem:[#allocation12] sm:$0xff]
        %v1372 = vsel %vm826, %v1370, 0
        %1374 = vmatprep.subr.mxu0 %v953
        %1375 = vmatpush1.msra.mxu0 %v952
        %1376 = vmatprep.subr.mxu0 %v955
        %1377 = vmatpush1.msra.mxu0 %v954
        %1378 = vmatprep.subr.mxu0 %v957
        %1379 = vmatpush1.msra.mxu0 %v956
        %1380 = vmatprep.subr.mxu0 %v959
        %1381 = vmatpush1.msra.mxu0 %v958
        %1382 = vmatprep.subr.mxu0 0.0
        %1383 = vmatpush1.msra.mxu0 0.0
        %1384 = vmatprep.subr.mxu0 0.0
        %1385 = vmatpush1.msra.mxu0 0.0
        %1386 = vmatprep.subr.mxu0 0.0
        %1387 = vmatpush1.msra.mxu0 0.0
        %1388 = vmatprep.subr.mxu0 0.0
        %1389 = vmatpush1.msra.mxu0 0.0
        %1390 = vmatprep.subr.mxu0 0.0
        %1391 = vmatpush1.msra.mxu0 0.0
        %1392 = vmatprep.subr.mxu0 0.0
        %1393 = vmatpush1.msra.mxu0 0.0
        %1394 = vmatprep.subr.mxu0 0.0
        %1395 = vmatpush1.msra.mxu0 0.0
        %1396 = vmatprep.subr.mxu0 0.0
        %1397 = vmatpush1.msra.mxu0 0.0
        %1398 = vmatprep.subr.mxu0 0.0
        %1399 = vmatpush1.msra.mxu0 0.0
        %1400 = vmatprep.subr.mxu0 0.0
        %1401 = vmatpush1.msra.mxu0 0.0
        %1402 = vmatprep.subr.mxu0 0.0
        %1403 = vmatpush1.msra.mxu0 0.0
        %1404 = vmatprep.subr.mxu0 0.0
        %1405 = vmatpush1.msra.mxu0 0.0
        %1406 = vmatprep.subr.mxu0 0.0
        %1407 = vmatpush1.msra.mxu0 0.0
        %1408 = vmatprep.subr.mxu0 0.0
        %1409 = vmatpush1.msra.mxu0 0.0
        %1410 = vmatprep.subr.mxu0 0.0
        %1411 = vmatpush1.msra.mxu0 0.0
        %1412 = vmatprep.subr.mxu0 0.0
        %1413 = vmatpush1.msra.mxu0 0.0
        %1414 = vmatprep.subr.mxu0 0.0
        %1415 = vmatpush1.msra.mxu0 0.0
        %1416 = vmatprep.subr.mxu0 0.0
        %1417 = vmatpush1.msra.mxu0 0.0
        %1418 = vmatprep.subr.mxu0 0.0
        %1419 = vmatpush1.msra.mxu0 0.0
        %1420 = vmatprep.subr.mxu0 0.0
        %1421 = vmatpush1.msra.mxu0 0.0
        %1422 = vmatprep.subr.mxu0 0.0
        %1423 = vmatpush1.msra.mxu0 0.0
        %1424 = vmatprep.subr.mxu0 0.0
        %1425 = vmatpush1.msra.mxu0 0.0
        %1426 = vmatprep.subr.mxu0 0.0
        %1427 = vmatpush1.msra.mxu0 0.0
        %1428 = vmatprep.subr.mxu0 0.0
        %1429 = vmatpush1.msra.mxu0 0.0
        %1430 = vmatprep.subr.mxu0 0.0
        %1431 = vmatpush1.msra.mxu0 0.0
        %1432 = vmatprep.subr.mxu0 0.0
        %1433 = vmatpush1.msra.mxu0 0.0
        %1434 = vmatprep.subr.mxu0 0.0
        %1435 = vmatpush1.msra.mxu0 0.0
        %1436 = vmatprep.subr.mxu0 0.0
        %1437 = vmatpush1.msra.mxu0 0.0
        %1438 = vmatprep.mubr.f32.mxu0 0.0
        %1439 = vmatmul.mubr.f32.gmra.mrb[0].mxu0 %v1372
        %v1440 = vpop.f32.mrb[0].mxu0
        %v1441 = vadd.f32 %v1366, %v1440
        %v1442 = vpop.f32.mrb[0].mxu0
        %v1443 = vadd.f32 %v1368, %v1442
        %1444 = vdwg.mxu0
        %v1445 = vld [vmem:[%s12] sm:$0xff]
        %1447 = vset.pattern.permute.xlu0 0
        %1448 = vperm.xlu0 %1447, %v1445
        %v1449 = vpop.permute.xlu0 %1448
        %v1451 = vadd.f32 %v1441, %v1449
        %v1452 = vadd.f32 %v1443, %v1449
        %v1453 = vxor.u32 %v1451, 2147483648
        %v1454 = vxor.u32 %v1452, 2147483648
        %v1455 = vmul.f32 %v1453, 1.442695
        %v1456 = vpow.pop %v1455
        %v1457 = vmul.f32 %v1454, 1.442695
        %v1458 = vpow.pop %v1457
        %v1459 = vadd.f32 %v1456, 1.0
        %v1460 = vadd.f32 %v1458, 1.0
        %v1461 = vrcp.pop %v1459
        %v1462 = vmul.f32 1.0, %v1461
        %v1463 = vrcp.pop %v1460
        %v1464 = vmul.f32 1.0, %v1463
        %v1465 = vld [vmem:[%s4] sm:$0xff]
        %v1466 = vld [vmem:[%s4 + $0x8] sm:$0xff]
        %v1467 = vld [vmem:[%s4 + $0x10] sm:$0xff]
        %v1468 = vld [vmem:[%s4 + $0x18] sm:$0xff]
        %v1469 = vld [vmem:[%s4 + $0x20] sm:$0xff]
        %v1470 = vld [vmem:[%s4 + $0x28] sm:$0xff]
        %v1471 = vld [vmem:[%s4 + $0x30] sm:$0xff]
        %v1472 = vld [vmem:[%s4 + $0x38] sm:$0xff]
        %v1473 = vld [vmem:[%s4 + $0x40] sm:$0xff]
        %v1474 = vld [vmem:[%s4 + $0x48] sm:$0xff]
        %v1475 = vld [vmem:[%s4 + $0x50] sm:$0xff]
        %v1476 = vld [vmem:[%s4 + $0x58] sm:$0xff]
        %v1477 = vld [vmem:[%s4 + $0x60] sm:$0xff]
        %v1478 = vld [vmem:[%s4 + $0x68] sm:$0xff]
        %v1479 = vld [vmem:[%s4 + $0x70] sm:$0xff]
        %v1480 = vld [vmem:[%s4 + $0x78] sm:$0xff]
        %v1481 = vld [vmem:[%s4 + $0x80] sm:$0xff]
        %v1482 = vld [vmem:[%s4 + $0x88] sm:$0xff]
        %v1483 = vld [vmem:[%s4 + $0x90] sm:$0xff]
        %v1484 = vld [vmem:[%s4 + $0x98] sm:$0xff]
        %v1485 = vld [vmem:[%s4 + $0xa0] sm:$0xff]
        %v1486 = vld [vmem:[%s4 + $0xa8] sm:$0xff]
        %v1487 = vld [vmem:[%s4 + $0xb0] sm:$0xff]
        %v1488 = vld [vmem:[%s4 + $0xb8] sm:$0xff]
        %v1489 = vld [vmem:[%s4 + $0xc0] sm:$0xff]
        %v1490 = vld [vmem:[%s4 + $0xc8] sm:$0xff]
        %v1491 = vld [vmem:[%s4 + $0xd0] sm:$0xff]
        %v1492 = vld [vmem:[%s4 + $0xd8] sm:$0xff]
        %v1493 = vld [vmem:[%s4 + $0xe0] sm:$0xff]
        %v1494 = vld [vmem:[%s4 + $0xe8] sm:$0xff]
        %v1495 = vld [vmem:[%s4 + $0xf0] sm:$0xff]
        %v1496 = vld [vmem:[%s4 + $0xf8] sm:$0xff]
        %vm1497 = vcmask 64512
        %v1499 = vsel %vm1497, %v1465, 0
        %v1502 = vsel %vm1497, %v1466, 0
        %v1505 = vsel %vm1497, %v1467, 0
        %v1508 = vsel %vm1497, %v1468, 0
        %v1511 = vsel %vm1497, %v1469, 0
        %v1514 = vsel %vm1497, %v1470, 0
        %v1517 = vsel %vm1497, %v1471, 0
        %v1520 = vsel %vm1497, %v1472, 0
        %v1523 = vsel %vm1497, %v1473, 0
        %v1526 = vsel %vm1497, %v1474, 0
        %v1529 = vsel %vm1497, %v1475, 0
        %v1532 = vsel %vm1497, %v1476, 0
        %v1535 = vsel %vm1497, %v1477, 0
        %v1538 = vsel %vm1497, %v1478, 0
        %v1541 = vsel %vm1497, %v1479, 0
        %v1544 = vsel %vm1497, %v1480, 0
        %v1547 = vsel %vm1497, %v1481, 0
        %v1550 = vsel %vm1497, %v1482, 0
        %v1553 = vsel %vm1497, %v1483, 0
        %v1556 = vsel %vm1497, %v1484, 0
        %v1559 = vsel %vm1497, %v1485, 0
        %v1562 = vsel %vm1497, %v1486, 0
        %v1565 = vsel %vm1497, %v1487, 0
        %v1568 = vsel %vm1497, %v1488, 0
        %v1571 = vsel %vm1497, %v1489, 0
        %v1574 = vsel %vm1497, %v1490, 0
        %v1577 = vsel %vm1497, %v1491, 0
        %v1580 = vsel %vm1497, %v1492, 0
        %v1583 = vsel %vm1497, %v1493, 0
        %v1586 = vsel %vm1497, %v1494, 0
        %v1589 = vsel %vm1497, %v1495, 0
        %v1592 = vsel %vm1497, %v1496, 0
        %1594 = vmatprep.subr.mxu0 %v1464
        %1595 = vmatpush1.msra.mxu0 %v1462
        %1596 = vmatprep.subr.mxu0 0.0
        %1597 = vmatpush1.msra.mxu0 0.0
        %1598 = vmatprep.subr.mxu0 0.0
        %1599 = vmatpush1.msra.mxu0 0.0
        %1600 = vmatprep.subr.mxu0 0.0
        %1601 = vmatpush1.msra.mxu0 0.0
        %1602 = vmatprep.subr.mxu0 0.0
        %1603 = vmatpush1.msra.mxu0 0.0
        %1604 = vmatprep.subr.mxu0 0.0
        %1605 = vmatpush1.msra.mxu0 0.0
        %1606 = vmatprep.subr.mxu0 0.0
        %1607 = vmatpush1.msra.mxu0 0.0
        %1608 = vmatprep.subr.mxu0 0.0
        %1609 = vmatpush1.msra.mxu0 0.0
        %1610 = vmatprep.subr.mxu0 0.0
        %1611 = vmatpush1.msra.mxu0 0.0
        %1612 = vmatprep.subr.mxu0 0.0
        %1613 = vmatpush1.msra.mxu0 0.0
        %1614 = vmatprep.subr.mxu0 0.0
        %1615 = vmatpush1.msra.mxu0 0.0
        %1616 = vmatprep.subr.mxu0 0.0
        %1617 = vmatpush1.msra.mxu0 0.0
        %1618 = vmatprep.subr.mxu0 0.0
        %1619 = vmatpush1.msra.mxu0 0.0
        %1620 = vmatprep.subr.mxu0 0.0
        %1621 = vmatpush1.msra.mxu0 0.0
        %1622 = vmatprep.subr.mxu0 0.0
        %1623 = vmatpush1.msra.mxu0 0.0
        %1624 = vmatprep.subr.mxu0 0.0
        %1625 = vmatpush1.msra.mxu0 0.0
        %1626 = vmatprep.subr.mxu0 0.0
        %1627 = vmatpush1.msra.mxu0 0.0
        %1628 = vmatprep.subr.mxu0 0.0
        %1629 = vmatpush1.msra.mxu0 0.0
        %1630 = vmatprep.subr.mxu0 0.0
        %1631 = vmatpush1.msra.mxu0 0.0
        %1632 = vmatprep.subr.mxu0 0.0
        %1633 = vmatpush1.msra.mxu0 0.0
        %1634 = vmatprep.subr.mxu0 0.0
        %1635 = vmatpush1.msra.mxu0 0.0
        %1636 = vmatprep.subr.mxu0 0.0
        %1637 = vmatpush1.msra.mxu0 0.0
        %1638 = vmatprep.subr.mxu0 0.0
        %1639 = vmatpush1.msra.mxu0 0.0
        %1640 = vmatprep.subr.mxu0 0.0
        %1641 = vmatpush1.msra.mxu0 0.0
        %1642 = vmatprep.subr.mxu0 0.0
        %1643 = vmatpush1.msra.mxu0 0.0
        %1644 = vmatprep.subr.mxu0 0.0
        %1645 = vmatpush1.msra.mxu0 0.0
        %1646 = vmatprep.subr.mxu0 0.0
        %1647 = vmatpush1.msra.mxu0 0.0
        %1648 = vmatprep.subr.mxu0 0.0
        %1649 = vmatpush1.msra.mxu0 0.0
        %1650 = vmatprep.subr.mxu0 0.0
        %1651 = vmatpush1.msra.mxu0 0.0
        %1652 = vmatprep.subr.mxu0 0.0
        %1653 = vmatpush1.msra.mxu0 0.0
        %1654 = vmatprep.subr.mxu0 0.0
        %1655 = vmatpush1.msra.mxu0 0.0
        %1656 = vmatprep.subr.mxu0 0.0
        %1657 = vmatpush1.msra.mxu0 0.0
        %1658 = vmatprep.mubr.f32.mxu0 0.0
        %1659 = vmatmul.mubr.f32.gmra.mrb[0].mxu0 %v1499
        %v1660 = vpop.f32.mrb[0].mxu0
        %v1661 = vadd.f32 0.0, %v1660
        %v1662 = vpop.f32.mrb[0].mxu0
        %v1663 = vadd.f32 0.0, %v1662
        %1664 = vmatprep.mubr.f32.mxu0 0.0
        %1665 = vmatmul.mubr.f32.gmra.mrb[0].mxu0 %v1502
        %v1666 = vpop.f32.mrb[0].mxu0
        %v1667 = vadd.f32 0.0, %v1666
        %v1668 = vpop.f32.mrb[0].mxu0
        %v1669 = vadd.f32 0.0, %v1668
        %1670 = vmatprep.mubr.f32.mxu0 0.0
        %1671 = vmatmul.mubr.f32.gmra.mrb[0].mxu0 %v1505
        %v1672 = vpop.f32.mrb[0].mxu0
        %v1673 = vadd.f32 0.0, %v1672
        %v1674 = vpop.f32.mrb[0].mxu0
        %v1675 = vadd.f32 0.0, %v1674
        %1676 = vmatprep.mubr.f32.mxu0 0.0
        %1677 = vmatmul.mubr.f32.gmra.mrb[0].mxu0 %v1508
        %v1678 = vpop.f32.mrb[0].mxu0
        %v1679 = vadd.f32 0.0, %v1678
        %v1680 = vpop.f32.mrb[0].mxu0
        %v1681 = vadd.f32 0.0, %v1680
        %1682 = vmatprep.mubr.f32.mxu0 0.0
        %1683 = vmatmul.mubr.f32.gmra.mrb[0].mxu0 %v1511
        %v1684 = vpop.f32.mrb[0].mxu0
        %v1685 = vadd.f32 0.0, %v1684
        %v1686 = vpop.f32.mrb[0].mxu0
        %v1687 = vadd.f32 0.0, %v1686
        %1688 = vmatprep.mubr.f32.mxu0 0.0
        %1689 = vmatmul.mubr.f32.gmra.mrb[0].mxu0 %v1514
        %v1690 = vpop.f32.mrb[0].mxu0
        %v1691 = vadd.f32 0.0, %v1690
        %v1692 = vpop.f32.mrb[0].mxu0
        %v1693 = vadd.f32 0.0, %v1692
        %1694 = vmatprep.mubr.f32.mxu0 0.0
        %1695 = vmatmul.mubr.f32.gmra.mrb[0].mxu0 %v1517
        %v1696 = vpop.f32.mrb[0].mxu0
        %v1697 = vadd.f32 0.0, %v1696
        %v1698 = vpop.f32.mrb[0].mxu0
        %v1699 = vadd.f32 0.0, %v1698
        %1700 = vmatprep.mubr.f32.mxu0 0.0
        %1701 = vmatmul.mubr.f32.gmra.mrb[0].mxu0 %v1520
        %v1702 = vpop.f32.mrb[0].mxu0
        %v1703 = vadd.f32 0.0, %v1702
        %v1704 = vpop.f32.mrb[0].mxu0
        %v1705 = vadd.f32 0.0, %v1704
        %1706 = vmatprep.mubr.f32.mxu0 0.0
        %1707 = vmatmul.mubr.f32.gmra.mrb[0].mxu0 %v1523
        %v1708 = vpop.f32.mrb[0].mxu0
        %v1709 = vadd.f32 0.0, %v1708
        %v1710 = vpop.f32.mrb[0].mxu0
        %v1711 = vadd.f32 0.0, %v1710
        %1712 = vmatprep.mubr.f32.mxu0 0.0
        %1713 = vmatmul.mubr.f32.gmra.mrb[0].mxu0 %v1526
        %v1714 = vpop.f32.mrb[0].mxu0
        %v1715 = vadd.f32 0.0, %v1714
        %v1716 = vpop.f32.mrb[0].mxu0
        %v1717 = vadd.f32 0.0, %v1716
        %1718 = vmatprep.mubr.f32.mxu0 0.0
        %1719 = vmatmul.mubr.f32.gmra.mrb[0].mxu0 %v1529
        %v1720 = vpop.f32.mrb[0].mxu0
        %v1721 = vadd.f32 0.0, %v1720
        %v1722 = vpop.f32.mrb[0].mxu0
        %v1723 = vadd.f32 0.0, %v1722
        %1724 = vmatprep.mubr.f32.mxu0 0.0
        %1725 = vmatmul.mubr.f32.gmra.mrb[0].mxu0 %v1532
        %v1726 = vpop.f32.mrb[0].mxu0
        %v1727 = vadd.f32 0.0, %v1726
        %v1728 = vpop.f32.mrb[0].mxu0
        %v1729 = vadd.f32 0.0, %v1728
        %1730 = vmatprep.mubr.f32.mxu0 0.0
        %1731 = vmatmul.mubr.f32.gmra.mrb[0].mxu0 %v1535
        %v1732 = vpop.f32.mrb[0].mxu0
        %v1733 = vadd.f32 0.0, %v1732
        %v1734 = vpop.f32.mrb[0].mxu0
        %v1735 = vadd.f32 0.0, %v1734
        %1736 = vmatprep.mubr.f32.mxu0 0.0
        %1737 = vmatmul.mubr.f32.gmra.mrb[0].mxu0 %v1538
        %v1738 = vpop.f32.mrb[0].mxu0
        %v1739 = vadd.f32 0.0, %v1738
        %v1740 = vpop.f32.mrb[0].mxu0
        %v1741 = vadd.f32 0.0, %v1740
        %1742 = vmatprep.mubr.f32.mxu0 0.0
        %1743 = vmatmul.mubr.f32.gmra.mrb[0].mxu0 %v1541
        %v1744 = vpop.f32.mrb[0].mxu0
        %v1745 = vadd.f32 0.0, %v1744
        %v1746 = vpop.f32.mrb[0].mxu0
        %v1747 = vadd.f32 0.0, %v1746
        %1748 = vmatprep.mubr.f32.mxu0 0.0
        %1749 = vmatmul.mubr.f32.gmra.mrb[0].mxu0 %v1544
        %v1750 = vpop.f32.mrb[0].mxu0
        %v1751 = vadd.f32 0.0, %v1750
        %v1752 = vpop.f32.mrb[0].mxu0
        %v1753 = vadd.f32 0.0, %v1752
        %1754 = vmatprep.mubr.f32.mxu0 0.0
        %1755 = vmatmul.mubr.f32.gmra.mrb[0].mxu0 %v1547
        %v1756 = vpop.f32.mrb[0].mxu0
        %v1757 = vadd.f32 0.0, %v1756
        %v1758 = vpop.f32.mrb[0].mxu0
        %v1759 = vadd.f32 0.0, %v1758
        %1760 = vmatprep.mubr.f32.mxu0 0.0
        %1761 = vmatmul.mubr.f32.gmra.mrb[0].mxu0 %v1550
        %v1762 = vpop.f32.mrb[0].mxu0
        %v1763 = vadd.f32 0.0, %v1762
        %v1764 = vpop.f32.mrb[0].mxu0
        %v1765 = vadd.f32 0.0, %v1764
        %1766 = vmatprep.mubr.f32.mxu0 0.0
        %1767 = vmatmul.mubr.f32.gmra.mrb[0].mxu0 %v1553
        %v1768 = vpop.f32.mrb[0].mxu0
        %v1769 = vadd.f32 0.0, %v1768
        %v1770 = vpop.f32.mrb[0].mxu0
        %v1771 = vadd.f32 0.0, %v1770
        %1772 = vmatprep.mubr.f32.mxu0 0.0
        %1773 = vmatmul.mubr.f32.gmra.mrb[0].mxu0 %v1556
        %v1774 = vpop.f32.mrb[0].mxu0
        %v1775 = vadd.f32 0.0, %v1774
        %v1776 = vpop.f32.mrb[0].mxu0
        %v1777 = vadd.f32 0.0, %v1776
        %1778 = vmatprep.mubr.f32.mxu0 0.0
        %1779 = vmatmul.mubr.f32.gmra.mrb[0].mxu0 %v1559
        %v1780 = vpop.f32.mrb[0].mxu0
        %v1781 = vadd.f32 0.0, %v1780
        %v1782 = vpop.f32.mrb[0].mxu0
        %v1783 = vadd.f32 0.0, %v1782
        %1784 = vmatprep.mubr.f32.mxu0 0.0
        %1785 = vmatmul.mubr.f32.gmra.mrb[0].mxu0 %v1562
        %v1786 = vpop.f32.mrb[0].mxu0
        %v1787 = vadd.f32 0.0, %v1786
        %v1788 = vpop.f32.mrb[0].mxu0
        %v1789 = vadd.f32 0.0, %v1788
        %1790 = vmatprep.mubr.f32.mxu0 0.0
        %1791 = vmatmul.mubr.f32.gmra.mrb[0].mxu0 %v1565
        %v1792 = vpop.f32.mrb[0].mxu0
        %v1793 = vadd.f32 0.0, %v1792
        %v1794 = vpop.f32.mrb[0].mxu0
        %v1795 = vadd.f32 0.0, %v1794
        %1796 = vmatprep.mubr.f32.mxu0 0.0
        %1797 = vmatmul.mubr.f32.gmra.mrb[0].mxu0 %v1568
        %v1798 = vpop.f32.mrb[0].mxu0
        %v1799 = vadd.f32 0.0, %v1798
        %v1800 = vpop.f32.mrb[0].mxu0
        %v1801 = vadd.f32 0.0, %v1800
        %1802 = vmatprep.mubr.f32.mxu0 0.0
        %1803 = vmatmul.mubr.f32.gmra.mrb[0].mxu0 %v1571
        %v1804 = vpop.f32.mrb[0].mxu0
        %v1805 = vadd.f32 0.0, %v1804
        %v1806 = vpop.f32.mrb[0].mxu0
        %v1807 = vadd.f32 0.0, %v1806
        %1808 = vmatprep.mubr.f32.mxu0 0.0
        %1809 = vmatmul.mubr.f32.gmra.mrb[0].mxu0 %v1574
        %v1810 = vpop.f32.mrb[0].mxu0
        %v1811 = vadd.f32 0.0, %v1810
        %v1812 = vpop.f32.mrb[0].mxu0
        %v1813 = vadd.f32 0.0, %v1812
        %1814 = vmatprep.mubr.f32.mxu0 0.0
        %1815 = vmatmul.mubr.f32.gmra.mrb[0].mxu0 %v1577
        %v1816 = vpop.f32.mrb[0].mxu0
        %v1817 = vadd.f32 0.0, %v1816
        %v1818 = vpop.f32.mrb[0].mxu0
        %v1819 = vadd.f32 0.0, %v1818
        %1820 = vmatprep.mubr.f32.mxu0 0.0
        %1821 = vmatmul.mubr.f32.gmra.mrb[0].mxu0 %v1580
        %v1822 = vpop.f32.mrb[0].mxu0
        %v1823 = vadd.f32 0.0, %v1822
        %v1824 = vpop.f32.mrb[0].mxu0
        %v1825 = vadd.f32 0.0, %v1824
        %1826 = vmatprep.mubr.f32.mxu0 0.0
        %1827 = vmatmul.mubr.f32.gmra.mrb[0].mxu0 %v1583
        %v1828 = vpop.f32.mrb[0].mxu0
        %v1829 = vadd.f32 0.0, %v1828
        %v1830 = vpop.f32.mrb[0].mxu0
        %v1831 = vadd.f32 0.0, %v1830
        %1832 = vmatprep.mubr.f32.mxu0 0.0
        %1833 = vmatmul.mubr.f32.gmra.mrb[0].mxu0 %v1586
        %v1834 = vpop.f32.mrb[0].mxu0
        %v1835 = vadd.f32 0.0, %v1834
        %v1836 = vpop.f32.mrb[0].mxu0
        %v1837 = vadd.f32 0.0, %v1836
        %1838 = vmatprep.mubr.f32.mxu0 0.0
        %1839 = vmatmul.mubr.f32.gmra.mrb[0].mxu0 %v1589
        %v1840 = vpop.f32.mrb[0].mxu0
        %v1841 = vadd.f32 0.0, %v1840
        %v1842 = vpop.f32.mrb[0].mxu0
        %v1843 = vadd.f32 0.0, %v1842
        %1844 = vmatprep.mubr.f32.mxu0 0.0
        %1845 = vmatmul.mubr.f32.gmra.mrb[0].mxu0 %v1592
        %v1846 = vpop.f32.mrb[0].mxu0
        %v1847 = vadd.f32 0.0, %v1846
        %v1848 = vpop.f32.mrb[0].mxu0
        %v1849 = vadd.f32 0.0, %v1848
        %1850 = vdwg.mxu0
        %v1851 = vld [vmem:[#allocation6] sm:$0xff]
        %v1852 = vld [vmem:[#allocation6 + $0x8] sm:$0xff]
        %v1853 = vld [vmem:[#allocation6 + $0x10] sm:$0xff]
        %v1854 = vld [vmem:[#allocation6 + $0x18] sm:$0xff]
        %v1855 = vld [vmem:[#allocation6 + $0x20] sm:$0xff]
        %v1856 = vld [vmem:[#allocation6 + $0x28] sm:$0xff]
        %v1857 = vld [vmem:[#allocation6 + $0x30] sm:$0xff]
        %v1858 = vld [vmem:[#allocation6 + $0x38] sm:$0xff]
        %v1859 = vld [vmem:[#allocation6 + $0x40] sm:$0xff]
        %v1860 = vld [vmem:[#allocation6 + $0x48] sm:$0xff]
        %v1861 = vld [vmem:[#allocation6 + $0x50] sm:$0xff]
        %v1862 = vld [vmem:[#allocation6 + $0x58] sm:$0xff]
        %v1863 = vld [vmem:[#allocation6 + $0x60] sm:$0xff]
        %v1864 = vld [vmem:[#allocation6 + $0x68] sm:$0xff]
        %v1865 = vld [vmem:[#allocation6 + $0x70] sm:$0xff]
        %v1866 = vld [vmem:[#allocation6 + $0x78] sm:$0xff]
        %v1867 = vld [vmem:[#allocation6 + $0x80] sm:$0xff]
        %v1868 = vld [vmem:[#allocation6 + $0x88] sm:$0xff]
        %v1869 = vld [vmem:[#allocation6 + $0x90] sm:$0xff]
        %v1870 = vld [vmem:[#allocation6 + $0x98] sm:$0xff]
        %v1871 = vld [vmem:[#allocation6 + $0xa0] sm:$0xff]
        %v1872 = vld [vmem:[#allocation6 + $0xa8] sm:$0xff]
        %v1873 = vld [vmem:[#allocation6 + $0xb0] sm:$0xff]
        %v1874 = vld [vmem:[#allocation6 + $0xb8] sm:$0xff]
        %v1875 = vld [vmem:[#allocation6 + $0xc0] sm:$0xff]
        %v1876 = vld [vmem:[#allocation6 + $0xc8] sm:$0xff]
        %v1877 = vld [vmem:[#allocation6 + $0xd0] sm:$0xff]
        %v1878 = vld [vmem:[#allocation6 + $0xd8] sm:$0xff]
        %v1879 = vld [vmem:[#allocation6 + $0xe0] sm:$0xff]
        %v1880 = vld [vmem:[#allocation6 + $0xe8] sm:$0xff]
        %v1881 = vld [vmem:[#allocation6 + $0xf0] sm:$0xff]
        %v1882 = vld [vmem:[#allocation6 + $0xf8] sm:$0xff]
        %v1883 = vld [vmem:[#allocation6 + $0x100] sm:$0xff]
        %v1884 = vld [vmem:[#allocation6 + $0x108] sm:$0xff]
        %v1885 = vld [vmem:[#allocation6 + $0x110] sm:$0xff]
        %v1886 = vld [vmem:[#allocation6 + $0x118] sm:$0xff]
        %v1887 = vld [vmem:[#allocation6 + $0x120] sm:$0xff]
        %v1888 = vld [vmem:[#allocation6 + $0x128] sm:$0xff]
        %v1889 = vld [vmem:[#allocation6 + $0x130] sm:$0xff]
        %v1890 = vld [vmem:[#allocation6 + $0x138] sm:$0xff]
        %v1891 = vld [vmem:[#allocation6 + $0x140] sm:$0xff]
        %v1892 = vld [vmem:[#allocation6 + $0x148] sm:$0xff]
        %v1893 = vld [vmem:[#allocation6 + $0x150] sm:$0xff]
        %v1894 = vld [vmem:[#allocation6 + $0x158] sm:$0xff]
        %v1895 = vld [vmem:[#allocation6 + $0x160] sm:$0xff]
        %v1896 = vld [vmem:[#allocation6 + $0x168] sm:$0xff]
        %v1897 = vld [vmem:[#allocation6 + $0x170] sm:$0xff]
        %v1898 = vld [vmem:[#allocation6 + $0x178] sm:$0xff]
        %v1899 = vld [vmem:[#allocation6 + $0x180] sm:$0xff]
        %v1900 = vld [vmem:[#allocation6 + $0x188] sm:$0xff]
        %v1901 = vld [vmem:[#allocation6 + $0x190] sm:$0xff]
        %v1902 = vld [vmem:[#allocation6 + $0x198] sm:$0xff]
        %v1903 = vld [vmem:[#allocation6 + $0x1a0] sm:$0xff]
        %v1904 = vld [vmem:[#allocation6 + $0x1a8] sm:$0xff]
        %v1905 = vld [vmem:[#allocation6 + $0x1b0] sm:$0xff]
        %v1906 = vld [vmem:[#allocation6 + $0x1b8] sm:$0xff]
        %v1907 = vld [vmem:[#allocation6 + $0x1c0] sm:$0xff]
        %v1908 = vld [vmem:[#allocation6 + $0x1c8] sm:$0xff]
        %v1909 = vld [vmem:[#allocation6 + $0x1d0] sm:$0xff]
        %v1910 = vld [vmem:[#allocation6 + $0x1d8] sm:$0xff]
        %v1911 = vld [vmem:[#allocation6 + $0x1e0] sm:$0xff]
        %v1912 = vld [vmem:[#allocation6 + $0x1e8] sm:$0xff]
        %v1913 = vld [vmem:[#allocation6 + $0x1f0] sm:$0xff]
        %v1914 = vld [vmem:[#allocation6 + $0x1f8] sm:$0xff]
        %v1915 = vmul.f32 %v1661, %v1851
        %v1916 = vmul.f32 %v1663, %v1852
        %v1917 = vmul.f32 %v1667, %v1853
        %v1918 = vmul.f32 %v1669, %v1854
        %v1919 = vmul.f32 %v1673, %v1855
        %v1920 = vmul.f32 %v1675, %v1856
        %v1921 = vmul.f32 %v1679, %v1857
        %v1922 = vmul.f32 %v1681, %v1858
        %v1923 = vmul.f32 %v1685, %v1859
        %v1924 = vmul.f32 %v1687, %v1860
        %v1925 = vmul.f32 %v1691, %v1861
        %v1926 = vmul.f32 %v1693, %v1862
        %v1927 = vmul.f32 %v1697, %v1863
        %v1928 = vmul.f32 %v1699, %v1864
        %v1929 = vmul.f32 %v1703, %v1865
        %v1930 = vmul.f32 %v1705, %v1866
        %v1931 = vmul.f32 %v1709, %v1867
        %v1932 = vmul.f32 %v1711, %v1868
        %v1933 = vmul.f32 %v1715, %v1869
        %v1934 = vmul.f32 %v1717, %v1870
        %v1935 = vmul.f32 %v1721, %v1871
        %v1936 = vmul.f32 %v1723, %v1872
        %v1937 = vmul.f32 %v1727, %v1873
        %v1938 = vmul.f32 %v1729, %v1874
        %v1939 = vmul.f32 %v1733, %v1875
        %v1940 = vmul.f32 %v1735, %v1876
        %v1941 = vmul.f32 %v1739, %v1877
        %v1942 = vmul.f32 %v1741, %v1878
        %v1943 = vmul.f32 %v1745, %v1879
        %v1944 = vmul.f32 %v1747, %v1880
        %v1945 = vmul.f32 %v1751, %v1881
        %v1946 = vmul.f32 %v1753, %v1882
        %v1947 = vmul.f32 %v1757, %v1883
        %v1948 = vmul.f32 %v1759, %v1884
        %v1949 = vmul.f32 %v1763, %v1885
        %v1950 = vmul.f32 %v1765, %v1886
        %v1951 = vmul.f32 %v1769, %v1887
        %v1952 = vmul.f32 %v1771, %v1888
        %v1953 = vmul.f32 %v1775, %v1889
        %v1954 = vmul.f32 %v1777, %v1890
        %v1955 = vmul.f32 %v1781, %v1891
        %v1956 = vmul.f32 %v1783, %v1892
        %v1957 = vmul.f32 %v1787, %v1893
        %v1958 = vmul.f32 %v1789, %v1894
        %v1959 = vmul.f32 %v1793, %v1895
        %v1960 = vmul.f32 %v1795, %v1896
        %v1961 = vmul.f32 %v1799, %v1897
        %v1962 = vmul.f32 %v1801, %v1898
        %v1963 = vmul.f32 %v1805, %v1899
        %v1964 = vmul.f32 %v1807, %v1900
        %v1965 = vmul.f32 %v1811, %v1901
        %v1966 = vmul.f32 %v1813, %v1902
        %v1967 = vmul.f32 %v1817, %v1903
        %v1968 = vmul.f32 %v1819, %v1904
        %v1969 = vmul.f32 %v1823, %v1905
        %v1970 = vmul.f32 %v1825, %v1906
        %v1971 = vmul.f32 %v1829, %v1907
        %v1972 = vmul.f32 %v1831, %v1908
        %v1973 = vmul.f32 %v1835, %v1909
        %v1974 = vmul.f32 %v1837, %v1910
        %v1975 = vmul.f32 %v1841, %v1911
        %v1976 = vmul.f32 %v1843, %v1912
        %v1977 = vmul.f32 %v1847, %v1913
        %v1978 = vmul.f32 %v1849, %v1914
        %1979 = vmatprep.subr.mxu0 %v1916
        %1980 = vmatpush1.msra.mxu0 %v1915
        %1981 = vmatprep.subr.mxu0 %v1918
        %1982 = vmatpush1.msra.mxu0 %v1917
        %1983 = vmatprep.subr.mxu0 %v1920
        %1984 = vmatpush1.msra.mxu0 %v1919
        %1985 = vmatprep.subr.mxu0 %v1922
        %1986 = vmatpush1.msra.mxu0 %v1921
        %1987 = vmatprep.subr.mxu0 %v1924
        %1988 = vmatpush1.msra.mxu0 %v1923
        %1989 = vmatprep.subr.mxu0 %v1926
        %1990 = vmatpush1.msra.mxu0 %v1925
        %1991 = vmatprep.subr.mxu0 %v1928
        %1992 = vmatpush1.msra.mxu0 %v1927
        %1993 = vmatprep.subr.mxu0 %v1930
        %1994 = vmatpush1.msra.mxu0 %v1929
        %1995 = vmatprep.subr.mxu0 %v1932
        %1996 = vmatpush1.msra.mxu0 %v1931
        %1997 = vmatprep.subr.mxu0 %v1934
        %1998 = vmatpush1.msra.mxu0 %v1933
        %1999 = vmatprep.subr.mxu0 %v1936
        %2000 = vmatpush1.msra.mxu0 %v1935
        %2001 = vmatprep.subr.mxu0 %v1938
        %2002 = vmatpush1.msra.mxu0 %v1937
        %2003 = vmatprep.subr.mxu0 %v1940
        %2004 = vmatpush1.msra.mxu0 %v1939
        %2005 = vmatprep.subr.mxu0 %v1942
        %2006 = vmatpush1.msra.mxu0 %v1941
        %2007 = vmatprep.subr.mxu0 %v1944
        %2008 = vmatpush1.msra.mxu0 %v1943
        %2009 = vmatprep.subr.mxu0 %v1946
        %2010 = vmatpush1.msra.mxu0 %v1945
        %2011 = vmatprep.subr.mxu0 %v1948
        %2012 = vmatpush1.msra.mxu0 %v1947
        %2013 = vmatprep.subr.mxu0 %v1950
        %2014 = vmatpush1.msra.mxu0 %v1949
        %2015 = vmatprep.subr.mxu0 %v1952
        %2016 = vmatpush1.msra.mxu0 %v1951
        %2017 = vmatprep.subr.mxu0 %v1954
        %2018 = vmatpush1.msra.mxu0 %v1953
        %2019 = vmatprep.subr.mxu0 %v1956
        %2020 = vmatpush1.msra.mxu0 %v1955
        %2021 = vmatprep.subr.mxu0 %v1958
        %2022 = vmatpush1.msra.mxu0 %v1957
        %2023 = vmatprep.subr.mxu0 %v1960
        %2024 = vmatpush1.msra.mxu0 %v1959
        %2025 = vmatprep.subr.mxu0 %v1962
        %2026 = vmatpush1.msra.mxu0 %v1961
        %2027 = vmatprep.subr.mxu0 %v1964
        %2028 = vmatpush1.msra.mxu0 %v1963
        %2029 = vmatprep.subr.mxu0 %v1966
        %2030 = vmatpush1.msra.mxu0 %v1965
        %2031 = vmatprep.subr.mxu0 %v1968
        %2032 = vmatpush1.msra.mxu0 %v1967
        %2033 = vmatprep.subr.mxu0 %v1970
        %2034 = vmatpush1.msra.mxu0 %v1969
        %2035 = vmatprep.subr.mxu0 %v1972
        %2036 = vmatpush1.msra.mxu0 %v1971
        %2037 = vmatprep.subr.mxu0 %v1974
        %2038 = vmatpush1.msra.mxu0 %v1973
        %2039 = vmatprep.subr.mxu0 %v1976
        %2040 = vmatpush1.msra.mxu0 %v1975
        %2041 = vmatprep.subr.mxu0 %v1978
        %2042 = vmatpush1.msra.mxu0 %v1977
        %2043 = vmatprep.mubr.f32.mxu0 %v953
        %2044 = vmatmul.mubr.f32.gmra.mrb[0].mxu0 %v952
        %v2045 = vpop.f32.mrb[0].mxu0
        %v2046 = vadd.f32 0.0, %v2045
        %v2047 = vpop.f32.mrb[0].mxu0
        %v2048 = vadd.f32 0.0, %v2047
        %2049 = vmatprep.mubr.f32.mxu0 %v955
        %2050 = vmatmul.mubr.f32.gmra.mrb[0].mxu0 %v954
        %v2051 = vpop.f32.mrb[0].mxu0
        %v2052 = vadd.f32 0.0, %v2051
        %v2053 = vpop.f32.mrb[0].mxu0
        %v2054 = vadd.f32 0.0, %v2053
        %2055 = vmatprep.mubr.f32.mxu0 %v957
        %2056 = vmatmul.mubr.f32.gmra.mrb[0].mxu0 %v956
        %v2057 = vpop.f32.mrb[0].mxu0
        %v2058 = vadd.f32 0.0, %v2057
        %v2059 = vpop.f32.mrb[0].mxu0
        %v2060 = vadd.f32 0.0, %v2059
        %2061 = vmatprep.mubr.f32.mxu0 %v959
        %2062 = vmatmul.mubr.f32.gmra.mrb[0].mxu0 %v958
        %v2063 = vpop.f32.mrb[0].mxu0
        %v2064 = vadd.f32 0.0, %v2063
        %v2065 = vpop.f32.mrb[0].mxu0
        %v2066 = vadd.f32 0.0, %v2065
        %2067 = vdwg.mxu0
        %vm2068 = vcmp.ge.f32.partialorder %v2046, 0.0
        %vm2069 = vcmp.ge.f32.partialorder %v2048, 0.0
        %vm2070 = vcmp.ge.f32.partialorder %v2052, 0.0
        %vm2071 = vcmp.ge.f32.partialorder %v2054, 0.0
        %vm2072 = vcmp.ge.f32.partialorder %v2058, 0.0
        %vm2073 = vcmp.ge.f32.partialorder %v2060, 0.0
        %vm2074 = vcmp.ge.f32.partialorder %v2064, 0.0
        %vm2075 = vcmp.ge.f32.partialorder %v2066, 0.0
        %v2076 = vmul.f32 %v2046, 0.2
        %v2077 = vmul.f32 %v2048, 0.2
        %v2078 = vmul.f32 %v2052, 0.2
        %v2079 = vmul.f32 %v2054, 0.2
        %v2080 = vmul.f32 %v2058, 0.2
        %v2081 = vmul.f32 %v2060, 0.2
        %v2082 = vmul.f32 %v2064, 0.2
        %v2083 = vmul.f32 %v2066, 0.2
        %v2084 = vsel %vm2068, %v2046, %v2076
        %v2085 = vsel %vm2069, %v2048, %v2077
        %v2086 = vsel %vm2070, %v2052, %v2078
        %v2087 = vsel %vm2071, %v2054, %v2079
        %v2088 = vsel %vm2072, %v2058, %v2080
        %v2089 = vsel %vm2073, %v2060, %v2081
        %v2090 = vsel %vm2074, %v2064, %v2082
        %v2091 = vsel %vm2075, %v2066, %v2083
        %v2092 = vld [vmem:[%s13] sm:$0xff]
        %v2093 = vld [vmem:[%s13 + $0x8] sm:$0xff]
        %v2094 = vld [vmem:[%s13 + $0x10] sm:$0xff]
        %v2095 = vld [vmem:[%s13 + $0x18] sm:$0xff]
        %v2096 = vld [vmem:[%s14] sm:$0xff]
        %v2097 = vld [vmem:[%s14 + $0x8] sm:$0xff]
        %v2098 = vld [vmem:[%s14 + $0x10] sm:$0xff]
        %v2099 = vld [vmem:[%s14 + $0x18] sm:$0xff]
        %2101 = vset.pattern.permute.xlu0 0
        %2102 = vperm.xlu0 %2101, %v2096
        %v2103 = vpop.permute.xlu0 %2102
        %2106 = vset.pattern.permute.xlu0 0
        %2107 = vperm.xlu0 %2106, %v2097
        %v2108 = vpop.permute.xlu0 %2107
        %2111 = vset.pattern.permute.xlu0 0
        %2112 = vperm.xlu0 %2111, %v2098
        %v2113 = vpop.permute.xlu0 %2112
        %2116 = vset.pattern.permute.xlu0 0
        %2117 = vperm.xlu0 %2116, %v2099
        %v2118 = vpop.permute.xlu0 %2117
        %v2121 = vsel %vm826, %v2092, 0
        %v2124 = vsel %vm826, %v2093, 0
        %v2127 = vsel %vm826, %v2094, 0
        %v2130 = vsel %vm826, %v2095, 0
        %2132 = vmatprep.subr.mxu0 %v2085
        %2133 = vmatpush1.msra.mxu0 %v2084
        %2134 = vmatprep.subr.mxu0 %v2087
        %2135 = vmatpush1.msra.mxu0 %v2086
        %2136 = vmatprep.subr.mxu0 %v2089
        %2137 = vmatpush1.msra.mxu0 %v2088
        %2138 = vmatprep.subr.mxu0 %v2091
        %2139 = vmatpush1.msra.mxu0 %v2090
        %2140 = vmatprep.subr.mxu0 0.0
        %2141 = vmatpush1.msra.mxu0 0.0
        %2142 = vmatprep.subr.mxu0 0.0
        %2143 = vmatpush1.msra.mxu0 0.0
        %2144 = vmatprep.subr.mxu0 0.0
        %2145 = vmatpush1.msra.mxu0 0.0
        %2146 = vmatprep.subr.mxu0 0.0
        %2147 = vmatpush1.msra.mxu0 0.0
        %2148 = vmatprep.subr.mxu0 0.0
        %2149 = vmatpush1.msra.mxu0 0.0
        %2150 = vmatprep.subr.mxu0 0.0
        %2151 = vmatpush1.msra.mxu0 0.0
        %2152 = vmatprep.subr.mxu0 0.0
        %2153 = vmatpush1.msra.mxu0 0.0
        %2154 = vmatprep.subr.mxu0 0.0
        %2155 = vmatpush1.msra.mxu0 0.0
        %2156 = vmatprep.subr.mxu0 0.0
        %2157 = vmatpush1.msra.mxu0 0.0
        %2158 = vmatprep.subr.mxu0 0.0
        %2159 = vmatpush1.msra.mxu0 0.0
        %2160 = vmatprep.subr.mxu0 0.0
        %2161 = vmatpush1.msra.mxu0 0.0
        %2162 = vmatprep.subr.mxu0 0.0
        %2163 = vmatpush1.msra.mxu0 0.0
        %2164 = vmatprep.subr.mxu0 0.0
        %2165 = vmatpush1.msra.mxu0 0.0
        %2166 = vmatprep.subr.mxu0 0.0
        %2167 = vmatpush1.msra.mxu0 0.0
        %2168 = vmatprep.subr.mxu0 0.0
        %2169 = vmatpush1.msra.mxu0 0.0
        %2170 = vmatprep.subr.mxu0 0.0
        %2171 = vmatpush1.msra.mxu0 0.0
        %2172 = vmatprep.subr.mxu0 0.0
        %2173 = vmatpush1.msra.mxu0 0.0
        %2174 = vmatprep.subr.mxu0 0.0
        %2175 = vmatpush1.msra.mxu0 0.0
        %2176 = vmatprep.subr.mxu0 0.0
        %2177 = vmatpush1.msra.mxu0 0.0
        %2178 = vmatprep.subr.mxu0 0.0
        %2179 = vmatpush1.msra.mxu0 0.0
        %2180 = vmatprep.subr.mxu0 0.0
        %2181 = vmatpush1.msra.mxu0 0.0
        %2182 = vmatprep.subr.mxu0 0.0
        %2183 = vmatpush1.msra.mxu0 0.0
        %2184 = vmatprep.subr.mxu0 0.0
        %2185 = vmatpush1.msra.mxu0 0.0
        %2186 = vmatprep.subr.mxu0 0.0
        %2187 = vmatpush1.msra.mxu0 0.0
        %2188 = vmatprep.subr.mxu0 0.0
        %2189 = vmatpush1.msra.mxu0 0.0
        %2190 = vmatprep.subr.mxu0 0.0
        %2191 = vmatpush1.msra.mxu0 0.0
        %2192 = vmatprep.subr.mxu0 0.0
        %2193 = vmatpush1.msra.mxu0 0.0
        %2194 = vmatprep.subr.mxu0 0.0
        %2195 = vmatpush1.msra.mxu0 0.0
        %2196 = vmatprep.mubr.f32.mxu0 0.0
        %2197 = vmatmul.mubr.f32.gmra.mrb[0].mxu0 %v2121
        %v2198 = vpop.f32.mrb[0].mxu0
        %v2199 = vadd.f32 %v2103, %v2198
        %v2200 = vpop.f32.mrb[0].mxu0
        %v2201 = vadd.f32 %v2103, %v2200
        %2202 = vmatprep.mubr.f32.mxu0 0.0
        %2203 = vmatmul.mubr.f32.gmra.mrb[0].mxu0 %v2124
        %v2204 = vpop.f32.mrb[0].mxu0
        %v2205 = vadd.f32 %v2108, %v2204
        %v2206 = vpop.f32.mrb[0].mxu0
        %v2207 = vadd.f32 %v2108, %v2206
        %2208 = vmatprep.mubr.f32.mxu0 0.0
        %2209 = vmatmul.mubr.f32.gmra.mrb[0].mxu0 %v2127
        %v2210 = vpop.f32.mrb[0].mxu0
        %v2211 = vadd.f32 %v2113, %v2210
        %v2212 = vpop.f32.mrb[0].mxu0
        %v2213 = vadd.f32 %v2113, %v2212
        %2214 = vmatprep.mubr.f32.mxu0 0.0
        %2215 = vmatmul.mubr.f32.gmra.mrb[0].mxu0 %v2130
        %v2216 = vpop.f32.mrb[0].mxu0
        %v2217 = vadd.f32 %v2118, %v2216
        %v2218 = vpop.f32.mrb[0].mxu0
        %v2219 = vadd.f32 %v2118, %v2218
        %2220 = vdwg.mxu0
        %vm2221 = vcmp.ge.f32.partialorder %v2199, 0.0
        %vm2222 = vcmp.ge.f32.partialorder %v2201, 0.0
        %vm2223 = vcmp.ge.f32.partialorder %v2205, 0.0
        %vm2224 = vcmp.ge.f32.partialorder %v2207, 0.0
        %vm2225 = vcmp.ge.f32.partialorder %v2211, 0.0
        %vm2226 = vcmp.ge.f32.partialorder %v2213, 0.0
        %vm2227 = vcmp.ge.f32.partialorder %v2217, 0.0
        %vm2228 = vcmp.ge.f32.partialorder %v2219, 0.0
        %v2229 = vmul.f32 %v2199, 0.2
        %v2230 = vmul.f32 %v2201, 0.2
        %v2231 = vmul.f32 %v2205, 0.2
        %v2232 = vmul.f32 %v2207, 0.2
        %v2233 = vmul.f32 %v2211, 0.2
        %v2234 = vmul.f32 %v2213, 0.2
        %v2235 = vmul.f32 %v2217, 0.2
        %v2236 = vmul.f32 %v2219, 0.2
        %v2237 = vsel %vm2221, %v2199, %v2229
        %v2238 = vsel %vm2222, %v2201, %v2230
        %v2239 = vsel %vm2223, %v2205, %v2231
        %v2240 = vsel %vm2224, %v2207, %v2232
        %v2241 = vsel %vm2225, %v2211, %v2233
        %v2242 = vsel %vm2226, %v2213, %v2234
        %v2243 = vsel %vm2227, %v2217, %v2235
        %v2244 = vsel %vm2228, %v2219, %v2236
        %2245 = vst [vmem:[%s610] sm:$0xff] %v2237
        %2246 = vst [vmem:[%s610 + $0x8] sm:$0xff] %v2238
        %2247 = vst [vmem:[%s610 + $0x10] sm:$0xff] %v2239
        %2248 = vst [vmem:[%s610 + $0x18] sm:$0xff] %v2240
        %2249 = vst [vmem:[%s610 + $0x20] sm:$0xff] %v2241
        %2250 = vst [vmem:[%s610 + $0x28] sm:$0xff] %v2242
        %2251 = vst [vmem:[%s610 + $0x30] sm:$0xff] %v2243
        %2252 = vst [vmem:[%s610 + $0x38] sm:$0xff] %v2244
        %s2253 = sand.u32 %s361, 1
        %s2254 = scalar_lea.sflag [#allocation5], %s2253
        %s2255 = sand.u32 %s361, 1
        %s2256 = smul.addr %s2255, 64
        %s2257 = scalar_lea.vmem [#allocation14], %s2256
        // Predicated region
        $region128: #{tpu_custom_call.1} parent=98 // pred_check
          %p2258 = pneg %p371
        $region129: #{tpu_custom_call.1} parent=98 // pred_check_branch
          %2260 = sbr.rel (%p2258) target = $region131
        $region130: #{tpu_custom_call.1} parent=98 // pred_region
          %s2261 = smul.u32 2, %s33
          %s2263 = ssub.s32 1024, 1024
          %2264 = vsyncadd %s2254, %s2263
          %s2265 = smul.addr %s2261, 128
          %s2266 = scalar_lea.hbm %s15, %s2265
          %s2267 = sshll.u32 %s2257, 4
          %s2268 = int_to_ptr.vmem [resolvable:$true] %s2267
          %2273 = dma.vmem_to_hbm [thread:$0]  %s2268, 1024, %s2266, %s2254, 256, 512, 16
        $region131: #{tpu_custom_call.1} parent=98 // pred_fallthru
          _
      $region99: #{tpu_custom_call.1} parent=5 // pred_fallthru
        _
      %p2274 = scmp.le.s32.totalorder 2, %s28
      // Predicated region
      $region132: #{tpu_custom_call.1} parent=5 // pred_check
        %p2275 = pneg %p2274
      $region133: #{tpu_custom_call.1} parent=5 // pred_check_branch
        %2277 = sbr.rel (%p2275) target = $region135
      $region134: #{tpu_custom_call.1} parent=5 // pred_region
        %s2278 = ssub.s32 %s28, 2
        // Predicated region
        $region136: #{tpu_custom_call.1} parent=134 // pred_check
          %p2279 = pneg %p377
        $region137: #{tpu_custom_call.1} parent=134 // pred_check_branch
          %2281 = sbr.rel (%p2279) target = $region139
        $region138: #{tpu_custom_call.1} parent=134 // pred_region
          %s2282 = sand.u32 %s362, 1
          %s2283 = scalar_lea.sflag [#allocation5], %s2282
          %s2284 = sand.u32 %s362, 1
          %s2285 = smul.addr %s2284, 64
          %s2286 = scalar_lea.vmem [#allocation14], %s2285
          %2287 = dma.done %s2283, 1024
        $region139: #{tpu_custom_call.1} parent=134 // pred_fallthru
          _
      $region135: #{tpu_custom_call.1} parent=5 // pred_fallthru
        _
    $region6: #{tpu_custom_call.1} parent=1 // loop_footer
      %s32 = sadd.s32 1, %s28
    $region7: #{tpu_custom_call.1} parent=1 // loop_footer_branch
      %27 = sbr.rel target = $region3
    $region8: #{tpu_custom_call.1} parent=1 // loop_exit
      _
    %2288 = vsyncpa [#allocation4], 1
    %s2289 = scalar_lea.sflag [#allocation4], 1
    %2290 = vsyncpa %s2289, 1
    %2291 = vsyncpa [#allocation7], 1
    %2292 = vsyncpa [#allocation10], 1
    %2293 = vsyncpa [#allocation13], 1
    %2294 = vsyncpa [#allocation5], 1
    %s2295 = scalar_lea.sflag [#allocation5], 1
    %2296 = vsyncpa %s2295, 1

// kernel: tpu_custom_call.1
$region0: #{tpu_custom_call.1}
  #allocation0 [shape = 'u32[]', space=smem, size = 0x4, offset = 0x4, fixed_abs, tag = 'smem constant byte address 0x4 - core index']
  #allocation1 [shape = 'u32[144,128]{1,0:T(1,128)}', space=vmem, size = 0x12000, scoped, tag = 'internal scratch']
  %s0 = inlined_call_operand.vmem [shape: f32[32,512], index: 0, kind: input, shape index: {}]
  %s1 = inlined_call_operand.vmem [shape: f32[256,256], index: 1, kind: input, shape index: {}]
  %s2 = inlined_call_operand.vmem [shape: f32[256,32], index: 2, kind: input, shape index: {}]
  %s3 = inlined_call_operand.hbm [shape: f32[32,256], index: 3, kind: input, shape index: {}]
  %s4 = inlined_call_operand.vmem [shape: f32[256,8], index: 4, kind: input, shape index: {}]
  %s5 = inlined_call_operand.hbm [shape: f32[256,256], index: 5, kind: input, shape index: {}]
  %s6 = inlined_call_operand.hbm [shape: f32[32,32], index: 6, kind: input, shape index: {}]
  %s7 = inlined_call_operand.vmem [shape: f32[32,1], index: 7, kind: input, shape index: {}]
  %s8 = inlined_call_operand.hbm [shape: f32[32,32], index: 8, kind: input, shape index: {}]
  %s9 = inlined_call_operand.vmem [shape: f32[32,1], index: 9, kind: input, shape index: {}]
  %s10 = inlined_call_operand.hbm [shape: f32[8,32], index: 10, kind: input, shape index: {}]
  %s11 = inlined_call_operand.hbm [shape: f32[8,32], index: 11, kind: input, shape index: {}]
  %s12 = inlined_call_operand.vmem [shape: f32[8,1], index: 12, kind: input, shape index: {}]
  %s13 = inlined_call_operand.vmem [shape: f32[32,32], index: 13, kind: input, shape index: {}]
  %s14 = inlined_call_operand.vmem [shape: f32[32,1], index: 14, kind: input, shape index: {}]
  %s15 = inlined_call_operand.hbm [shape: f32[32,512], index: 15, kind: output, shape index: {}]
  %s16 = sld [smem:[#allocation0]]
  $region140: #{tpu_custom_call.1} parent=0
    _
  %s18 = ssub.s32 1, %s16
  %s19 = scalar_select 0, %s18, %s16
  $region1: #{tpu_custom_call.1} parent=0
    #allocation2 [shape = 'u8[65536]{0}', space=vmem, size = 0x10000, scoped, tag = 'input window, operand 0']
    #allocation3 [shape = 'u8[32768]{0}', space=vmem, size = 0x8000, scoped, tag = 'input window, operand 3, single buffered']
    #allocation4 [shape = 's32[2]{0}', space=sflag, size = 0x8, scoped, tag = 'scoped memory for tpu_custom_call.1']
    #allocation5 [shape = 's32[2]{0}', space=sflag, size = 0x8, scoped, tag = 'scoped memory for tpu_custom_call.1']
    #allocation6 [shape = 'u8[262144]{0}', space=vmem, size = 0x40000, scoped, tag = 'input window, operand 5, single buffered']
    #allocation7 [shape = 's32[1]{0}', space=sflag, size = 0x4, scoped, tag = 'scoped memory for tpu_custom_call.1']
    #allocation8 [shape = 'u8[16384]{0}', space=vmem, size = 0x4000, scoped, tag = 'input window, operand 6, single buffered']
    #allocation9 [shape = 'u8[16384]{0}', space=vmem, size = 0x4000, scoped, tag = 'input window, operand 8, single buffered']
    #allocation10 [shape = 's32[1]{0}', space=sflag, size = 0x4, scoped, tag = 'scoped memory for tpu_custom_call.1']
    #allocation11 [shape = 'u8[4096]{0}', space=vmem, size = 0x1000, scoped, tag = 'input window, operand 10, single buffered']
    #allocation12 [shape = 'u8[4096]{0}', space=vmem, size = 0x1000, scoped, tag = 'input window, operand 11, single buffered']
    #allocation13 [shape = 's32[1]{0}', space=sflag, size = 0x4, scoped, tag = 'scoped memory for tpu_custom_call.1']
    #allocation14 [shape = 'u8[65536]{0}', space=vmem, size = 0x10000, scoped, tag = 'output window, operand 0']
    %20 = vsyncpa [#allocation4], 0
    %21 = vsyncpa [#allocation7], 0
    %22 = vsyncpa [#allocation10], 0
    %23 = vsyncpa [#allocation13], 0
    %24 = vsyncpa [#allocation5], 0
    %s25 = scalar_lea.sflag [#allocation5], 1
    %26 = vsyncpa %s25, 0
    loop: start=0, step=1, limit=4
    $region2: #{tpu_custom_call.1} parent=1 // loop_pre_header
      _
    $region3: #{tpu_custom_call.1} parent=1 // loop_header
      %s28 = sphi 0, %s32
      %p29 = scmp.ge.s32.totalorder %s28, 4
      %s38 = sphi 0, %s40
      %s41 = sphi 0, %s38
      %s42 = sphi 0, %s41
      %s58 = sphi 0, %s42
      %s62 = sphi 0, %s62
      %s64 = sphi 0, %s62
      %s65 = sphi 0, %s64
      %s79 = sphi 0, %s65
      %s83 = sphi 0, %s83
      %s85 = sphi 0, %s83
      %s86 = sphi 0, %s85
      %s100 = sphi 0, %s86
      %s104 = sphi 0, %s104
      %s106 = sphi 0, %s104
      %s107 = sphi 0, %s106
      %s121 = sphi 0, %s107
      %s125 = sphi 0, %s125
      %s127 = sphi 0, %s125
      %s128 = sphi 0, %s127
      %s142 = sphi 0, %s128
      %s146 = sphi 0, %s146
      %s148 = sphi 0, %s146
      %s149 = sphi 0, %s148
      %s163 = sphi 0, %s149
      %s167 = sphi 0, %s167
      %s169 = sphi 0, %s167
      %s170 = sphi 0, %s169
      %s184 = sphi 0, %s170
      %s188 = sphi 0, %s188
      %s190 = sphi 0, %s188
      %s191 = sphi 0, %s190
      %s205 = sphi 0, %s191
      %s209 = sphi 0, %s209
      %s211 = sphi 0, %s209
      %s212 = sphi 0, %s211
      %s226 = sphi 0, %s212
      %s230 = sphi 0, %s230
      %s232 = sphi 0, %s230
      %s233 = sphi 0, %s232
      %s247 = sphi 0, %s233
      %s251 = sphi 0, %s251
      %s253 = sphi 0, %s251
      %s254 = sphi 0, %s253
      %s268 = sphi 0, %s254
      %s272 = sphi 0, %s272
      %s274 = sphi 0, %s272
      %s275 = sphi 0, %s274
      %s289 = sphi 0, %s275
      %s293 = sphi 0, %s293
      %s295 = sphi 0, %s293
      %s296 = sphi 0, %s295
      %s310 = sphi 0, %s296
      %s314 = sphi 0, %s314
      %s316 = sphi 0, %s314
      %s317 = sphi 0, %s316
      %s331 = sphi 0, %s317
      %s335 = sphi 0, %s335
      %s337 = sphi 0, %s335
      %s338 = sphi 0, %s337
      %s352 = sphi 0, %s338
      %s358 = sphi 0, %s360
      %s361 = sphi 0, %s358
      %s362 = sphi 0, %s361
      %s378 = sphi 0, %s362
    $region4: #{tpu_custom_call.1} parent=1 // loop_header_branch
      %31 = sbr.rel (%p29) target = $region8
    $region5: #{tpu_custom_call.1} parent=1 // loop_body
      %s33 = ssub.s32 %s28, 1
      %s34 = ssub.s32 %s28, 2
      %s35 = sadd.s32 %s28, 1
      %s36 = ssub.s32 %s28, %s35
      %p37 = scmp.eq.s32.totalorder %s36, 0
      %s39 = sadd.s32 %s38, 1
      %s40 = scalar_select %p37, %s38, %s39
      %p43 = pneg %p37
      %p44 = scmp.eq.s32.totalorder %s28, 1
      %p45 = por %p43, %p44
      %p46 = scmp.ne.s32.totalorder %s38, %s41
      %p47 = scmp.eq.s32.totalorder %s28, 0
      %p48 = por %p46, %p47
      %p49 = scmp.ne.s32.totalorder %s38, %s41
      %p50 = scmp.eq.s32.totalorder %s33, 1
      %p51 = por %p49, %p50
      %p52 = scmp.ne.s32.totalorder %s41, %s42
      %p53 = scmp.eq.s32.totalorder %s33, 0
      %p54 = por %p52, %p53
      %p55 = scmp.ne.s32.totalorder %s41, %s42
      %p56 = scmp.eq.s32.totalorder %s34, 1
      %p57 = por %p55, %p56
      %p59 = scmp.ne.s32.totalorder %s42, %s58
      %p60 = scmp.eq.s32.totalorder %s34, 0
      %p61 = por %p59, %p60
      %s63 = sadd.s32 %s62, 1
      %p66 = scmp.eq.s32.totalorder %s28, 1
      %p67 = scmp.ne.s32.totalorder %s62, %s64
      %p68 = scmp.eq.s32.totalorder %s28, 0
      %p69 = por %p67, %p68
      %p70 = scmp.ne.s32.totalorder %s62, %s64
      %p71 = scmp.eq.s32.totalorder %s33, 1
      %p72 = por %p70, %p71
      %p73 = scmp.ne.s32.totalorder %s64, %s65
      %p74 = scmp.eq.s32.totalorder %s33, 0
      %p75 = por %p73, %p74
      %p76 = scmp.ne.s32.totalorder %s64, %s65
      %p77 = scmp.eq.s32.totalorder %s34, 1
      %p78 = por %p76, %p77
      %p80 = scmp.ne.s32.totalorder %s65, %s79
      %p81 = scmp.eq.s32.totalorder %s34, 0
      %p82 = por %p80, %p81
      %s84 = sadd.s32 %s83, 1
      %p87 = scmp.eq.s32.totalorder %s28, 1
      %p88 = scmp.ne.s32.totalorder %s83, %s85
      %p89 = scmp.eq.s32.totalorder %s28, 0
      %p90 = por %p88, %p89
      %p91 = scmp.ne.s32.totalorder %s83, %s85
      %p92 = scmp.eq.s32.totalorder %s33, 1
      %p93 = por %p91, %p92
      %p94 = scmp.ne.s32.totalorder %s85, %s86
      %p95 = scmp.eq.s32.totalorder %s33, 0
      %p96 = por %p94, %p95
      %p97 = scmp.ne.s32.totalorder %s85, %s86
      %p98 = scmp.eq.s32.totalorder %s34, 1
      %p99 = por %p97, %p98
      %p101 = scmp.ne.s32.totalorder %s86, %s100
      %p102 = scmp.eq.s32.totalorder %s34, 0
      %p103 = por %p101, %p102
      %s105 = sadd.s32 %s104, 1
      %p108 = scmp.eq.s32.totalorder %s28, 1
      %p109 = scmp.ne.s32.totalorder %s104, %s106
      %p110 = scmp.eq.s32.totalorder %s28, 0
      %p111 = por %p109, %p110
      %p112 = scmp.ne.s32.totalorder %s104, %s106
      %p113 = scmp.eq.s32.totalorder %s33, 1
      %p114 = por %p112, %p113
      %p115 = scmp.ne.s32.totalorder %s106, %s107
      %p116 = scmp.eq.s32.totalorder %s33, 0
      %p117 = por %p115, %p116
      %p118 = scmp.ne.s32.totalorder %s106, %s107
      %p119 = scmp.eq.s32.totalorder %s34, 1
      %p120 = por %p118, %p119
      %p122 = scmp.ne.s32.totalorder %s107, %s121
      %p123 = scmp.eq.s32.totalorder %s34, 0
      %p124 = por %p122, %p123
      %s126 = sadd.s32 %s125, 1
      %p129 = scmp.eq.s32.totalorder %s28, 1
      %p130 = scmp.ne.s32.totalorder %s125, %s127
      %p131 = scmp.eq.s32.totalorder %s28, 0
      %p132 = por %p130, %p131
      %p133 = scmp.ne.s32.totalorder %s125, %s127
      %p134 = scmp.eq.s32.totalorder %s33, 1
      %p135 = por %p133, %p134
      %p136 = scmp.ne.s32.totalorder %s127, %s128
      %p137 = scmp.eq.s32.totalorder %s33, 0
      %p138 = por %p136, %p137
      %p139 = scmp.ne.s32.totalorder %s127, %s128
      %p140 = scmp.eq.s32.totalorder %s34, 1
      %p141 = por %p139, %p140
      %p143 = scmp.ne.s32.totalorder %s128, %s142
      %p144 = scmp.eq.s32.totalorder %s34, 0
      %p145 = por %p143, %p144
      %s147 = sadd.s32 %s146, 1
      %p150 = scmp.eq.s32.totalorder %s28, 1
      %p151 = scmp.ne.s32.totalorder %s146, %s148
      %p152 = scmp.eq.s32.totalorder %s28, 0
      %p153 = por %p151, %p152
      %p154 = scmp.ne.s32.totalorder %s146, %s148
      %p155 = scmp.eq.s32.totalorder %s33, 1
      %p156 = por %p154, %p155
      %p157 = scmp.ne.s32.totalorder %s148, %s149
      %p158 = scmp.eq.s32.totalorder %s33, 0
      %p159 = por %p157, %p158
      %p160 = scmp.ne.s32.totalorder %s148, %s149
      %p161 = scmp.eq.s32.totalorder %s34, 1
      %p162 = por %p160, %p161
      %p164 = scmp.ne.s32.totalorder %s149, %s163
      %p165 = scmp.eq.s32.totalorder %s34, 0
      %p166 = por %p164, %p165
      %s168 = sadd.s32 %s167, 1
      %p171 = scmp.eq.s32.totalorder %s28, 1
      %p172 = scmp.ne.s32.totalorder %s167, %s169
      %p173 = scmp.eq.s32.totalorder %s28, 0
      %p174 = por %p172, %p173
      %p175 = scmp.ne.s32.totalorder %s167, %s169
      %p176 = scmp.eq.s32.totalorder %s33, 1
      %p177 = por %p175, %p176
      %p178 = scmp.ne.s32.totalorder %s169, %s170
      %p179 = scmp.eq.s32.totalorder %s33, 0
      %p180 = por %p178, %p179
      %p181 = scmp.ne.s32.totalorder %s169, %s170
      %p182 = scmp.eq.s32.totalorder %s34, 1
      %p183 = por %p181, %p182
      %p185 = scmp.ne.s32.totalorder %s170, %s184
      %p186 = scmp.eq.s32.totalorder %s34, 0
      %p187 = por %p185, %p186
      %s189 = sadd.s32 %s188, 1
      %p192 = scmp.eq.s32.totalorder %s28, 1
      %p193 = scmp.ne.s32.totalorder %s188, %s190
      %p194 = scmp.eq.s32.totalorder %s28, 0
      %p195 = por %p193, %p194
      %p196 = scmp.ne.s32.totalorder %s188, %s190
      %p197 = scmp.eq.s32.totalorder %s33, 1
      %p198 = por %p196, %p197
      %p199 = scmp.ne.s32.totalorder %s190, %s191
      %p200 = scmp.eq.s32.totalorder %s33, 0
      %p201 = por %p199, %p200
      %p202 = scmp.ne.s32.totalorder %s190, %s191
      %p203 = scmp.eq.s32.totalorder %s34, 1
      %p204 = por %p202, %p203
      %p206 = scmp.ne.s32.totalorder %s191, %s205
      %p207 = scmp.eq.s32.totalorder %s34, 0
      %p208 = por %p206, %p207
      %s210 = sadd.s32 %s209, 1
      %p213 = scmp.eq.s32.totalorder %s28, 1
      %p214 = scmp.ne.s32.totalorder %s209, %s211
      %p215 = scmp.eq.s32.totalorder %s28, 0
      %p216 = por %p214, %p215
      %p217 = scmp.ne.s32.totalorder %s209, %s211
      %p218 = scmp.eq.s32.totalorder %s33, 1
      %p219 = por %p217, %p218
      %p220 = scmp.ne.s32.totalorder %s211, %s212
      %p221 = scmp.eq.s32.totalorder %s33, 0
      %p222 = por %p220, %p221
      %p223 = scmp.ne.s32.totalorder %s211, %s212
      %p224 = scmp.eq.s32.totalorder %s34, 1
      %p225 = por %p223, %p224
      %p227 = scmp.ne.s32.totalorder %s212, %s226
      %p228 = scmp.eq.s32.totalorder %s34, 0
      %p229 = por %p227, %p228
      %s231 = sadd.s32 %s230, 1
      %p234 = scmp.eq.s32.totalorder %s28, 1
      %p235 = scmp.ne.s32.totalorder %s230, %s232
      %p236 = scmp.eq.s32.totalorder %s28, 0
      %p237 = por %p235, %p236
      %p238 = scmp.ne.s32.totalorder %s230, %s232
      %p239 = scmp.eq.s32.totalorder %s33, 1
      %p240 = por %p238, %p239
      %p241 = scmp.ne.s32.totalorder %s232, %s233
      %p242 = scmp.eq.s32.totalorder %s33, 0
      %p243 = por %p241, %p242
      %p244 = scmp.ne.s32.totalorder %s232, %s233
      %p245 = scmp.eq.s32.totalorder %s34, 1
      %p246 = por %p244, %p245
      %p248 = scmp.ne.s32.totalorder %s233, %s247
      %p249 = scmp.eq.s32.totalorder %s34, 0
      %p250 = por %p248, %p249
      %s252 = sadd.s32 %s251, 1
      %p255 = scmp.eq.s32.totalorder %s28, 1
      %p256 = scmp.ne.s32.totalorder %s251, %s253
      %p257 = scmp.eq.s32.totalorder %s28, 0
      %p258 = por %p256, %p257
      %p259 = scmp.ne.s32.totalorder %s251, %s253
      %p260 = scmp.eq.s32.totalorder %s33, 1
      %p261 = por %p259, %p260
      %p262 = scmp.ne.s32.totalorder %s253, %s254
      %p263 = scmp.eq.s32.totalorder %s33, 0
      %p264 = por %p262, %p263
      %p265 = scmp.ne.s32.totalorder %s253, %s254
      %p266 = scmp.eq.s32.totalorder %s34, 1
      %p267 = por %p265, %p266
      %p269 = scmp.ne.s32.totalorder %s254, %s268
      %p270 = scmp.eq.s32.totalorder %s34, 0
      %p271 = por %p269, %p270
      %s273 = sadd.s32 %s272, 1
      %p276 = scmp.eq.s32.totalorder %s28, 1
      %p277 = scmp.ne.s32.totalorder %s272, %s274
      %p278 = scmp.eq.s32.totalorder %s28, 0
      %p279 = por %p277, %p278
      %p280 = scmp.ne.s32.totalorder %s272, %s274
      %p281 = scmp.eq.s32.totalorder %s33, 1
      %p282 = por %p280, %p281
      %p283 = scmp.ne.s32.totalorder %s274, %s275
      %p284 = scmp.eq.s32.totalorder %s33, 0
      %p285 = por %p283, %p284
      %p286 = scmp.ne.s32.totalorder %s274, %s275
      %p287 = scmp.eq.s32.totalorder %s34, 1
      %p288 = por %p286, %p287
      %p290 = scmp.ne.s32.totalorder %s275, %s289
      %p291 = scmp.eq.s32.totalorder %s34, 0
      %p292 = por %p290, %p291
      %s294 = sadd.s32 %s293, 1
      %p297 = scmp.eq.s32.totalorder %s28, 1
      %p298 = scmp.ne.s32.totalorder %s293, %s295
      %p299 = scmp.eq.s32.totalorder %s28, 0
      %p300 = por %p298, %p299
      %p301 = scmp.ne.s32.totalorder %s293, %s295
      %p302 = scmp.eq.s32.totalorder %s33, 1
      %p303 = por %p301, %p302
      %p304 = scmp.ne.s32.totalorder %s295, %s296
      %p305 = scmp.eq.s32.totalorder %s33, 0
      %p306 = por %p304, %p305
      %p307 = scmp.ne.s32.totalorder %s295, %s296
      %p308 = scmp.eq.s32.totalorder %s34, 1
      %p309 = por %p307, %p308
      %p311 = scmp.ne.s32.totalorder %s296, %s310
      %p312 = scmp.eq.s32.totalorder %s34, 0
      %p313 = por %p311, %p312
      %s315 = sadd.s32 %s314, 1
      %p318 = scmp.eq.s32.totalorder %s28, 1
      %p319 = scmp.ne.s32.totalorder %s314, %s316
      %p320 = scmp.eq.s32.totalorder %s28, 0
      %p321 = por %p319, %p320
      %p322 = scmp.ne.s32.totalorder %s314, %s316
      %p323 = scmp.eq.s32.totalorder %s33, 1
      %p324 = por %p322, %p323
      %p325 = scmp.ne.s32.totalorder %s316, %s317
      %p326 = scmp.eq.s32.totalorder %s33, 0
      %p327 = por %p325, %p326
      %p328 = scmp.ne.s32.totalorder %s316, %s317
      %p329 = scmp.eq.s32.totalorder %s34, 1
      %p330 = por %p328, %p329
      %p332 = scmp.ne.s32.totalorder %s317, %s331
      %p333 = scmp.eq.s32.totalorder %s34, 0
      %p334 = por %p332, %p333
      %s336 = sadd.s32 %s335, 1
      %p339 = scmp.eq.s32.totalorder %s28, 1
      %p340 = scmp.ne.s32.totalorder %s335, %s337
      %p341 = scmp.eq.s32.totalorder %s28, 0
      %p342 = por %p340, %p341
      %p343 = scmp.ne.s32.totalorder %s335, %s337
      %p344 = scmp.eq.s32.totalorder %s33, 1
      %p345 = por %p343, %p344
      %p346 = scmp.ne.s32.totalorder %s337, %s338
      %p347 = scmp.eq.s32.totalorder %s33, 0
      %p348 = por %p346, %p347
      %p349 = scmp.ne.s32.totalorder %s337, %s338
      %p350 = scmp.eq.s32.totalorder %s34, 1
      %p351 = por %p349, %p350
      %p353 = scmp.ne.s32.totalorder %s338, %s352
      %p354 = scmp.eq.s32.totalorder %s34, 0
      %p355 = por %p353, %p354
      %s356 = ssub.s32 %s28, %s35
      %p357 = scmp.eq.s32.totalorder %s356, 0
      %s359 = sadd.s32 %s358, 1
      %s360 = scalar_select %p357, %s358, %s359
      %p363 = pneg %p357
      %p364 = scmp.eq.s32.totalorder %s28, 1
      %p365 = por %p363, %p364
      %p366 = scmp.ne.s32.totalorder %s358, %s361
      %p367 = scmp.eq.s32.totalorder %s28, 0
      %p368 = por %p366, %p367
      %p369 = scmp.ne.s32.totalorder %s358, %s361
      %p370 = scmp.eq.s32.totalorder %s33, 1
      %p371 = por %p369, %p370
      %p372 = scmp.ne.s32.totalorder %s361, %s362
      %p373 = scmp.eq.s32.totalorder %s33, 0
      %p374 = por %p372, %p373
      %p375 = scmp.ne.s32.totalorder %s361, %s362
      %p376 = scmp.eq.s32.totalorder %s34, 1
      %p377 = por %p375, %p376
      %p379 = scmp.ne.s32.totalorder %s362, %s378
      %p380 = scmp.eq.s32.totalorder %s34, 0
      %p381 = por %p379, %p380
      %p382 = scmp.le.s32.totalorder 1, %s28
      %p383 = scmp.lt.s32.totalorder %s28, 3
      %p384 = pnand %p382, %p383
      %p385 = pneg %p384
      // Predicated region
      $region9: #{tpu_custom_call.1} parent=5 // pred_check
        _
      $region10: #{tpu_custom_call.1} parent=5 // pred_check_branch
        %387 = sbr.rel (%p384) target = $region12
      $region11: #{tpu_custom_call.1} parent=5 // pred_region
        %s388 = ssub.s32 %s28, 1
        // Predicated region
        $region13: #{tpu_custom_call.1} parent=11 // pred_check
          %p389 = pneg %p75
        $region14: #{tpu_custom_call.1} parent=11 // pred_check_branch
          %391 = sbr.rel (%p389) target = $region16
        $region15: #{tpu_custom_call.1} parent=11 // pred_region
          _
        $region16: #{tpu_custom_call.1} parent=11 // pred_fallthru
          _
        // Predicated region
        $region17: #{tpu_custom_call.1} parent=11 // pred_check
          %p392 = pneg %p96
        $region18: #{tpu_custom_call.1} parent=11 // pred_check_branch
          %394 = sbr.rel (%p392) target = $region20
        $region19: #{tpu_custom_call.1} parent=11 // pred_region
          _
        $region20: #{tpu_custom_call.1} parent=11 // pred_fallthru
          _
        // Predicated region
        $region21: #{tpu_custom_call.1} parent=11 // pred_check
          %p395 = pneg %p117
        $region22: #{tpu_custom_call.1} parent=11 // pred_check_branch
          %397 = sbr.rel (%p395) target = $region24
        $region23: #{tpu_custom_call.1} parent=11 // pred_region
          %s399 = ssub.s32 1024, 1024
          %400 = vsyncadd [#allocation4], %s399
          %s401 = sshll.u32 [#allocation3], 4
          %s402 = int_to_ptr.vmem [resolvable:$true] %s401
          %407 = dma.hbm_to_vmem [thread:$0]  %s3, 1024, %s402, [#allocation4], 256, 256, 16
        $region24: #{tpu_custom_call.1} parent=11 // pred_fallthru
          _
        // Predicated region
        $region25: #{tpu_custom_call.1} parent=11 // pred_check
          %p408 = pneg %p138
        $region26: #{tpu_custom_call.1} parent=11 // pred_check_branch
          %410 = sbr.rel (%p408) target = $region28
        $region27: #{tpu_custom_call.1} parent=11 // pred_region
          _
        $region28: #{tpu_custom_call.1} parent=11 // pred_fallthru
          _
        // Predicated region
        $region29: #{tpu_custom_call.1} parent=11 // pred_check
          %p411 = pneg %p159
        $region30: #{tpu_custom_call.1} parent=11 // pred_check_branch
          %413 = sbr.rel (%p411) target = $region32
        $region31: #{tpu_custom_call.1} parent=11 // pred_region
          %s415 = ssub.s32 8192, 8192
          %416 = vsyncadd [#allocation7], %s415
          %s417 = sshll.u32 [#allocation6], 4
          %s418 = int_to_ptr.vmem [resolvable:$true] %s417
          %423 = dma.hbm_to_vmem [thread:$0]  %s5, 8192, %s418, [#allocation7], 256, 256, 16
        $region32: #{tpu_custom_call.1} parent=11 // pred_fallthru
          _
        // Predicated region
        $region33: #{tpu_custom_call.1} parent=11 // pred_check
          %p424 = pneg %p180
        $region34: #{tpu_custom_call.1} parent=11 // pred_check_branch
          %426 = sbr.rel (%p424) target = $region36
        $region35: #{tpu_custom_call.1} parent=11 // pred_region
          %s428 = ssub.s32 512, 512
          %429 = vsyncadd [#allocation7], %s428
          %s430 = sshll.u32 [#allocation8], 4
          %s431 = int_to_ptr.vmem [resolvable:$true] %s430
          %436 = dma.hbm_to_vmem [thread:$0]  %s6, 512, %s431, [#allocation7], 128, 128, 8
        $region36: #{tpu_custom_call.1} parent=11 // pred_fallthru
          _
        // Predicated region
        $region37: #{tpu_custom_call.1} parent=11 // pred_check
          %p437 = pneg %p201
        $region38: #{tpu_custom_call.1} parent=11 // pred_check_branch
          %439 = sbr.rel (%p437) target = $region40
        $region39: #{tpu_custom_call.1} parent=11 // pred_region
          _
        $region40: #{tpu_custom_call.1} parent=11 // pred_fallthru
          _
        // Predicated region
        $region41: #{tpu_custom_call.1} parent=11 // pred_check
          %p440 = pneg %p222
        $region42: #{tpu_custom_call.1} parent=11 // pred_check_branch
          %442 = sbr.rel (%p440) target = $region44
        $region43: #{tpu_custom_call.1} parent=11 // pred_region
          %s444 = ssub.s32 512, 512
          %445 = vsyncadd [#allocation10], %s444
          %s446 = sshll.u32 [#allocation9], 4
          %s447 = int_to_ptr.vmem [resolvable:$true] %s446
          %452 = dma.hbm_to_vmem [thread:$0]  %s8, 512, %s447, [#allocation10], 128, 128, 8
        $region44: #{tpu_custom_call.1} parent=11 // pred_fallthru
          _
        // Predicated region
        $region45: #{tpu_custom_call.1} parent=11 // pred_check
          %p453 = pneg %p243
        $region46: #{tpu_custom_call.1} parent=11 // pred_check_branch
          %455 = sbr.rel (%p453) target = $region48
        $region47: #{tpu_custom_call.1} parent=11 // pred_region
          _
        $region48: #{tpu_custom_call.1} parent=11 // pred_fallthru
          _
        // Predicated region
        $region49: #{tpu_custom_call.1} parent=11 // pred_check
          %p456 = pneg %p264
        $region50: #{tpu_custom_call.1} parent=11 // pred_check_branch
          %458 = sbr.rel (%p456) target = $region52
        $region51: #{tpu_custom_call.1} parent=11 // pred_region
          %s460 = ssub.s32 128, 128
          %461 = vsyncadd [#allocation10], %s460
          %s463 = sshll.u32 [#allocation11], 4
          %s464 = int_to_ptr.vmem [resolvable:$true] %s463
          %466 = dma.hbm_to_vmem [thread:$0]  %s10, 128, %s464, [#allocation10]
        $region52: #{tpu_custom_call.1} parent=11 // pred_fallthru
          _
        // Predicated region
        $region53: #{tpu_custom_call.1} parent=11 // pred_check
          %p467 = pneg %p285
        $region54: #{tpu_custom_call.1} parent=11 // pred_check_branch
          %469 = sbr.rel (%p467) target = $region56
        $region55: #{tpu_custom_call.1} parent=11 // pred_region
          %s471 = ssub.s32 128, 128
          %472 = vsyncadd [#allocation13], %s471
          %s474 = sshll.u32 [#allocation12], 4
          %s475 = int_to_ptr.vmem [resolvable:$true] %s474
          %477 = dma.hbm_to_vmem [thread:$0]  %s11, 128, %s475, [#allocation13]
        $region56: #{tpu_custom_call.1} parent=11 // pred_fallthru
          _
        // Predicated region
        $region57: #{tpu_custom_call.1} parent=11 // pred_check
          %p478 = pneg %p306
        $region58: #{tpu_custom_call.1} parent=11 // pred_check_branch
          %480 = sbr.rel (%p478) target = $region60
        $region59: #{tpu_custom_call.1} parent=11 // pred_region
          _
        $region60: #{tpu_custom_call.1} parent=11 // pred_fallthru
          _
        // Predicated region
        $region61: #{tpu_custom_call.1} parent=11 // pred_check
          %p481 = pneg %p327
        $region62: #{tpu_custom_call.1} parent=11 // pred_check_branch
          %483 = sbr.rel (%p481) target = $region64
        $region63: #{tpu_custom_call.1} parent=11 // pred_region
          _
        $region64: #{tpu_custom_call.1} parent=11 // pred_fallthru
          _
        // Predicated region
        $region65: #{tpu_custom_call.1} parent=11 // pred_check
          %p484 = pneg %p348
        $region66: #{tpu_custom_call.1} parent=11 // pred_check_branch
          %486 = sbr.rel (%p484) target = $region68
        $region67: #{tpu_custom_call.1} parent=11 // pred_region
          _
        $region68: #{tpu_custom_call.1} parent=11 // pred_fallthru
          _
      $region12: #{tpu_custom_call.1} parent=5 // pred_fallthru
        _
      %p487 = scmp.lt.s32.totalorder %s28, 2
      // Predicated region
      $region69: #{tpu_custom_call.1} parent=5 // pred_check
        %p488 = pneg %p487
      $region70: #{tpu_custom_call.1} parent=5 // pred_check_branch
        %490 = sbr.rel (%p488) target = $region72
      $region71: #{tpu_custom_call.1} parent=5 // pred_region
        // Predicated region
        $region73: #{tpu_custom_call.1} parent=71 // pred_check
          %p491 = pneg %p48
        $region74: #{tpu_custom_call.1} parent=71 // pred_check_branch
          %493 = sbr.rel (%p491) target = $region76
        $region75: #{tpu_custom_call.1} parent=71 // pred_region
          %s494 = sand.u32 %s38, 1
          %s495 = sand.u32 %s38, 1
          %s496 = smul.addr %s495, 64
          %s497 = scalar_lea.vmem [#allocation2], %s496
          %s498 = smul.u32 2, %s28
          %s499 = smul.addr %s498, 8
          %s500 = scalar_lea.vmem %s0, %s499
          // Predicated region
          $region77: #{tpu_custom_call.1} parent=75 // pred_check
            _
          $region78: #{tpu_custom_call.1} parent=75 // pred_check_branch
            %502 = sbr.rel (0) target = $region80
          $region79: #{tpu_custom_call.1} parent=75 // pred_region
            // Predicated region
            $region81: #{tpu_custom_call.1} parent=79 // pred_check
              _
            $region82: #{tpu_custom_call.1} parent=79 // pred_check_branch
              %504 = sbr.rel (0) target = $region84
            $region83: #{tpu_custom_call.1} parent=79 // pred_region
              loop: start=0, step=1, limit=1
              $region85: #{tpu_custom_call.1} parent=83 // loop_pre_header
                _
              $region86: #{tpu_custom_call.1} parent=83 // loop_header
                %s506 = sphi 0, %s510
                %p507 = scmp.ge.s32.totalorder %s506, 1
                %s511 = sphi %s500, %s500
                %s512 = sphi %s497, %s497
              $region87: #{tpu_custom_call.1} parent=83 // loop_header_branch
                %509 = sbr.rel (%p507) target = $region91
              $region88: #{tpu_custom_call.1} parent=83 // loop_body
                %v513 = vld [vmem:[%s511] sm:$0xff]
                %514 = vst [vmem:[%s512] sm:$0xff] %v513
                %v515 = vld [vmem:[%s511 + $0x8] sm:$0xff]
                %516 = vst [vmem:[%s512 + $0x8] sm:$0xff] %v515
                %v517 = vld [vmem:[%s511 + $0x20] sm:$0xff]
                %518 = vst [vmem:[%s512 + $0x10] sm:$0xff] %v517
                %v519 = vld [vmem:[%s511 + $0x28] sm:$0xff]
                %520 = vst [vmem:[%s512 + $0x18] sm:$0xff] %v519
                %v521 = vld [vmem:[%s511 + $0x40] sm:$0xff]
                %522 = vst [vmem:[%s512 + $0x20] sm:$0xff] %v521
                %v523 = vld [vmem:[%s511 + $0x48] sm:$0xff]
                %524 = vst [vmem:[%s512 + $0x28] sm:$0xff] %v523
                %v525 = vld [vmem:[%s511 + $0x60] sm:$0xff]
                %526 = vst [vmem:[%s512 + $0x30] sm:$0xff] %v525
                %v527 = vld [vmem:[%s511 + $0x68] sm:$0xff]
                %528 = vst [vmem:[%s512 + $0x38] sm:$0xff] %v527
              $region89: #{tpu_custom_call.1} parent=83 // loop_footer
                %s510 = sadd.s32 1, %s506
              $region90: #{tpu_custom_call.1} parent=83 // loop_footer_branch
                %505 = sbr.rel target = $region86
              $region91: #{tpu_custom_call.1} parent=83 // loop_exit
                _
            $region84: #{tpu_custom_call.1} parent=79 // pred_fallthru
              _
            // Predicated region
            $region92: #{tpu_custom_call.1} parent=79 // pred_check
              _
            $region93: #{tpu_custom_call.1} parent=79 // pred_check_branch
              %530 = sbr.rel target = $region95
            $region94: #{tpu_custom_call.1} parent=79 // pred_region
              _
            $region95: #{tpu_custom_call.1} parent=79 // pred_fallthru
              _
          $region80: #{tpu_custom_call.1} parent=75 // pred_fallthru
            _
          %531 = vnop
        $region76: #{tpu_custom_call.1} parent=71 // pred_fallthru
          _
      $region72: #{tpu_custom_call.1} parent=5 // pred_fallthru
        _
      %p532 = scmp.le.s32.totalorder 1, %s28
      %p533 = scmp.lt.s32.totalorder %s28, 3
      %p534 = pnand %p532, %p533
      %p535 = pneg %p534
      // Predicated region
      $region96: #{tpu_custom_call.1} parent=5 // pred_check
        _
      $region97: #{tpu_custom_call.1} parent=5 // pred_check_branch
        %537 = sbr.rel (%p534) target = $region99
      $region98: #{tpu_custom_call.1} parent=5 // pred_region
        %s538 = ssub.s32 %s28, 1
        %s539 = sand.u32 %s41, 1
        %s540 = sand.u32 %s41, 1
        %s541 = smul.addr %s540, 64
        %s542 = scalar_lea.vmem [#allocation2], %s541
        // Predicated region
        $region100: #{tpu_custom_call.1} parent=98 // pred_check
          %p543 = pneg %p54
        $region101: #{tpu_custom_call.1} parent=98 // pred_check_branch
          %545 = sbr.rel (%p543) target = $region103
        $region102: #{tpu_custom_call.1} parent=98 // pred_region
          _
        $region103: #{tpu_custom_call.1} parent=98 // pred_fallthru
          _
        // Predicated region
        $region104: #{tpu_custom_call.1} parent=98 // pred_check
          %p546 = pneg %p117
        $region105: #{tpu_custom_call.1} parent=98 // pred_check_branch
          %548 = sbr.rel (%p546) target = $region107
        $region106: #{tpu_custom_call.1} parent=98 // pred_region
          %549 = dma.done [#allocation4], 1024
        $region107: #{tpu_custom_call.1} parent=98 // pred_fallthru
          _
        // Predicated region
        $region108: #{tpu_custom_call.1} parent=98 // pred_check
          %p550 = pneg %p159
        $region109: #{tpu_custom_call.1} parent=98 // pred_check_branch
          %552 = sbr.rel (%p550) target = $region111
        $region110: #{tpu_custom_call.1} parent=98 // pred_region
          %553 = dma.done [#allocation7], 8192
        $region111: #{tpu_custom_call.1} parent=98 // pred_fallthru
          _
        // Predicated region
        $region112: #{tpu_custom_call.1} parent=98 // pred_check
          %p554 = pneg %p180
        $region113: #{tpu_custom_call.1} parent=98 // pred_check_branch
          %556 = sbr.rel (%p554) target = $region115
        $region114: #{tpu_custom_call.1} parent=98 // pred_region
          %557 = dma.done [#allocation7], 512
        $region115: #{tpu_custom_call.1} parent=98 // pred_fallthru
          _
        // Predicated region
        $region116: #{tpu_custom_call.1} parent=98 // pred_check
          %p558 = pneg %p222
        $region117: #{tpu_custom_call.1} parent=98 // pred_check_branch
          %560 = sbr.rel (%p558) target = $region119
        $region118: #{tpu_custom_call.1} parent=98 // pred_region
          %561 = dma.done [#allocation10], 512
        $region119: #{tpu_custom_call.1} parent=98 // pred_fallthru
          _
        // Predicated region
        $region120: #{tpu_custom_call.1} parent=98 // pred_check
          %p562 = pneg %p264
        $region121: #{tpu_custom_call.1} parent=98 // pred_check_branch
          %564 = sbr.rel (%p562) target = $region123
        $region122: #{tpu_custom_call.1} parent=98 // pred_region
          %565 = dma.done [#allocation10], 128
        $region123: #{tpu_custom_call.1} parent=98 // pred_fallthru
          _
        // Predicated region
        $region124: #{tpu_custom_call.1} parent=98 // pred_check
          %p566 = pneg %p285
        $region125: #{tpu_custom_call.1} parent=98 // pred_check_branch
          %568 = sbr.rel (%p566) target = $region127
        $region126: #{tpu_custom_call.1} parent=98 // pred_region
          %569 = dma.done [#allocation13], 128
        $region127: #{tpu_custom_call.1} parent=98 // pred_fallthru
          _
        %s570 = sand.u32 %s41, 1
        %s571 = sand.u32 %s41, 1
        %s572 = smul.addr %s571, 64
        %s573 = scalar_lea.vmem [#allocation2], %s572
        %p574 = pneg %p54
        %p575 = pneg %p51
        %p576 = pneg %p75
        %p577 = pneg %p72
        %p578 = pneg %p96
        %p579 = pneg %p93
        %p580 = pneg %p117
        %p581 = pneg %p114
        %p582 = pneg %p138
        %p583 = pneg %p135
        %p584 = pneg %p159
        %p585 = pneg %p156
        %p586 = pneg %p180
        %p587 = pneg %p177
        %p588 = pneg %p201
        %p589 = pneg %p198
        %p590 = pneg %p222
        %p591 = pneg %p219
        %p592 = pneg %p243
        %p593 = pneg %p240
        %p594 = pneg %p264
        %p595 = pneg %p261
        %p596 = pneg %p285
        %p597 = pneg %p282
        %p598 = pneg %p306
        %p599 = pneg %p303
        %p600 = pneg %p327
        %p601 = pneg %p324
        %p602 = pneg %p348
        %p603 = pneg %p345
        %p604 = pneg %p374
        %p605 = pneg %p371
        %s606 = sand.u32 %s361, 1
        %s607 = scalar_lea.sflag [#allocation5], %s606
        %s608 = sand.u32 %s361, 1
        %s609 = smul.addr %s608, 64
        %s610 = scalar_lea.vmem [#allocation14], %s609
        %s611 = smul.u32 2, %s33
        %s612 = smul.u32 2, %s33
        %v613 = vld [vmem:[%s542] sm:$0xff]
        %v614 = vld [vmem:[%s542 + $0x8] sm:$0xff]
        %v615 = vld [vmem:[%s542 + $0x10] sm:$0xff]
        %v616 = vld [vmem:[%s542 + $0x18] sm:$0xff]
        %v617 = vld [vmem:[%s542 + $0x20] sm:$0xff]
        %v618 = vld [vmem:[%s542 + $0x28] sm:$0xff]
        %v619 = vld [vmem:[%s542 + $0x30] sm:$0xff]
        %v620 = vld [vmem:[%s542 + $0x38] sm:$0xff]
        %v621 = vld [vmem:[%s1] sm:$0xff]
        %v622 = vld [vmem:[%s1 + $0x8] sm:$0xff]
        %v623 = vld [vmem:[%s1 + $0x10] sm:$0xff]
        %v624 = vld [vmem:[%s1 + $0x18] sm:$0xff]
        %v625 = vld [vmem:[%s1 + $0x20] sm:$0xff]
        %v626 = vld [vmem:[%s1 + $0x28] sm:$0xff]
        %v627 = vld [vmem:[%s1 + $0x30] sm:$0xff]
        %v628 = vld [vmem:[%s1 + $0x38] sm:$0xff]
        %v629 = vld [vmem:[%s1 + $0x40] sm:$0xff]
        %v630 = vld [vmem:[%s1 + $0x48] sm:$0xff]
        %v631 = vld [vmem:[%s1 + $0x50] sm:$0xff]
        %v632 = vld [vmem:[%s1 + $0x58] sm:$0xff]
        %v633 = vld [vmem:[%s1 + $0x60] sm:$0xff]
        %v634 = vld [vmem:[%s1 + $0x68] sm:$0xff]
        %v635 = vld [vmem:[%s1 + $0x70] sm:$0xff]
        %v636 = vld [vmem:[%s1 + $0x78] sm:$0xff]
        %v637 = vld [vmem:[%s1 + $0x80] sm:$0xff]
        %v638 = vld [vmem:[%s1 + $0x88] sm:$0xff]
        %v639 = vld [vmem:[%s1 + $0x90] sm:$0xff]
        %v640 = vld [vmem:[%s1 + $0x98] sm:$0xff]
        %v641 = vld [vmem:[%s1 + $0xa0] sm:$0xff]
        %v642 = vld [vmem:[%s1 + $0xa8] sm:$0xff]
        %v643 = vld [vmem:[%s1 + $0xb0] sm:$0xff]
        %v644 = vld [vmem:[%s1 + $0xb8] sm:$0xff]
        %v645 = vld [vmem:[%s1 + $0xc0] sm:$0xff]
        %v646 = vld [vmem:[%s1 + $0xc8] sm:$0xff]
        %v647 = vld [vmem:[%s1 + $0xd0] sm:$0xff]
        %v648 = vld [vmem:[%s1 + $0xd8] sm:$0xff]
        %v649 = vld [vmem:[%s1 + $0xe0] sm:$0xff]
        %v650 = vld [vmem:[%s1 + $0xe8] sm:$0xff]
        %v651 = vld [vmem:[%s1 + $0xf0] sm:$0xff]
        %v652 = vld [vmem:[%s1 + $0xf8] sm:$0xff]
        %v653 = vld [vmem:[%s1 + $0x100] sm:$0xff]
        %v654 = vld [vmem:[%s1 + $0x108] sm:$0xff]
        %v655 = vld [vmem:[%s1 + $0x110] sm:$0xff]
        %v656 = vld [vmem:[%s1 + $0x118] sm:$0xff]
        %v657 = vld [vmem:[%s1 + $0x120] sm:$0xff]
        %v658 = vld [vmem:[%s1 + $0x128] sm:$0xff]
        %v659 = vld [vmem:[%s1 + $0x130] sm:$0xff]
        %v660 = vld [vmem:[%s1 + $0x138] sm:$0xff]
        %v661 = vld [vmem:[%s1 + $0x140] sm:$0xff]
        %v662 = vld [vmem:[%s1 + $0x148] sm:$0xff]
        %v663 = vld [vmem:[%s1 + $0x150] sm:$0xff]
        %v664 = vld [vmem:[%s1 + $0x158] sm:$0xff]
        %v665 = vld [vmem:[%s1 + $0x160] sm:$0xff]
        %v666 = vld [vmem:[%s1 + $0x168] sm:$0xff]
        %v667 = vld [vmem:[%s1 + $0x170] sm:$0xff]
        %v668 = vld [vmem:[%s1 + $0x178] sm:$0xff]
        %v669 = vld [vmem:[%s1 + $0x180] sm:$0xff]
        %v670 = vld [vmem:[%s1 + $0x188] sm:$0xff]
        %v671 = vld [vmem:[%s1 + $0x190] sm:$0xff]
        %v672 = vld [vmem:[%s1 + $0x198] sm:$0xff]
        %v673 = vld [vmem:[%s1 + $0x1a0] sm:$0xff]
        %v674 = vld [vmem:[%s1 + $0x1a8] sm:$0xff]
        %v675 = vld [vmem:[%s1 + $0x1b0] sm:$0xff]
        %v676 = vld [vmem:[%s1 + $0x1b8] sm:$0xff]
        %v677 = vld [vmem:[%s1 + $0x1c0] sm:$0xff]
        %v678 = vld [vmem:[%s1 + $0x1c8] sm:$0xff]
        %v679 = vld [vmem:[%s1 + $0x1d0] sm:$0xff]
        %v680 = vld [vmem:[%s1 + $0x1d8] sm:$0xff]
        %v681 = vld [vmem:[%s1 + $0x1e0] sm:$0xff]
        %v682 = vld [vmem:[%s1 + $0x1e8] sm:$0xff]
        %v683 = vld [vmem:[%s1 + $0x1f0] sm:$0xff]
        %v684 = vld [vmem:[%s1 + $0x1f8] sm:$0xff]
        %685 = vmatprep.subr.mxu0 %v622
        %686 = vmatpush1.msra.mxu0 %v621
        %687 = vmatprep.subr.mxu0 %v624
        %688 = vmatpush1.msra.mxu0 %v623
        %689 = vmatprep.subr.mxu0 %v626
        %690 = vmatpush1.msra.mxu0 %v625
        %691 = vmatprep.subr.mxu0 %v628
        %692 = vmatpush1.msra.mxu0 %v627
        %693 = vmatprep.subr.mxu0 %v630
        %694 = vmatpush1.msra.mxu0 %v629
        %695 = vmatprep.subr.mxu0 %v632
        %696 = vmatpush1.msra.mxu0 %v631
        %697 = vmatprep.subr.mxu0 %v634
        %698 = vmatpush1.msra.mxu0 %v633
        %699 = vmatprep.subr.mxu0 %v636
        %700 = vmatpush1.msra.mxu0 %v635
        %701 = vmatprep.subr.mxu0 %v638
        %702 = vmatpush1.msra.mxu0 %v637
        %703 = vmatprep.subr.mxu0 %v640
        %704 = vmatpush1.msra.mxu0 %v639
        %705 = vmatprep.subr.mxu0 %v642
        %706 = vmatpush1.msra.mxu0 %v641
        %707 = vmatprep.subr.mxu0 %v644
        %708 = vmatpush1.msra.mxu0 %v643
        %709 = vmatprep.subr.mxu0 %v646
        %710 = vmatpush1.msra.mxu0 %v645
        %711 = vmatprep.subr.mxu0 %v648
        %712 = vmatpush1.msra.mxu0 %v647
        %713 = vmatprep.subr.mxu0 %v650
        %714 = vmatpush1.msra.mxu0 %v649
        %715 = vmatprep.subr.mxu0 %v652
        %716 = vmatpush1.msra.mxu0 %v651
        %717 = vmatprep.subr.mxu0 %v654
        %718 = vmatpush1.msra.mxu0 %v653
        %719 = vmatprep.subr.mxu0 %v656
        %720 = vmatpush1.msra.mxu0 %v655
        %721 = vmatprep.subr.mxu0 %v658
        %722 = vmatpush1.msra.mxu0 %v657
        %723 = vmatprep.subr.mxu0 %v660
        %724 = vmatpush1.msra.mxu0 %v659
        %725 = vmatprep.subr.mxu0 %v662
        %726 = vmatpush1.msra.mxu0 %v661
        %727 = vmatprep.subr.mxu0 %v664
        %728 = vmatpush1.msra.mxu0 %v663
        %729 = vmatprep.subr.mxu0 %v666
        %730 = vmatpush1.msra.mxu0 %v665
        %731 = vmatprep.subr.mxu0 %v668
        %732 = vmatpush1.msra.mxu0 %v667
        %733 = vmatprep.subr.mxu0 %v670
        %734 = vmatpush1.msra.mxu0 %v669
        %735 = vmatprep.subr.mxu0 %v672
        %736 = vmatpush1.msra.mxu0 %v671
        %737 = vmatprep.subr.mxu0 %v674
        %738 = vmatpush1.msra.mxu0 %v673
        %739 = vmatprep.subr.mxu0 %v676
        %740 = vmatpush1.msra.mxu0 %v675
        %741 = vmatprep.subr.mxu0 %v678
        %742 = vmatpush1.msra.mxu0 %v677
        %743 = vmatprep.subr.mxu0 %v680
        %744 = vmatpush1.msra.mxu0 %v679
        %745 = vmatprep.subr.mxu0 %v682
        %746 = vmatpush1.msra.mxu0 %v681
        %747 = vmatprep.subr.mxu0 %v684
        %748 = vmatpush1.msra.mxu0 %v683
        %749 = vmatprep.mubr.f32.mxu0 %v614
        %750 = vmatmul.mubr.f32.gmra.mrb[0].mxu0 %v613
        %v751 = vpop.f32.mrb[0].mxu0
        %v752 = vadd.f32 0.0, %v751
        %v753 = vpop.f32.mrb[0].mxu0
        %v754 = vadd.f32 0.0, %v753
        %755 = vmatprep.mubr.f32.mxu0 %v616
        %756 = vmatmul.mubr.f32.gmra.mrb[0].mxu0 %v615
        %v757 = vpop.f32.mrb[0].mxu0
        %v758 = vadd.f32 0.0, %v757
        %v759 = vpop.f32.mrb[0].mxu0
        %v760 = vadd.f32 0.0, %v759
        %761 = vmatprep.mubr.f32.mxu0 %v618
        %762 = vmatmul.mubr.f32.gmra.mrb[0].mxu0 %v617
        %v763 = vpop.f32.mrb[0].mxu0
        %v764 = vadd.f32 0.0, %v763
        %v765 = vpop.f32.mrb[0].mxu0
        %v766 = vadd.f32 0.0, %v765
        %767 = vmatprep.mubr.f32.mxu0 %v620
        %768 = vmatmul.mubr.f32.gmra.mrb[0].mxu0 %v619
        %v769 = vpop.f32.mrb[0].mxu0
        %v770 = vadd.f32 0.0, %v769
        %v771 = vpop.f32.mrb[0].mxu0
        %v772 = vadd.f32 0.0, %v771
        %773 = vdwg.mxu0
        %vm774 = vcmp.ge.f32.partialorder %v752, 0.0
        %vm775 = vcmp.ge.f32.partialorder %v754, 0.0
        %vm776 = vcmp.ge.f32.partialorder %v758, 0.0
        %vm777 = vcmp.ge.f32.partialorder %v760, 0.0
        %vm778 = vcmp.ge.f32.partialorder %v764, 0.0
        %vm779 = vcmp.ge.f32.partialorder %v766, 0.0
        %vm780 = vcmp.ge.f32.partialorder %v770, 0.0
        %vm781 = vcmp.ge.f32.partialorder %v772, 0.0
        %v782 = vmul.f32 %v752, 0.2
        %v783 = vmul.f32 %v754, 0.2
        %v784 = vmul.f32 %v758, 0.2
        %v785 = vmul.f32 %v760, 0.2
        %v786 = vmul.f32 %v764, 0.2
        %v787 = vmul.f32 %v766, 0.2
        %v788 = vmul.f32 %v770, 0.2
        %v789 = vmul.f32 %v772, 0.2
        %v790 = vsel %vm774, %v752, %v782
        %v791 = vsel %vm775, %v754, %v783
        %v792 = vsel %vm776, %v758, %v784
        %v793 = vsel %vm777, %v760, %v785
        %v794 = vsel %vm778, %v764, %v786
        %v795 = vsel %vm779, %v766, %v787
        %v796 = vsel %vm780, %v770, %v788
        %v797 = vsel %vm781, %v772, %v789
        %v798 = vld [vmem:[#allocation8] sm:$0xff]
        %v799 = vld [vmem:[#allocation8 + $0x8] sm:$0xff]
        %v800 = vld [vmem:[#allocation8 + $0x10] sm:$0xff]
        %v801 = vld [vmem:[#allocation8 + $0x18] sm:$0xff]
        %v802 = vld [vmem:[%s7] sm:$0xff]
        %v803 = vld [vmem:[%s7 + $0x8] sm:$0xff]
        %v804 = vld [vmem:[%s7 + $0x10] sm:$0xff]
        %v805 = vld [vmem:[%s7 + $0x18] sm:$0xff]
        %807 = vset.pattern.permute.xlu0 0
        %808 = vperm.xlu0 %807, %v802
        %v809 = vpop.permute.xlu0 %808
        %812 = vset.pattern.permute.xlu0 0
        %813 = vperm.xlu0 %812, %v803
        %v814 = vpop.permute.xlu0 %813
        %817 = vset.pattern.permute.xlu0 0
        %818 = vperm.xlu0 %817, %v804
        %v819 = vpop.permute.xlu0 %818
        %822 = vset.pattern.permute.xlu0 0
        %823 = vperm.xlu0 %822, %v805
        %v824 = vpop.permute.xlu0 %823
        %vm826 = vcmask 261120
        %v828 = vsel %vm826, %v798, 0
        %v831 = vsel %vm826, %v799, 0
        %v834 = vsel %vm826, %v800, 0
        %v837 = vsel %vm826, %v801, 0
        %839 = vmatprep.subr.mxu0 %v791
        %840 = vmatpush1.msra.mxu0 %v790
        %841 = vmatprep.subr.mxu0 %v793
        %842 = vmatpush1.msra.mxu0 %v792
        %843 = vmatprep.subr.mxu0 %v795
        %844 = vmatpush1.msra.mxu0 %v794
        %845 = vmatprep.subr.mxu0 %v797
        %846 = vmatpush1.msra.mxu0 %v796
        %847 = vmatprep.subr.mxu0 0.0
        %848 = vmatpush1.msra.mxu0 0.0
        %849 = vmatprep.subr.mxu0 0.0
        %850 = vmatpush1.msra.mxu0 0.0
        %851 = vmatprep.subr.mxu0 0.0
        %852 = vmatpush1.msra.mxu0 0.0
        %853 = vmatprep.subr.mxu0 0.0
        %854 = vmatpush1.msra.mxu0 0.0
        %855 = vmatprep.subr.mxu0 0.0
        %856 = vmatpush1.msra.mxu0 0.0
        %857 = vmatprep.subr.mxu0 0.0
        %858 = vmatpush1.msra.mxu0 0.0
        %859 = vmatprep.subr.mxu0 0.0
        %860 = vmatpush1.msra.mxu0 0.0
        %861 = vmatprep.subr.mxu0 0.0
        %862 = vmatpush1.msra.mxu0 0.0
        %863 = vmatprep.subr.mxu0 0.0
        %864 = vmatpush1.msra.mxu0 0.0
        %865 = vmatprep.subr.mxu0 0.0
        %866 = vmatpush1.msra.mxu0 0.0
        %867 = vmatprep.subr.mxu0 0.0
        %868 = vmatpush1.msra.mxu0 0.0
        %869 = vmatprep.subr.mxu0 0.0
        %870 = vmatpush1.msra.mxu0 0.0
        %871 = vmatprep.subr.mxu0 0.0
        %872 = vmatpush1.msra.mxu0 0.0
        %873 = vmatprep.subr.mxu0 0.0
        %874 = vmatpush1.msra.mxu0 0.0
        %875 = vmatprep.subr.mxu0 0.0
        %876 = vmatpush1.msra.mxu0 0.0
        %877 = vmatprep.subr.mxu0 0.0
        %878 = vmatpush1.msra.mxu0 0.0
        %879 = vmatprep.subr.mxu0 0.0
        %880 = vmatpush1.msra.mxu0 0.0
        %881 = vmatprep.subr.mxu0 0.0
        %882 = vmatpush1.msra.mxu0 0.0
        %883 = vmatprep.subr.mxu0 0.0
        %884 = vmatpush1.msra.mxu0 0.0
        %885 = vmatprep.subr.mxu0 0.0
        %886 = vmatpush1.msra.mxu0 0.0
        %887 = vmatprep.subr.mxu0 0.0
        %888 = vmatpush1.msra.mxu0 0.0
        %889 = vmatprep.subr.mxu0 0.0
        %890 = vmatpush1.msra.mxu0 0.0
        %891 = vmatprep.subr.mxu0 0.0
        %892 = vmatpush1.msra.mxu0 0.0
        %893 = vmatprep.subr.mxu0 0.0
        %894 = vmatpush1.msra.mxu0 0.0
        %895 = vmatprep.subr.mxu0 0.0
        %896 = vmatpush1.msra.mxu0 0.0
        %897 = vmatprep.subr.mxu0 0.0
        %898 = vmatpush1.msra.mxu0 0.0
        %899 = vmatprep.subr.mxu0 0.0
        %900 = vmatpush1.msra.mxu0 0.0
        %901 = vmatprep.subr.mxu0 0.0
        %902 = vmatpush1.msra.mxu0 0.0
        %903 = vmatprep.mubr.f32.mxu0 0.0
        %904 = vmatmul.mubr.f32.gmra.mrb[0].mxu0 %v828
        %v905 = vpop.f32.mrb[0].mxu0
        %v906 = vadd.f32 %v809, %v905
        %v907 = vpop.f32.mrb[0].mxu0
        %v908 = vadd.f32 %v809, %v907
        %909 = vmatprep.mubr.f32.mxu0 0.0
        %910 = vmatmul.mubr.f32.gmra.mrb[0].mxu0 %v831
        %v911 = vpop.f32.mrb[0].mxu0
        %v912 = vadd.f32 %v814, %v911
        %v913 = vpop.f32.mrb[0].mxu0
        %v914 = vadd.f32 %v814, %v913
        %915 = vmatprep.mubr.f32.mxu0 0.0
        %916 = vmatmul.mubr.f32.gmra.mrb[0].mxu0 %v834
        %v917 = vpop.f32.mrb[0].mxu0
        %v918 = vadd.f32 %v819, %v917
        %v919 = vpop.f32.mrb[0].mxu0
        %v920 = vadd.f32 %v819, %v919
        %921 = vmatprep.mubr.f32.mxu0 0.0
        %922 = vmatmul.mubr.f32.gmra.mrb[0].mxu0 %v837
        %v923 = vpop.f32.mrb[0].mxu0
        %v924 = vadd.f32 %v824, %v923
        %v925 = vpop.f32.mrb[0].mxu0
        %v926 = vadd.f32 %v824, %v925
        %927 = vdwg.mxu0
        %vm928 = vcmp.ge.f32.partialorder %v906, 0.0
        %vm929 = vcmp.ge.f32.partialorder %v908, 0.0
        %vm930 = vcmp.ge.f32.partialorder %v912, 0.0
        %vm931 = vcmp.ge.f32.partialorder %v914, 0.0
        %vm932 = vcmp.ge.f32.partialorder %v918, 0.0
        %vm933 = vcmp.ge.f32.partialorder %v920, 0.0
        %vm934 = vcmp.ge.f32.partialorder %v924, 0.0
        %vm935 = vcmp.ge.f32.partialorder %v926, 0.0
        %v936 = vmul.f32 %v906, 0.2
        %v937 = vmul.f32 %v908, 0.2
        %v938 = vmul.f32 %v912, 0.2
        %v939 = vmul.f32 %v914, 0.2
        %v940 = vmul.f32 %v918, 0.2
        %v941 = vmul.f32 %v920, 0.2
        %v942 = vmul.f32 %v924, 0.2
        %v943 = vmul.f32 %v926, 0.2
        %v944 = vsel %vm928, %v906, %v936
        %v945 = vsel %vm929, %v908, %v937
        %v946 = vsel %vm930, %v912, %v938
        %v947 = vsel %vm931, %v914, %v939
        %v948 = vsel %vm932, %v918, %v940
        %v949 = vsel %vm933, %v920, %v941
        %v950 = vsel %vm934, %v924, %v942
        %v951 = vsel %vm935, %v926, %v943
        %v952 = vadd.f32 %v613, %v944
        %v953 = vadd.f32 %v614, %v945
        %v954 = vadd.f32 %v615, %v946
        %v955 = vadd.f32 %v616, %v947
        %v956 = vadd.f32 %v617, %v948
        %v957 = vadd.f32 %v618, %v949
        %v958 = vadd.f32 %v619, %v950
        %v959 = vadd.f32 %v620, %v951
        %v960 = vld [vmem:[%s2] sm:$0xff]
        %v961 = vld [vmem:[%s2 + $0x8] sm:$0xff]
        %v962 = vld [vmem:[%s2 + $0x10] sm:$0xff]
        %v963 = vld [vmem:[%s2 + $0x18] sm:$0xff]
        %v964 = vld [vmem:[%s2 + $0x20] sm:$0xff]
        %v965 = vld [vmem:[%s2 + $0x28] sm:$0xff]
        %v966 = vld [vmem:[%s2 + $0x30] sm:$0xff]
        %v967 = vld [vmem:[%s2 + $0x38] sm:$0xff]
        %v968 = vld [vmem:[%s2 + $0x40] sm:$0xff]
        %v969 = vld [vmem:[%s2 + $0x48] sm:$0xff]
        %v970 = vld [vmem:[%s2 + $0x50] sm:$0xff]
        %v971 = vld [vmem:[%s2 + $0x58] sm:$0xff]
        %v972 = vld [vmem:[%s2 + $0x60] sm:$0xff]
        %v973 = vld [vmem:[%s2 + $0x68] sm:$0xff]
        %v974 = vld [vmem:[%s2 + $0x70] sm:$0xff]
        %v975 = vld [vmem:[%s2 + $0x78] sm:$0xff]
        %v976 = vld [vmem:[%s2 + $0x80] sm:$0xff]
        %v977 = vld [vmem:[%s2 + $0x88] sm:$0xff]
        %v978 = vld [vmem:[%s2 + $0x90] sm:$0xff]
        %v979 = vld [vmem:[%s2 + $0x98] sm:$0xff]
        %v980 = vld [vmem:[%s2 + $0xa0] sm:$0xff]
        %v981 = vld [vmem:[%s2 + $0xa8] sm:$0xff]
        %v982 = vld [vmem:[%s2 + $0xb0] sm:$0xff]
        %v983 = vld [vmem:[%s2 + $0xb8] sm:$0xff]
        %v984 = vld [vmem:[%s2 + $0xc0] sm:$0xff]
        %v985 = vld [vmem:[%s2 + $0xc8] sm:$0xff]
        %v986 = vld [vmem:[%s2 + $0xd0] sm:$0xff]
        %v987 = vld [vmem:[%s2 + $0xd8] sm:$0xff]
        %v988 = vld [vmem:[%s2 + $0xe0] sm:$0xff]
        %v989 = vld [vmem:[%s2 + $0xe8] sm:$0xff]
        %v990 = vld [vmem:[%s2 + $0xf0] sm:$0xff]
        %v991 = vld [vmem:[%s2 + $0xf8] sm:$0xff]
        %992 = vmatprep.subr.mxu0 0.0
        %993 = vmatpush1.msra.mxu0 %v960
        %994 = vmatprep.subr.mxu0 0.0
        %995 = vmatpush1.msra.mxu0 %v961
        %996 = vmatprep.subr.mxu0 0.0
        %997 = vmatpush1.msra.mxu0 %v962
        %998 = vmatprep.subr.mxu0 0.0
        %999 = vmatpush1.msra.mxu0 %v963
        %1000 = vmatprep.subr.mxu0 0.0
        %1001 = vmatpush1.msra.mxu0 %v964
        %1002 = vmatprep.subr.mxu0 0.0
        %1003 = vmatpush1.msra.mxu0 %v965
        %1004 = vmatprep.subr.mxu0 0.0
        %1005 = vmatpush1.msra.mxu0 %v966
        %1006 = vmatprep.subr.mxu0 0.0
        %1007 = vmatpush1.msra.mxu0 %v967
        %1008 = vmatprep.subr.mxu0 0.0
        %1009 = vmatpush1.msra.mxu0 %v968
        %1010 = vmatprep.subr.mxu0 0.0
        %1011 = vmatpush1.msra.mxu0 %v969
        %1012 = vmatprep.subr.mxu0 0.0
        %1013 = vmatpush1.msra.mxu0 %v970
        %1014 = vmatprep.subr.mxu0 0.0
        %1015 = vmatpush1.msra.mxu0 %v971
        %1016 = vmatprep.subr.mxu0 0.0
        %1017 = vmatpush1.msra.mxu0 %v972
        %1018 = vmatprep.subr.mxu0 0.0
        %1019 = vmatpush1.msra.mxu0 %v973
        %1020 = vmatprep.subr.mxu0 0.0
        %1021 = vmatpush1.msra.mxu0 %v974
        %1022 = vmatprep.subr.mxu0 0.0
        %1023 = vmatpush1.msra.mxu0 %v975
        %1024 = vmatprep.subr.mxu0 0.0
        %1025 = vmatpush1.msra.mxu0 %v976
        %1026 = vmatprep.subr.mxu0 0.0
        %1027 = vmatpush1.msra.mxu0 %v977
        %1028 = vmatprep.subr.mxu0 0.0
        %1029 = vmatpush1.msra.mxu0 %v978
        %1030 = vmatprep.subr.mxu0 0.0
        %1031 = vmatpush1.msra.mxu0 %v979
        %1032 = vmatprep.subr.mxu0 0.0
        %1033 = vmatpush1.msra.mxu0 %v980
        %1034 = vmatprep.subr.mxu0 0.0
        %1035 = vmatpush1.msra.mxu0 %v981
        %1036 = vmatprep.subr.mxu0 0.0
        %1037 = vmatpush1.msra.mxu0 %v982
        %1038 = vmatprep.subr.mxu0 0.0
        %1039 = vmatpush1.msra.mxu0 %v983
        %1040 = vmatprep.subr.mxu0 0.0
        %1041 = vmatpush1.msra.mxu0 %v984
        %1042 = vmatprep.subr.mxu0 0.0
        %1043 = vmatpush1.msra.mxu0 %v985
        %1044 = vmatprep.subr.mxu0 0.0
        %1045 = vmatpush1.msra.mxu0 %v986
        %1046 = vmatprep.subr.mxu0 0.0
        %1047 = vmatpush1.msra.mxu0 %v987
        %1048 = vmatprep.subr.mxu0 0.0
        %1049 = vmatpush1.msra.mxu0 %v988
        %1050 = vmatprep.subr.mxu0 0.0
        %1051 = vmatpush1.msra.mxu0 %v989
        %1052 = vmatprep.subr.mxu0 0.0
        %1053 = vmatpush1.msra.mxu0 %v990
        %1054 = vmatprep.subr.mxu0 0.0
        %1055 = vmatpush1.msra.mxu0 %v991
        %1056 = vmatprep.mubr.f32.mxu0 %v953
        %1057 = vmatmul.mubr.f32.gmra.mrb[0].mxu0 %v952
        %v1058 = vpop.f32.mrb[0].mxu0
        %v1059 = vadd.f32 0.0, %v1058
        %v1060 = vpop.f32.mrb[0].mxu0
        %1061 = vmatprep.mubr.f32.mxu0 %v955
        %1062 = vmatmul.mubr.f32.gmra.mrb[0].mxu0 %v954
        %v1063 = vpop.f32.mrb[0].mxu0
        %v1064 = vadd.f32 0.0, %v1063
        %v1065 = vpop.f32.mrb[0].mxu0
        %1066 = vmatprep.mubr.f32.mxu0 %v957
        %1067 = vmatmul.mubr.f32.gmra.mrb[0].mxu0 %v956
        %v1068 = vpop.f32.mrb[0].mxu0
        %v1069 = vadd.f32 0.0, %v1068
        %v1070 = vpop.f32.mrb[0].mxu0
        %1071 = vmatprep.mubr.f32.mxu0 %v959
        %1072 = vmatmul.mubr.f32.gmra.mrb[0].mxu0 %v958
        %v1073 = vpop.f32.mrb[0].mxu0
        %v1074 = vadd.f32 0.0, %v1073
        %v1075 = vpop.f32.mrb[0].mxu0
        %1076 = vdwg.mxu0
        %v1077 = vld [vmem:[#allocation9] sm:$0xff]
        %v1078 = vld [vmem:[#allocation9 + $0x8] sm:$0xff]
        %v1079 = vld [vmem:[#allocation9 + $0x10] sm:$0xff]
        %v1080 = vld [vmem:[#allocation9 + $0x18] sm:$0xff]
        %v1081 = vld [vmem:[%s9] sm:$0xff]
        %v1082 = vld [vmem:[%s9 + $0x8] sm:$0xff]
        %v1083 = vld [vmem:[%s9 + $0x10] sm:$0xff]
        %v1084 = vld [vmem:[%s9 + $0x18] sm:$0xff]
        %1086 = vset.pattern.permute.xlu0 0
        %1087 = vperm.xlu0 %1086, %v1081
        %v1088 = vpop.permute.xlu0 %1087
        %1091 = vset.pattern.permute.xlu0 0
        %1092 = vperm.xlu0 %1091, %v1082
        %v1093 = vpop.permute.xlu0 %1092
        %1096 = vset.pattern.permute.xlu0 0
        %1097 = vperm.xlu0 %1096, %v1083
        %v1098 = vpop.permute.xlu0 %1097
        %1101 = vset.pattern.permute.xlu0 0
        %1102 = vperm.xlu0 %1101, %v1084
        %v1103 = vpop.permute.xlu0 %1102
        %v1106 = vsel %vm826, %v1077, 0
        %v1109 = vsel %vm826, %v1078, 0
        %v1112 = vsel %vm826, %v1079, 0
        %v1115 = vsel %vm826, %v1080, 0
        %1117 = vmatprep.subr.mxu0 0.0
        %1118 = vmatpush1.msra.mxu0 %v1059
        %1119 = vmatprep.subr.mxu0 0.0
        %1120 = vmatpush1.msra.mxu0 %v1064
        %1121 = vmatprep.subr.mxu0 0.0
        %1122 = vmatpush1.msra.mxu0 %v1069
        %1123 = vmatprep.subr.mxu0 0.0
        %1124 = vmatpush1.msra.mxu0 %v1074
        %1125 = vmatprep.subr.mxu0 0.0
        %1126 = vmatpush1.msra.mxu0 0.0
        %1127 = vmatprep.subr.mxu0 0.0
        %1128 = vmatpush1.msra.mxu0 0.0
        %1129 = vmatprep.subr.mxu0 0.0
        %1130 = vmatpush1.msra.mxu0 0.0
        %1131 = vmatprep.subr.mxu0 0.0
        %1132 = vmatpush1.msra.mxu0 0.0
        %1133 = vmatprep.subr.mxu0 0.0
        %1134 = vmatpush1.msra.mxu0 0.0
        %1135 = vmatprep.subr.mxu0 0.0
        %1136 = vmatpush1.msra.mxu0 0.0
        %1137 = vmatprep.subr.mxu0 0.0
        %1138 = vmatpush1.msra.mxu0 0.0
        %1139 = vmatprep.subr.mxu0 0.0
        %1140 = vmatpush1.msra.mxu0 0.0
        %1141 = vmatprep.subr.mxu0 0.0
        %1142 = vmatpush1.msra.mxu0 0.0
        %1143 = vmatprep.subr.mxu0 0.0
        %1144 = vmatpush1.msra.mxu0 0.0
        %1145 = vmatprep.subr.mxu0 0.0
        %1146 = vmatpush1.msra.mxu0 0.0
        %1147 = vmatprep.subr.mxu0 0.0
        %1148 = vmatpush1.msra.mxu0 0.0
        %1149 = vmatprep.subr.mxu0 0.0
        %1150 = vmatpush1.msra.mxu0 0.0
        %1151 = vmatprep.subr.mxu0 0.0
        %1152 = vmatpush1.msra.mxu0 0.0
        %1153 = vmatprep.subr.mxu0 0.0
        %1154 = vmatpush1.msra.mxu0 0.0
        %1155 = vmatprep.subr.mxu0 0.0
        %1156 = vmatpush1.msra.mxu0 0.0
        %1157 = vmatprep.subr.mxu0 0.0
        %1158 = vmatpush1.msra.mxu0 0.0
        %1159 = vmatprep.subr.mxu0 0.0
        %1160 = vmatpush1.msra.mxu0 0.0
        %1161 = vmatprep.subr.mxu0 0.0
        %1162 = vmatpush1.msra.mxu0 0.0
        %1163 = vmatprep.subr.mxu0 0.0
        %1164 = vmatpush1.msra.mxu0 0.0
        %1165 = vmatprep.subr.mxu0 0.0
        %1166 = vmatpush1.msra.mxu0 0.0
        %1167 = vmatprep.subr.mxu0 0.0
        %1168 = vmatpush1.msra.mxu0 0.0
        %1169 = vmatprep.subr.mxu0 0.0
        %1170 = vmatpush1.msra.mxu0 0.0
        %1171 = vmatprep.subr.mxu0 0.0
        %1172 = vmatpush1.msra.mxu0 0.0
        %1173 = vmatprep.subr.mxu0 0.0
        %1174 = vmatpush1.msra.mxu0 0.0
        %1175 = vmatprep.subr.mxu0 0.0
        %1176 = vmatpush1.msra.mxu0 0.0
        %1177 = vmatprep.subr.mxu0 0.0
        %1178 = vmatpush1.msra.mxu0 0.0
        %1179 = vmatprep.subr.mxu0 0.0
        %1180 = vmatpush1.msra.mxu0 0.0
        %1181 = vmatprep.mubr.f32.mxu0 0.0
        %1182 = vmatmul.mubr.f32.gmra.mrb[0].mxu0 %v1106
        %v1183 = vpop.f32.mrb[0].mxu0
        %v1184 = vadd.f32 %v1088, %v1183
        %v1185 = vpop.f32.mrb[0].mxu0
        %1186 = vmatprep.mubr.f32.mxu0 0.0
        %1187 = vmatmul.mubr.f32.gmra.mrb[0].mxu0 %v1109
        %v1188 = vpop.f32.mrb[0].mxu0
        %v1189 = vadd.f32 %v1093, %v1188
        %v1190 = vpop.f32.mrb[0].mxu0
        %1191 = vmatprep.mubr.f32.mxu0 0.0
        %1192 = vmatmul.mubr.f32.gmra.mrb[0].mxu0 %v1112
        %v1193 = vpop.f32.mrb[0].mxu0
        %v1194 = vadd.f32 %v1098, %v1193
        %v1195 = vpop.f32.mrb[0].mxu0
        %1196 = vmatprep.mubr.f32.mxu0 0.0
        %1197 = vmatmul.mubr.f32.gmra.mrb[0].mxu0 %v1115
        %v1198 = vpop.f32.mrb[0].mxu0
        %v1199 = vadd.f32 %v1103, %v1198
        %v1200 = vpop.f32.mrb[0].mxu0
        %1201 = vdwg.mxu0
        %vm1202 = vcmp.ge.f32.partialorder %v1184, 0.0
        %vm1203 = vcmp.ge.f32.partialorder %v1189, 0.0
        %vm1204 = vcmp.ge.f32.partialorder %v1194, 0.0
        %vm1205 = vcmp.ge.f32.partialorder %v1199, 0.0
        %v1206 = vmul.f32 %v1184, 0.2
        %v1207 = vmul.f32 %v1189, 0.2
        %v1208 = vmul.f32 %v1194, 0.2
        %v1209 = vmul.f32 %v1199, 0.2
        %v1210 = vsel %vm1202, %v1184, %v1206
        %v1211 = vsel %vm1203, %v1189, %v1207
        %v1212 = vsel %vm1204, %v1194, %v1208
        %v1213 = vsel %vm1205, %v1199, %v1209
        %v1214 = vld [vmem:[#allocation11] sm:$0xff]
        %v1216 = vsel %vm826, %v1214, 0
        %1218 = vmatprep.subr.mxu0 0.0
        %1219 = vmatpush1.msra.mxu0 %v1210
        %1220 = vmatprep.subr.mxu0 0.0
        %1221 = vmatpush1.msra.mxu0 %v1211
        %1222 = vmatprep.subr.mxu0 0.0
        %1223 = vmatpush1.msra.mxu0 %v1212
        %1224 = vmatprep.subr.mxu0 0.0
        %1225 = vmatpush1.msra.mxu0 %v1213
        %1226 = vmatprep.subr.mxu0 0.0
        %1227 = vmatpush1.msra.mxu0 0.0
        %1228 = vmatprep.subr.mxu0 0.0
        %1229 = vmatpush1.msra.mxu0 0.0
        %1230 = vmatprep.subr.mxu0 0.0
        %1231 = vmatpush1.msra.mxu0 0.0
        %1232 = vmatprep.subr.mxu0 0.0
        %1233 = vmatpush1.msra.mxu0 0.0
        %1234 = vmatprep.subr.mxu0 0.0
        %1235 = vmatpush1.msra.mxu0 0.0
        %1236 = vmatprep.subr.mxu0 0.0
        %1237 = vmatpush1.msra.mxu0 0.0
        %1238 = vmatprep.subr.mxu0 0.0
        %1239 = vmatpush1.msra.mxu0 0.0
        %1240 = vmatprep.subr.mxu0 0.0
        %1241 = vmatpush1.msra.mxu0 0.0
        %1242 = vmatprep.subr.mxu0 0.0
        %1243 = vmatpush1.msra.mxu0 0.0
        %1244 = vmatprep.subr.mxu0 0.0
        %1245 = vmatpush1.msra.mxu0 0.0
        %1246 = vmatprep.subr.mxu0 0.0
        %1247 = vmatpush1.msra.mxu0 0.0
        %1248 = vmatprep.subr.mxu0 0.0
        %1249 = vmatpush1.msra.mxu0 0.0
        %1250 = vmatprep.subr.mxu0 0.0
        %1251 = vmatpush1.msra.mxu0 0.0
        %1252 = vmatprep.subr.mxu0 0.0
        %1253 = vmatpush1.msra.mxu0 0.0
        %1254 = vmatprep.subr.mxu0 0.0
        %1255 = vmatpush1.msra.mxu0 0.0
        %1256 = vmatprep.subr.mxu0 0.0
        %1257 = vmatpush1.msra.mxu0 0.0
        %1258 = vmatprep.subr.mxu0 0.0
        %1259 = vmatpush1.msra.mxu0 0.0
        %1260 = vmatprep.subr.mxu0 0.0
        %1261 = vmatpush1.msra.mxu0 0.0
        %1262 = vmatprep.subr.mxu0 0.0
        %1263 = vmatpush1.msra.mxu0 0.0
        %1264 = vmatprep.subr.mxu0 0.0
        %1265 = vmatpush1.msra.mxu0 0.0
        %1266 = vmatprep.subr.mxu0 0.0
        %1267 = vmatpush1.msra.mxu0 0.0
        %1268 = vmatprep.subr.mxu0 0.0
        %1269 = vmatpush1.msra.mxu0 0.0
        %1270 = vmatprep.subr.mxu0 0.0
        %1271 = vmatpush1.msra.mxu0 0.0
        %1272 = vmatprep.subr.mxu0 0.0
        %1273 = vmatpush1.msra.mxu0 0.0
        %1274 = vmatprep.subr.mxu0 0.0
        %1275 = vmatpush1.msra.mxu0 0.0
        %1276 = vmatprep.subr.mxu0 0.0
        %1277 = vmatpush1.msra.mxu0 0.0
        %1278 = vmatprep.subr.mxu0 0.0
        %1279 = vmatpush1.msra.mxu0 0.0
        %1280 = vmatprep.subr.mxu0 0.0
        %1281 = vmatpush1.msra.mxu0 0.0
        %1282 = vmatprep.mubr.f32.mxu0 0.0
        %1283 = vmatmul.mubr.f32.gmra.mrb[0].mxu0 %v1216
        %v1284 = vpop.f32.mrb[0].mxu0
        %v1285 = vadd.f32 0.0, %v1284
        %v1286 = vpop.f32.mrb[0].mxu0
        %1287 = vdwg.mxu0
        %v1288 = vld [vmem:[#allocation3] sm:$0xff]
        %v1289 = vld [vmem:[#allocation3 + $0x8] sm:$0xff]
        %v1290 = vld [vmem:[#allocation3 + $0x10] sm:$0xff]
        %v1291 = vld [vmem:[#allocation3 + $0x18] sm:$0xff]
        %v1292 = vld [vmem:[#allocation3 + $0x20] sm:$0xff]
        %v1293 = vld [vmem:[#allocation3 + $0x28] sm:$0xff]
        %v1294 = vld [vmem:[#allocation3 + $0x30] sm:$0xff]
        %v1295 = vld [vmem:[#allocation3 + $0x38] sm:$0xff]
        %v1297 = vsel %vm826, %v1285, 0
        %1299 = vmatprep.subr.mxu0 %v1289
        %1300 = vmatpush1.msra.mxu0 %v1288
        %1301 = vmatprep.subr.mxu0 %v1291
        %1302 = vmatpush1.msra.mxu0 %v1290
        %1303 = vmatprep.subr.mxu0 %v1293
        %1304 = vmatpush1.msra.mxu0 %v1292
        %1305 = vmatprep.subr.mxu0 %v1295
        %1306 = vmatpush1.msra.mxu0 %v1294
        %1307 = vmatprep.subr.mxu0 0.0
        %1308 = vmatpush1.msra.mxu0 0.0
        %1309 = vmatprep.subr.mxu0 0.0
        %1310 = vmatpush1.msra.mxu0 0.0
        %1311 = vmatprep.subr.mxu0 0.0
        %1312 = vmatpush1.msra.mxu0 0.0
        %1313 = vmatprep.subr.mxu0 0.0
        %1314 = vmatpush1.msra.mxu0 0.0
        %1315 = vmatprep.subr.mxu0 0.0
        %1316 = vmatpush1.msra.mxu0 0.0
        %1317 = vmatprep.subr.mxu0 0.0
        %1318 = vmatpush1.msra.mxu0 0.0
        %1319 = vmatprep.subr.mxu0 0.0
        %1320 = vmatpush1.msra.mxu0 0.0
        %1321 = vmatprep.subr.mxu0 0.0
        %1322 = vmatpush1.msra.mxu0 0.0
        %1323 = vmatprep.subr.mxu0 0.0
        %1324 = vmatpush1.msra.mxu0 0.0
        %1325 = vmatprep.subr.mxu0 0.0
        %1326 = vmatpush1.msra.mxu0 0.0
        %1327 = vmatprep.subr.mxu0 0.0
        %1328 = vmatpush1.msra.mxu0 0.0
        %1329 = vmatprep.subr.mxu0 0.0
        %1330 = vmatpush1.msra.mxu0 0.0
        %1331 = vmatprep.subr.mxu0 0.0
        %1332 = vmatpush1.msra.mxu0 0.0
        %1333 = vmatprep.subr.mxu0 0.0
        %1334 = vmatpush1.msra.mxu0 0.0
        %1335 = vmatprep.subr.mxu0 0.0
        %1336 = vmatpush1.msra.mxu0 0.0
        %1337 = vmatprep.subr.mxu0 0.0
        %1338 = vmatpush1.msra.mxu0 0.0
        %1339 = vmatprep.subr.mxu0 0.0
        %1340 = vmatpush1.msra.mxu0 0.0
        %1341 = vmatprep.subr.mxu0 0.0
        %1342 = vmatpush1.msra.mxu0 0.0
        %1343 = vmatprep.subr.mxu0 0.0
        %1344 = vmatpush1.msra.mxu0 0.0
        %1345 = vmatprep.subr.mxu0 0.0
        %1346 = vmatpush1.msra.mxu0 0.0
        %1347 = vmatprep.subr.mxu0 0.0
        %1348 = vmatpush1.msra.mxu0 0.0
        %1349 = vmatprep.subr.mxu0 0.0
        %1350 = vmatpush1.msra.mxu0 0.0
        %1351 = vmatprep.subr.mxu0 0.0
        %1352 = vmatpush1.msra.mxu0 0.0
        %1353 = vmatprep.subr.mxu0 0.0
        %1354 = vmatpush1.msra.mxu0 0.0
        %1355 = vmatprep.subr.mxu0 0.0
        %1356 = vmatpush1.msra.mxu0 0.0
        %1357 = vmatprep.subr.mxu0 0.0
        %1358 = vmatpush1.msra.mxu0 0.0
        %1359 = vmatprep.subr.mxu0 0.0
        %1360 = vmatpush1.msra.mxu0 0.0
        %1361 = vmatprep.subr.mxu0 0.0
        %1362 = vmatpush1.msra.mxu0 0.0
        %1363 = vmatprep.mubr.f32.mxu0 0.0
        %1364 = vmatmul.mubr.f32.gmra.mrb[0].mxu0 %v1297
        %v1365 = vpop.f32.mrb[0].mxu0
        %v1366 = vadd.f32 0.0, %v1365
        %v1367 = vpop.f32.mrb[0].mxu0
        %v1368 = vadd.f32 0.0, %v1367
        %1369 = vdwg.mxu0
        %v1370 = vld [vmem:[#allocation12] sm:$0xff]
        %v1372 = vsel %vm826, %v1370, 0
        %1374 = vmatprep.subr.mxu0 %v953
        %1375 = vmatpush1.msra.mxu0 %v952
        %1376 = vmatprep.subr.mxu0 %v955
        %1377 = vmatpush1.msra.mxu0 %v954
        %1378 = vmatprep.subr.mxu0 %v957
        %1379 = vmatpush1.msra.mxu0 %v956
        %1380 = vmatprep.subr.mxu0 %v959
        %1381 = vmatpush1.msra.mxu0 %v958
        %1382 = vmatprep.subr.mxu0 0.0
        %1383 = vmatpush1.msra.mxu0 0.0
        %1384 = vmatprep.subr.mxu0 0.0
        %1385 = vmatpush1.msra.mxu0 0.0
        %1386 = vmatprep.subr.mxu0 0.0
        %1387 = vmatpush1.msra.mxu0 0.0
        %1388 = vmatprep.subr.mxu0 0.0
        %1389 = vmatpush1.msra.mxu0 0.0
        %1390 = vmatprep.subr.mxu0 0.0
        %1391 = vmatpush1.msra.mxu0 0.0
        %1392 = vmatprep.subr.mxu0 0.0
        %1393 = vmatpush1.msra.mxu0 0.0
        %1394 = vmatprep.subr.mxu0 0.0
        %1395 = vmatpush1.msra.mxu0 0.0
        %1396 = vmatprep.subr.mxu0 0.0
        %1397 = vmatpush1.msra.mxu0 0.0
        %1398 = vmatprep.subr.mxu0 0.0
        %1399 = vmatpush1.msra.mxu0 0.0
        %1400 = vmatprep.subr.mxu0 0.0
        %1401 = vmatpush1.msra.mxu0 0.0
        %1402 = vmatprep.subr.mxu0 0.0
        %1403 = vmatpush1.msra.mxu0 0.0
        %1404 = vmatprep.subr.mxu0 0.0
        %1405 = vmatpush1.msra.mxu0 0.0
        %1406 = vmatprep.subr.mxu0 0.0
        %1407 = vmatpush1.msra.mxu0 0.0
        %1408 = vmatprep.subr.mxu0 0.0
        %1409 = vmatpush1.msra.mxu0 0.0
        %1410 = vmatprep.subr.mxu0 0.0
        %1411 = vmatpush1.msra.mxu0 0.0
        %1412 = vmatprep.subr.mxu0 0.0
        %1413 = vmatpush1.msra.mxu0 0.0
        %1414 = vmatprep.subr.mxu0 0.0
        %1415 = vmatpush1.msra.mxu0 0.0
        %1416 = vmatprep.subr.mxu0 0.0
        %1417 = vmatpush1.msra.mxu0 0.0
        %1418 = vmatprep.subr.mxu0 0.0
        %1419 = vmatpush1.msra.mxu0 0.0
        %1420 = vmatprep.subr.mxu0 0.0
        %1421 = vmatpush1.msra.mxu0 0.0
        %1422 = vmatprep.subr.mxu0 0.0
        %1423 = vmatpush1.msra.mxu0 0.0
        %1424 = vmatprep.subr.mxu0 0.0
        %1425 = vmatpush1.msra.mxu0 0.0
        %1426 = vmatprep.subr.mxu0 0.0
        %1427 = vmatpush1.msra.mxu0 0.0
        %1428 = vmatprep.subr.mxu0 0.0
        %1429 = vmatpush1.msra.mxu0 0.0
        %1430 = vmatprep.subr.mxu0 0.0
        %1431 = vmatpush1.msra.mxu0 0.0
        %1432 = vmatprep.subr.mxu0 0.0
        %1433 = vmatpush1.msra.mxu0 0.0
        %1434 = vmatprep.subr.mxu0 0.0
        %1435 = vmatpush1.msra.mxu0 0.0
        %1436 = vmatprep.subr.mxu0 0.0
        %1437 = vmatpush1.msra.mxu0 0.0
        %1438 = vmatprep.mubr.f32.mxu0 0.0
        %1439 = vmatmul.mubr.f32.gmra.mrb[0].mxu0 %v1372
        %v1440 = vpop.f32.mrb[0].mxu0
        %v1441 = vadd.f32 %v1366, %v1440
        %v1442 = vpop.f32.mrb[0].mxu0
        %v1443 = vadd.f32 %v1368, %v1442
        %1444 = vdwg.mxu0
        %v1445 = vld [vmem:[%s12] sm:$0xff]
        %1447 = vset.pattern.permute.xlu0 0
        %1448 = vperm.xlu0 %1447, %v1445
        %v1449 = vpop.permute.xlu0 %1448
        %v1451 = vadd.f32 %v1441, %v1449
        %v1452 = vadd.f32 %v1443, %v1449
        %v1453 = vxor.u32 %v1451, 2147483648
        %v1454 = vxor.u32 %v1452, 2147483648
        %v1455 = vmul.f32 %v1453, 1.442695
        %v1456 = vpow.pop %v1455
        %v1457 = vmul.f32 %v1454, 1.442695
        %v1458 = vpow.pop %v1457
        %v1459 = vadd.f32 %v1456, 1.0
        %v1460 = vadd.f32 %v1458, 1.0
        %v1461 = vrcp.pop %v1459
        %v1462 = vmul.f32 1.0, %v1461
        %v1463 = vrcp.pop %v1460
        %v1464 = vmul.f32 1.0, %v1463
        %v1465 = vld [vmem:[%s4] sm:$0xff]
        %v1466 = vld [vmem:[%s4 + $0x8] sm:$0xff]
        %v1467 = vld [vmem:[%s4 + $0x10] sm:$0xff]
        %v1468 = vld [vmem:[%s4 + $0x18] sm:$0xff]
        %v1469 = vld [vmem:[%s4 + $0x20] sm:$0xff]
        %v1470 = vld [vmem:[%s4 + $0x28] sm:$0xff]
        %v1471 = vld [vmem:[%s4 + $0x30] sm:$0xff]
        %v1472 = vld [vmem:[%s4 + $0x38] sm:$0xff]
        %v1473 = vld [vmem:[%s4 + $0x40] sm:$0xff]
        %v1474 = vld [vmem:[%s4 + $0x48] sm:$0xff]
        %v1475 = vld [vmem:[%s4 + $0x50] sm:$0xff]
        %v1476 = vld [vmem:[%s4 + $0x58] sm:$0xff]
        %v1477 = vld [vmem:[%s4 + $0x60] sm:$0xff]
        %v1478 = vld [vmem:[%s4 + $0x68] sm:$0xff]
        %v1479 = vld [vmem:[%s4 + $0x70] sm:$0xff]
        %v1480 = vld [vmem:[%s4 + $0x78] sm:$0xff]
        %v1481 = vld [vmem:[%s4 + $0x80] sm:$0xff]
        %v1482 = vld [vmem:[%s4 + $0x88] sm:$0xff]
        %v1483 = vld [vmem:[%s4 + $0x90] sm:$0xff]
        %v1484 = vld [vmem:[%s4 + $0x98] sm:$0xff]
        %v1485 = vld [vmem:[%s4 + $0xa0] sm:$0xff]
        %v1486 = vld [vmem:[%s4 + $0xa8] sm:$0xff]
        %v1487 = vld [vmem:[%s4 + $0xb0] sm:$0xff]
        %v1488 = vld [vmem:[%s4 + $0xb8] sm:$0xff]
        %v1489 = vld [vmem:[%s4 + $0xc0] sm:$0xff]
        %v1490 = vld [vmem:[%s4 + $0xc8] sm:$0xff]
        %v1491 = vld [vmem:[%s4 + $0xd0] sm:$0xff]
        %v1492 = vld [vmem:[%s4 + $0xd8] sm:$0xff]
        %v1493 = vld [vmem:[%s4 + $0xe0] sm:$0xff]
        %v1494 = vld [vmem:[%s4 + $0xe8] sm:$0xff]
        %v1495 = vld [vmem:[%s4 + $0xf0] sm:$0xff]
        %v1496 = vld [vmem:[%s4 + $0xf8] sm:$0xff]
        %vm1497 = vcmask 64512
        %v1499 = vsel %vm1497, %v1465, 0
        %v1502 = vsel %vm1497, %v1466, 0
        %v1505 = vsel %vm1497, %v1467, 0
        %v1508 = vsel %vm1497, %v1468, 0
        %v1511 = vsel %vm1497, %v1469, 0
        %v1514 = vsel %vm1497, %v1470, 0
        %v1517 = vsel %vm1497, %v1471, 0
        %v1520 = vsel %vm1497, %v1472, 0
        %v1523 = vsel %vm1497, %v1473, 0
        %v1526 = vsel %vm1497, %v1474, 0
        %v1529 = vsel %vm1497, %v1475, 0
        %v1532 = vsel %vm1497, %v1476, 0
        %v1535 = vsel %vm1497, %v1477, 0
        %v1538 = vsel %vm1497, %v1478, 0
        %v1541 = vsel %vm1497, %v1479, 0
        %v1544 = vsel %vm1497, %v1480, 0
        %v1547 = vsel %vm1497, %v1481, 0
        %v1550 = vsel %vm1497, %v1482, 0
        %v1553 = vsel %vm1497, %v1483, 0
        %v1556 = vsel %vm1497, %v1484, 0
        %v1559 = vsel %vm1497, %v1485, 0
        %v1562 = vsel %vm1497, %v1486, 0
        %v1565 = vsel %vm1497, %v1487, 0
        %v1568 = vsel %vm1497, %v1488, 0
        %v1571 = vsel %vm1497, %v1489, 0
        %v1574 = vsel %vm1497, %v1490, 0
        %v1577 = vsel %vm1497, %v1491, 0
        %v1580 = vsel %vm1497, %v1492, 0
        %v1583 = vsel %vm1497, %v1493, 0
        %v1586 = vsel %vm1497, %v1494, 0
        %v1589 = vsel %vm1497, %v1495, 0
        %v1592 = vsel %vm1497, %v1496, 0
        %1594 = vmatprep.subr.mxu0 %v1464
        %1595 = vmatpush1.msra.mxu0 %v1462
        %1596 = vmatprep.subr.mxu0 0.0
        %1597 = vmatpush1.msra.mxu0 0.0
        %1598 = vmatprep.subr.mxu0 0.0
        %1599 = vmatpush1.msra.mxu0 0.0
        %1600 = vmatprep.subr.mxu0 0.0
        %1601 = vmatpush1.msra.mxu0 0.0
        %1602 = vmatprep.subr.mxu0 0.0
        %1603 = vmatpush1.msra.mxu0 0.0
        %1604 = vmatprep.subr.mxu0 0.0
        %1605 = vmatpush1.msra.mxu0 0.0
        %1606 = vmatprep.subr.mxu0 0.0
        %1607 = vmatpush1.msra.mxu0 0.0
        %1608 = vmatprep.subr.mxu0 0.0
        %1609 = vmatpush1.msra.mxu0 0.0
        %1610 = vmatprep.subr.mxu0 0.0
        %1611 = vmatpush1.msra.mxu0 0.0
        %1612 = vmatprep.subr.mxu0 0.0
        %1613 = vmatpush1.msra.mxu0 0.0
        %1614 = vmatprep.subr.mxu0 0.0
        %1615 = vmatpush1.msra.mxu0 0.0
        %1616 = vmatprep.subr.mxu0 0.0
        %1617 = vmatpush1.msra.mxu0 0.0
        %1618 = vmatprep.subr.mxu0 0.0
        %1619 = vmatpush1.msra.mxu0 0.0
        %1620 = vmatprep.subr.mxu0 0.0
        %1621 = vmatpush1.msra.mxu0 0.0
        %1622 = vmatprep.subr.mxu0 0.0
        %1623 = vmatpush1.msra.mxu0 0.0
        %1624 = vmatprep.subr.mxu0 0.0
        %1625 = vmatpush1.msra.mxu0 0.0
        %1626 = vmatprep.subr.mxu0 0.0
        %1627 = vmatpush1.msra.mxu0 0.0
        %1628 = vmatprep.subr.mxu0 0.0
        %1629 = vmatpush1.msra.mxu0 0.0
        %1630 = vmatprep.subr.mxu0 0.0
        %1631 = vmatpush1.msra.mxu0 0.0
        %1632 = vmatprep.subr.mxu0 0.0
        %1633 = vmatpush1.msra.mxu0 0.0
        %1634 = vmatprep.subr.mxu0 0.0
        %1635 = vmatpush1.msra.mxu0 0.0
        %1636 = vmatprep.subr.mxu0 0.0
        %1637 = vmatpush1.msra.mxu0 0.0
        %1638 = vmatprep.subr.mxu0 0.0
        %1639 = vmatpush1.msra.mxu0 0.0
        %1640 = vmatprep.subr.mxu0 0.0
        %1641 = vmatpush1.msra.mxu0 0.0
        %1642 = vmatprep.subr.mxu0 0.0
        %1643 = vmatpush1.msra.mxu0 0.0
        %1644 = vmatprep.subr.mxu0 0.0
        %1645 = vmatpush1.msra.mxu0 0.0
        %1646 = vmatprep.subr.mxu0 0.0
        %1647 = vmatpush1.msra.mxu0 0.0
        %1648 = vmatprep.subr.mxu0 0.0
        %1649 = vmatpush1.msra.mxu0 0.0
        %1650 = vmatprep.subr.mxu0 0.0
        %1651 = vmatpush1.msra.mxu0 0.0
        %1652 = vmatprep.subr.mxu0 0.0
        %1653 = vmatpush1.msra.mxu0 0.0
        %1654 = vmatprep.subr.mxu0 0.0
        %1655 = vmatpush1.msra.mxu0 0.0
        %1656 = vmatprep.subr.mxu0 0.0
        %1657 = vmatpush1.msra.mxu0 0.0
        %1658 = vmatprep.mubr.f32.mxu0 0.0
        %1659 = vmatmul.mubr.f32.gmra.mrb[0].mxu0 %v1499
        %v1660 = vpop.f32.mrb[0].mxu0
        %v1661 = vadd.f32 0.0, %v1660
        %v1662 = vpop.f32.mrb[0].mxu0
        %v1663 = vadd.f32 0.0, %v1662
        %1664 = vmatprep.mubr.f32.mxu0 0.0
        %1665 = vmatmul.mubr.f32.gmra.mrb[0].mxu0 %v1502
        %v1666 = vpop.f32.mrb[0].mxu0
        %v1667 = vadd.f32 0.0, %v1666
        %v1668 = vpop.f32.mrb[0].mxu0
        %v1669 = vadd.f32 0.0, %v1668
        %1670 = vmatprep.mubr.f32.mxu0 0.0
        %1671 = vmatmul.mubr.f32.gmra.mrb[0].mxu0 %v1505
        %v1672 = vpop.f32.mrb[0].mxu0
        %v1673 = vadd.f32 0.0, %v1672
        %v1674 = vpop.f32.mrb[0].mxu0
        %v1675 = vadd.f32 0.0, %v1674
        %1676 = vmatprep.mubr.f32.mxu0 0.0
        %1677 = vmatmul.mubr.f32.gmra.mrb[0].mxu0 %v1508
        %v1678 = vpop.f32.mrb[0].mxu0
        %v1679 = vadd.f32 0.0, %v1678
        %v1680 = vpop.f32.mrb[0].mxu0
        %v1681 = vadd.f32 0.0, %v1680
        %1682 = vmatprep.mubr.f32.mxu0 0.0
        %1683 = vmatmul.mubr.f32.gmra.mrb[0].mxu0 %v1511
        %v1684 = vpop.f32.mrb[0].mxu0
        %v1685 = vadd.f32 0.0, %v1684
        %v1686 = vpop.f32.mrb[0].mxu0
        %v1687 = vadd.f32 0.0, %v1686
        %1688 = vmatprep.mubr.f32.mxu0 0.0
        %1689 = vmatmul.mubr.f32.gmra.mrb[0].mxu0 %v1514
        %v1690 = vpop.f32.mrb[0].mxu0
        %v1691 = vadd.f32 0.0, %v1690
        %v1692 = vpop.f32.mrb[0].mxu0
        %v1693 = vadd.f32 0.0, %v1692
        %1694 = vmatprep.mubr.f32.mxu0 0.0
        %1695 = vmatmul.mubr.f32.gmra.mrb[0].mxu0 %v1517
        %v1696 = vpop.f32.mrb[0].mxu0
        %v1697 = vadd.f32 0.0, %v1696
        %v1698 = vpop.f32.mrb[0].mxu0
        %v1699 = vadd.f32 0.0, %v1698
        %1700 = vmatprep.mubr.f32.mxu0 0.0
        %1701 = vmatmul.mubr.f32.gmra.mrb[0].mxu0 %v1520
        %v1702 = vpop.f32.mrb[0].mxu0
        %v1703 = vadd.f32 0.0, %v1702
        %v1704 = vpop.f32.mrb[0].mxu0
        %v1705 = vadd.f32 0.0, %v1704
        %1706 = vmatprep.mubr.f32.mxu0 0.0
        %1707 = vmatmul.mubr.f32.gmra.mrb[0].mxu0 %v1523
        %v1708 = vpop.f32.mrb[0].mxu0
        %v1709 = vadd.f32 0.0, %v1708
        %v1710 = vpop.f32.mrb[0].mxu0
        %v1711 = vadd.f32 0.0, %v1710
        %1712 = vmatprep.mubr.f32.mxu0 0.0
        %1713 = vmatmul.mubr.f32.gmra.mrb[0].mxu0 %v1526
        %v1714 = vpop.f32.mrb[0].mxu0
        %v1715 = vadd.f32 0.0, %v1714
        %v1716 = vpop.f32.mrb[0].mxu0
        %v1717 = vadd.f32 0.0, %v1716
        %1718 = vmatprep.mubr.f32.mxu0 0.0
        %1719 = vmatmul.mubr.f32.gmra.mrb[0].mxu0 %v1529
        %v1720 = vpop.f32.mrb[0].mxu0
        %v1721 = vadd.f32 0.0, %v1720
        %v1722 = vpop.f32.mrb[0].mxu0
        %v1723 = vadd.f32 0.0, %v1722
        %1724 = vmatprep.mubr.f32.mxu0 0.0
        %1725 = vmatmul.mubr.f32.gmra.mrb[0].mxu0 %v1532
        %v1726 = vpop.f32.mrb[0].mxu0
        %v1727 = vadd.f32 0.0, %v1726
        %v1728 = vpop.f32.mrb[0].mxu0
        %v1729 = vadd.f32 0.0, %v1728
        %1730 = vmatprep.mubr.f32.mxu0 0.0
        %1731 = vmatmul.mubr.f32.gmra.mrb[0].mxu0 %v1535
        %v1732 = vpop.f32.mrb[0].mxu0
        %v1733 = vadd.f32 0.0, %v1732
        %v1734 = vpop.f32.mrb[0].mxu0
        %v1735 = vadd.f32 0.0, %v1734
        %1736 = vmatprep.mubr.f32.mxu0 0.0
        %1737 = vmatmul.mubr.f32.gmra.mrb[0].mxu0 %v1538
        %v1738 = vpop.f32.mrb[0].mxu0
        %v1739 = vadd.f32 0.0, %v1738
        %v1740 = vpop.f32.mrb[0].mxu0
        %v1741 = vadd.f32 0.0, %v1740
        %1742 = vmatprep.mubr.f32.mxu0 0.0
        %1743 = vmatmul.mubr.f32.gmra.mrb[0].mxu0 %v1541
        %v1744 = vpop.f32.mrb[0].mxu0
        %v1745 = vadd.f32 0.0, %v1744
        %v1746 = vpop.f32.mrb[0].mxu0
        %v1747 = vadd.f32 0.0, %v1746
        %1748 = vmatprep.mubr.f32.mxu0 0.0
        %1749 = vmatmul.mubr.f32.gmra.mrb[0].mxu0 %v1544
        %v1750 = vpop.f32.mrb[0].mxu0
        %v1751 = vadd.f32 0.0, %v1750
        %v1752 = vpop.f32.mrb[0].mxu0
        %v1753 = vadd.f32 0.0, %v1752
        %1754 = vmatprep.mubr.f32.mxu0 0.0
        %1755 = vmatmul.mubr.f32.gmra.mrb[0].mxu0 %v1547
        %v1756 = vpop.f32.mrb[0].mxu0
        %v1757 = vadd.f32 0.0, %v1756
        %v1758 = vpop.f32.mrb[0].mxu0
        %v1759 = vadd.f32 0.0, %v1758
        %1760 = vmatprep.mubr.f32.mxu0 0.0
        %1761 = vmatmul.mubr.f32.gmra.mrb[0].mxu0 %v1550
        %v1762 = vpop.f32.mrb[0].mxu0
        %v1763 = vadd.f32 0.0, %v1762
        %v1764 = vpop.f32.mrb[0].mxu0
        %v1765 = vadd.f32 0.0, %v1764
        %1766 = vmatprep.mubr.f32.mxu0 0.0
        %1767 = vmatmul.mubr.f32.gmra.mrb[0].mxu0 %v1553
        %v1768 = vpop.f32.mrb[0].mxu0
        %v1769 = vadd.f32 0.0, %v1768
        %v1770 = vpop.f32.mrb[0].mxu0
        %v1771 = vadd.f32 0.0, %v1770
        %1772 = vmatprep.mubr.f32.mxu0 0.0
        %1773 = vmatmul.mubr.f32.gmra.mrb[0].mxu0 %v1556
        %v1774 = vpop.f32.mrb[0].mxu0
        %v1775 = vadd.f32 0.0, %v1774
        %v1776 = vpop.f32.mrb[0].mxu0
        %v1777 = vadd.f32 0.0, %v1776
        %1778 = vmatprep.mubr.f32.mxu0 0.0
        %1779 = vmatmul.mubr.f32.gmra.mrb[0].mxu0 %v1559
        %v1780 = vpop.f32.mrb[0].mxu0
        %v1781 = vadd.f32 0.0, %v1780
        %v1782 = vpop.f32.mrb[0].mxu0
        %v1783 = vadd.f32 0.0, %v1782
        %1784 = vmatprep.mubr.f32.mxu0 0.0
        %1785 = vmatmul.mubr.f32.gmra.mrb[0].mxu0 %v1562
        %v1786 = vpop.f32.mrb[0].mxu0
        %v1787 = vadd.f32 0.0, %v1786
        %v1788 = vpop.f32.mrb[0].mxu0
        %v1789 = vadd.f32 0.0, %v1788
        %1790 = vmatprep.mubr.f32.mxu0 0.0
        %1791 = vmatmul.mubr.f32.gmra.mrb[0].mxu0 %v1565
        %v1792 = vpop.f32.mrb[0].mxu0
        %v1793 = vadd.f32 0.0, %v1792
        %v1794 = vpop.f32.mrb[0].mxu0
        %v1795 = vadd.f32 0.0, %v1794
        %1796 = vmatprep.mubr.f32.mxu0 0.0
        %1797 = vmatmul.mubr.f32.gmra.mrb[0].mxu0 %v1568
        %v1798 = vpop.f32.mrb[0].mxu0
        %v1799 = vadd.f32 0.0, %v1798
        %v1800 = vpop.f32.mrb[0].mxu0
        %v1801 = vadd.f32 0.0, %v1800
        %1802 = vmatprep.mubr.f32.mxu0 0.0
        %1803 = vmatmul.mubr.f32.gmra.mrb[0].mxu0 %v1571
        %v1804 = vpop.f32.mrb[0].mxu0
        %v1805 = vadd.f32 0.0, %v1804
        %v1806 = vpop.f32.mrb[0].mxu0
        %v1807 = vadd.f32 0.0, %v1806
        %1808 = vmatprep.mubr.f32.mxu0 0.0
        %1809 = vmatmul.mubr.f32.gmra.mrb[0].mxu0 %v1574
        %v1810 = vpop.f32.mrb[0].mxu0
        %v1811 = vadd.f32 0.0, %v1810
        %v1812 = vpop.f32.mrb[0].mxu0
        %v1813 = vadd.f32 0.0, %v1812
        %1814 = vmatprep.mubr.f32.mxu0 0.0
        %1815 = vmatmul.mubr.f32.gmra.mrb[0].mxu0 %v1577
        %v1816 = vpop.f32.mrb[0].mxu0
        %v1817 = vadd.f32 0.0, %v1816
        %v1818 = vpop.f32.mrb[0].mxu0
        %v1819 = vadd.f32 0.0, %v1818
        %1820 = vmatprep.mubr.f32.mxu0 0.0
        %1821 = vmatmul.mubr.f32.gmra.mrb[0].mxu0 %v1580
        %v1822 = vpop.f32.mrb[0].mxu0
        %v1823 = vadd.f32 0.0, %v1822
        %v1824 = vpop.f32.mrb[0].mxu0
        %v1825 = vadd.f32 0.0, %v1824
        %1826 = vmatprep.mubr.f32.mxu0 0.0
        %1827 = vmatmul.mubr.f32.gmra.mrb[0].mxu0 %v1583
        %v1828 = vpop.f32.mrb[0].mxu0
        %v1829 = vadd.f32 0.0, %v1828
        %v1830 = vpop.f32.mrb[0].mxu0
        %v1831 = vadd.f32 0.0, %v1830
        %1832 = vmatprep.mubr.f32.mxu0 0.0
        %1833 = vmatmul.mubr.f32.gmra.mrb[0].mxu0 %v1586
        %v1834 = vpop.f32.mrb[0].mxu0
        %v1835 = vadd.f32 0.0, %v1834
        %v1836 = vpop.f32.mrb[0].mxu0
        %v1837 = vadd.f32 0.0, %v1836
        %1838 = vmatprep.mubr.f32.mxu0 0.0
        %1839 = vmatmul.mubr.f32.gmra.mrb[0].mxu0 %v1589
        %v1840 = vpop.f32.mrb[0].mxu0
        %v1841 = vadd.f32 0.0, %v1840
        %v1842 = vpop.f32.mrb[0].mxu0
        %v1843 = vadd.f32 0.0, %v1842
        %1844 = vmatprep.mubr.f32.mxu0 0.0
        %1845 = vmatmul.mubr.f32.gmra.mrb[0].mxu0 %v1592
        %v1846 = vpop.f32.mrb[0].mxu0
        %v1847 = vadd.f32 0.0, %v1846
        %v1848 = vpop.f32.mrb[0].mxu0
        %v1849 = vadd.f32 0.0, %v1848
        %1850 = vdwg.mxu0
        %v1851 = vld [vmem:[#allocation6] sm:$0xff]
        %v1852 = vld [vmem:[#allocation6 + $0x8] sm:$0xff]
        %v1853 = vld [vmem:[#allocation6 + $0x10] sm:$0xff]
        %v1854 = vld [vmem:[#allocation6 + $0x18] sm:$0xff]
        %v1855 = vld [vmem:[#allocation6 + $0x20] sm:$0xff]
        %v1856 = vld [vmem:[#allocation6 + $0x28] sm:$0xff]
        %v1857 = vld [vmem:[#allocation6 + $0x30] sm:$0xff]
        %v1858 = vld [vmem:[#allocation6 + $0x38] sm:$0xff]
        %v1859 = vld [vmem:[#allocation6 + $0x40] sm:$0xff]
        %v1860 = vld [vmem:[#allocation6 + $0x48] sm:$0xff]
        %v1861 = vld [vmem:[#allocation6 + $0x50] sm:$0xff]
        %v1862 = vld [vmem:[#allocation6 + $0x58] sm:$0xff]
        %v1863 = vld [vmem:[#allocation6 + $0x60] sm:$0xff]
        %v1864 = vld [vmem:[#allocation6 + $0x68] sm:$0xff]
        %v1865 = vld [vmem:[#allocation6 + $0x70] sm:$0xff]
        %v1866 = vld [vmem:[#allocation6 + $0x78] sm:$0xff]
        %v1867 = vld [vmem:[#allocation6 + $0x80] sm:$0xff]
        %v1868 = vld [vmem:[#allocation6 + $0x88] sm:$0xff]
        %v1869 = vld [vmem:[#allocation6 + $0x90] sm:$0xff]
        %v1870 = vld [vmem:[#allocation6 + $0x98] sm:$0xff]
        %v1871 = vld [vmem:[#allocation6 + $0xa0] sm:$0xff]
        %v1872 = vld [vmem:[#allocation6 + $0xa8] sm:$0xff]
        %v1873 = vld [vmem:[#allocation6 + $0xb0] sm:$0xff]
        %v1874 = vld [vmem:[#allocation6 + $0xb8] sm:$0xff]
        %v1875 = vld [vmem:[#allocation6 + $0xc0] sm:$0xff]
        %v1876 = vld [vmem:[#allocation6 + $0xc8] sm:$0xff]
        %v1877 = vld [vmem:[#allocation6 + $0xd0] sm:$0xff]
        %v1878 = vld [vmem:[#allocation6 + $0xd8] sm:$0xff]
        %v1879 = vld [vmem:[#allocation6 + $0xe0] sm:$0xff]
        %v1880 = vld [vmem:[#allocation6 + $0xe8] sm:$0xff]
        %v1881 = vld [vmem:[#allocation6 + $0xf0] sm:$0xff]
        %v1882 = vld [vmem:[#allocation6 + $0xf8] sm:$0xff]
        %v1883 = vld [vmem:[#allocation6 + $0x100] sm:$0xff]
        %v1884 = vld [vmem:[#allocation6 + $0x108] sm:$0xff]
        %v1885 = vld [vmem:[#allocation6 + $0x110] sm:$0xff]
        %v1886 = vld [vmem:[#allocation6 + $0x118] sm:$0xff]
        %v1887 = vld [vmem:[#allocation6 + $0x120] sm:$0xff]
        %v1888 = vld [vmem:[#allocation6 + $0x128] sm:$0xff]
        %v1889 = vld [vmem:[#allocation6 + $0x130] sm:$0xff]
        %v1890 = vld [vmem:[#allocation6 + $0x138] sm:$0xff]
        %v1891 = vld [vmem:[#allocation6 + $0x140] sm:$0xff]
        %v1892 = vld [vmem:[#allocation6 + $0x148] sm:$0xff]
        %v1893 = vld [vmem:[#allocation6 + $0x150] sm:$0xff]
        %v1894 = vld [vmem:[#allocation6 + $0x158] sm:$0xff]
        %v1895 = vld [vmem:[#allocation6 + $0x160] sm:$0xff]
        %v1896 = vld [vmem:[#allocation6 + $0x168] sm:$0xff]
        %v1897 = vld [vmem:[#allocation6 + $0x170] sm:$0xff]
        %v1898 = vld [vmem:[#allocation6 + $0x178] sm:$0xff]
        %v1899 = vld [vmem:[#allocation6 + $0x180] sm:$0xff]
        %v1900 = vld [vmem:[#allocation6 + $0x188] sm:$0xff]
        %v1901 = vld [vmem:[#allocation6 + $0x190] sm:$0xff]
        %v1902 = vld [vmem:[#allocation6 + $0x198] sm:$0xff]
        %v1903 = vld [vmem:[#allocation6 + $0x1a0] sm:$0xff]
        %v1904 = vld [vmem:[#allocation6 + $0x1a8] sm:$0xff]
        %v1905 = vld [vmem:[#allocation6 + $0x1b0] sm:$0xff]
        %v1906 = vld [vmem:[#allocation6 + $0x1b8] sm:$0xff]
        %v1907 = vld [vmem:[#allocation6 + $0x1c0] sm:$0xff]
        %v1908 = vld [vmem:[#allocation6 + $0x1c8] sm:$0xff]
        %v1909 = vld [vmem:[#allocation6 + $0x1d0] sm:$0xff]
        %v1910 = vld [vmem:[#allocation6 + $0x1d8] sm:$0xff]
        %v1911 = vld [vmem:[#allocation6 + $0x1e0] sm:$0xff]
        %v1912 = vld [vmem:[#allocation6 + $0x1e8] sm:$0xff]
        %v1913 = vld [vmem:[#allocation6 + $0x1f0] sm:$0xff]
        %v1914 = vld [vmem:[#allocation6 + $0x1f8] sm:$0xff]
        %v1915 = vmul.f32 %v1661, %v1851
        %v1916 = vmul.f32 %v1663, %v1852
        %v1917 = vmul.f32 %v1667, %v1853
        %v1918 = vmul.f32 %v1669, %v1854
        %v1919 = vmul.f32 %v1673, %v1855
        %v1920 = vmul.f32 %v1675, %v1856
        %v1921 = vmul.f32 %v1679, %v1857
        %v1922 = vmul.f32 %v1681, %v1858
        %v1923 = vmul.f32 %v1685, %v1859
        %v1924 = vmul.f32 %v1687, %v1860
        %v1925 = vmul.f32 %v1691, %v1861
        %v1926 = vmul.f32 %v1693, %v1862
        %v1927 = vmul.f32 %v1697, %v1863
        %v1928 = vmul.f32 %v1699, %v1864
        %v1929 = vmul.f32 %v1703, %v1865
        %v1930 = vmul.f32 %v1705, %v1866
        %v1931 = vmul.f32 %v1709, %v1867
        %v1932 = vmul.f32 %v1711, %v1868
        %v1933 = vmul.f32 %v1715, %v1869
        %v1934 = vmul.f32 %v1717, %v1870
        %v1935 = vmul.f32 %v1721, %v1871
        %v1936 = vmul.f32 %v1723, %v1872
        %v1937 = vmul.f32 %v1727, %v1873
        %v1938 = vmul.f32 %v1729, %v1874
        %v1939 = vmul.f32 %v1733, %v1875
        %v1940 = vmul.f32 %v1735, %v1876
        %v1941 = vmul.f32 %v1739, %v1877
        %v1942 = vmul.f32 %v1741, %v1878
        %v1943 = vmul.f32 %v1745, %v1879
        %v1944 = vmul.f32 %v1747, %v1880
        %v1945 = vmul.f32 %v1751, %v1881
        %v1946 = vmul.f32 %v1753, %v1882
        %v1947 = vmul.f32 %v1757, %v1883
        %v1948 = vmul.f32 %v1759, %v1884
        %v1949 = vmul.f32 %v1763, %v1885
        %v1950 = vmul.f32 %v1765, %v1886
        %v1951 = vmul.f32 %v1769, %v1887
        %v1952 = vmul.f32 %v1771, %v1888
        %v1953 = vmul.f32 %v1775, %v1889
        %v1954 = vmul.f32 %v1777, %v1890
        %v1955 = vmul.f32 %v1781, %v1891
        %v1956 = vmul.f32 %v1783, %v1892
        %v1957 = vmul.f32 %v1787, %v1893
        %v1958 = vmul.f32 %v1789, %v1894
        %v1959 = vmul.f32 %v1793, %v1895
        %v1960 = vmul.f32 %v1795, %v1896
        %v1961 = vmul.f32 %v1799, %v1897
        %v1962 = vmul.f32 %v1801, %v1898
        %v1963 = vmul.f32 %v1805, %v1899
        %v1964 = vmul.f32 %v1807, %v1900
        %v1965 = vmul.f32 %v1811, %v1901
        %v1966 = vmul.f32 %v1813, %v1902
        %v1967 = vmul.f32 %v1817, %v1903
        %v1968 = vmul.f32 %v1819, %v1904
        %v1969 = vmul.f32 %v1823, %v1905
        %v1970 = vmul.f32 %v1825, %v1906
        %v1971 = vmul.f32 %v1829, %v1907
        %v1972 = vmul.f32 %v1831, %v1908
        %v1973 = vmul.f32 %v1835, %v1909
        %v1974 = vmul.f32 %v1837, %v1910
        %v1975 = vmul.f32 %v1841, %v1911
        %v1976 = vmul.f32 %v1843, %v1912
        %v1977 = vmul.f32 %v1847, %v1913
        %v1978 = vmul.f32 %v1849, %v1914
        %1979 = vmatprep.subr.mxu0 %v1916
        %1980 = vmatpush1.msra.mxu0 %v1915
        %1981 = vmatprep.subr.mxu0 %v1918
        %1982 = vmatpush1.msra.mxu0 %v1917
        %1983 = vmatprep.subr.mxu0 %v1920
        %1984 = vmatpush1.msra.mxu0 %v1919
        %1985 = vmatprep.subr.mxu0 %v1922
        %1986 = vmatpush1.msra.mxu0 %v1921
        %1987 = vmatprep.subr.mxu0 %v1924
        %1988 = vmatpush1.msra.mxu0 %v1923
        %1989 = vmatprep.subr.mxu0 %v1926
        %1990 = vmatpush1.msra.mxu0 %v1925
        %1991 = vmatprep.subr.mxu0 %v1928
        %1992 = vmatpush1.msra.mxu0 %v1927
        %1993 = vmatprep.subr.mxu0 %v1930
        %1994 = vmatpush1.msra.mxu0 %v1929
        %1995 = vmatprep.subr.mxu0 %v1932
        %1996 = vmatpush1.msra.mxu0 %v1931
        %1997 = vmatprep.subr.mxu0 %v1934
        %1998 = vmatpush1.msra.mxu0 %v1933
        %1999 = vmatprep.subr.mxu0 %v1936
        %2000 = vmatpush1.msra.mxu0 %v1935
        %2001 = vmatprep.subr.mxu0 %v1938
        %2002 = vmatpush1.msra.mxu0 %v1937
        %2003 = vmatprep.subr.mxu0 %v1940
        %2004 = vmatpush1.msra.mxu0 %v1939
        %2005 = vmatprep.subr.mxu0 %v1942
        %2006 = vmatpush1.msra.mxu0 %v1941
        %2007 = vmatprep.subr.mxu0 %v1944
        %2008 = vmatpush1.msra.mxu0 %v1943
        %2009 = vmatprep.subr.mxu0 %v1946
        %2010 = vmatpush1.msra.mxu0 %v1945
        %2011 = vmatprep.subr.mxu0 %v1948
        %2012 = vmatpush1.msra.mxu0 %v1947
        %2013 = vmatprep.subr.mxu0 %v1950
        %2014 = vmatpush1.msra.mxu0 %v1949
        %2015 = vmatprep.subr.mxu0 %v1952
        %2016 = vmatpush1.msra.mxu0 %v1951
        %2017 = vmatprep.subr.mxu0 %v1954
        %2018 = vmatpush1.msra.mxu0 %v1953
        %2019 = vmatprep.subr.mxu0 %v1956
        %2020 = vmatpush1.msra.mxu0 %v1955
        %2021 = vmatprep.subr.mxu0 %v1958
        %2022 = vmatpush1.msra.mxu0 %v1957
        %2023 = vmatprep.subr.mxu0 %v1960
        %2024 = vmatpush1.msra.mxu0 %v1959
        %2025 = vmatprep.subr.mxu0 %v1962
        %2026 = vmatpush1.msra.mxu0 %v1961
        %2027 = vmatprep.subr.mxu0 %v1964
        %2028 = vmatpush1.msra.mxu0 %v1963
        %2029 = vmatprep.subr.mxu0 %v1966
        %2030 = vmatpush1.msra.mxu0 %v1965
        %2031 = vmatprep.subr.mxu0 %v1968
        %2032 = vmatpush1.msra.mxu0 %v1967
        %2033 = vmatprep.subr.mxu0 %v1970
        %2034 = vmatpush1.msra.mxu0 %v1969
        %2035 = vmatprep.subr.mxu0 %v1972
        %2036 = vmatpush1.msra.mxu0 %v1971
        %2037 = vmatprep.subr.mxu0 %v1974
        %2038 = vmatpush1.msra.mxu0 %v1973
        %2039 = vmatprep.subr.mxu0 %v1976
        %2040 = vmatpush1.msra.mxu0 %v1975
        %2041 = vmatprep.subr.mxu0 %v1978
        %2042 = vmatpush1.msra.mxu0 %v1977
        %2043 = vmatprep.mubr.f32.mxu0 %v953
        %2044 = vmatmul.mubr.f32.gmra.mrb[0].mxu0 %v952
        %v2045 = vpop.f32.mrb[0].mxu0
        %v2046 = vadd.f32 0.0, %v2045
        %v2047 = vpop.f32.mrb[0].mxu0
        %v2048 = vadd.f32 0.0, %v2047
        %2049 = vmatprep.mubr.f32.mxu0 %v955
        %2050 = vmatmul.mubr.f32.gmra.mrb[0].mxu0 %v954
        %v2051 = vpop.f32.mrb[0].mxu0
        %v2052 = vadd.f32 0.0, %v2051
        %v2053 = vpop.f32.mrb[0].mxu0
        %v2054 = vadd.f32 0.0, %v2053
        %2055 = vmatprep.mubr.f32.mxu0 %v957
        %2056 = vmatmul.mubr.f32.gmra.mrb[0].mxu0 %v956
        %v2057 = vpop.f32.mrb[0].mxu0
        %v2058 = vadd.f32 0.0, %v2057
        %v2059 = vpop.f32.mrb[0].mxu0
        %v2060 = vadd.f32 0.0, %v2059
        %2061 = vmatprep.mubr.f32.mxu0 %v959
        %2062 = vmatmul.mubr.f32.gmra.mrb[0].mxu0 %v958
        %v2063 = vpop.f32.mrb[0].mxu0
        %v2064 = vadd.f32 0.0, %v2063
        %v2065 = vpop.f32.mrb[0].mxu0
        %v2066 = vadd.f32 0.0, %v2065
        %2067 = vdwg.mxu0
        %vm2068 = vcmp.ge.f32.partialorder %v2046, 0.0
        %vm2069 = vcmp.ge.f32.partialorder %v2048, 0.0
        %vm2070 = vcmp.ge.f32.partialorder %v2052, 0.0
        %vm2071 = vcmp.ge.f32.partialorder %v2054, 0.0
        %vm2072 = vcmp.ge.f32.partialorder %v2058, 0.0
        %vm2073 = vcmp.ge.f32.partialorder %v2060, 0.0
        %vm2074 = vcmp.ge.f32.partialorder %v2064, 0.0
        %vm2075 = vcmp.ge.f32.partialorder %v2066, 0.0
        %v2076 = vmul.f32 %v2046, 0.2
        %v2077 = vmul.f32 %v2048, 0.2
        %v2078 = vmul.f32 %v2052, 0.2
        %v2079 = vmul.f32 %v2054, 0.2
        %v2080 = vmul.f32 %v2058, 0.2
        %v2081 = vmul.f32 %v2060, 0.2
        %v2082 = vmul.f32 %v2064, 0.2
        %v2083 = vmul.f32 %v2066, 0.2
        %v2084 = vsel %vm2068, %v2046, %v2076
        %v2085 = vsel %vm2069, %v2048, %v2077
        %v2086 = vsel %vm2070, %v2052, %v2078
        %v2087 = vsel %vm2071, %v2054, %v2079
        %v2088 = vsel %vm2072, %v2058, %v2080
        %v2089 = vsel %vm2073, %v2060, %v2081
        %v2090 = vsel %vm2074, %v2064, %v2082
        %v2091 = vsel %vm2075, %v2066, %v2083
        %v2092 = vld [vmem:[%s13] sm:$0xff]
        %v2093 = vld [vmem:[%s13 + $0x8] sm:$0xff]
        %v2094 = vld [vmem:[%s13 + $0x10] sm:$0xff]
        %v2095 = vld [vmem:[%s13 + $0x18] sm:$0xff]
        %v2096 = vld [vmem:[%s14] sm:$0xff]
        %v2097 = vld [vmem:[%s14 + $0x8] sm:$0xff]
        %v2098 = vld [vmem:[%s14 + $0x10] sm:$0xff]
        %v2099 = vld [vmem:[%s14 + $0x18] sm:$0xff]
        %2101 = vset.pattern.permute.xlu0 0
        %2102 = vperm.xlu0 %2101, %v2096
        %v2103 = vpop.permute.xlu0 %2102
        %2106 = vset.pattern.permute.xlu0 0
        %2107 = vperm.xlu0 %2106, %v2097
        %v2108 = vpop.permute.xlu0 %2107
        %2111 = vset.pattern.permute.xlu0 0
        %2112 = vperm.xlu0 %2111, %v2098
        %v2113 = vpop.permute.xlu0 %2112
        %2116 = vset.pattern.permute.xlu0 0
        %2117 = vperm.xlu0 %2116, %v2099
        %v2118 = vpop.permute.xlu0 %2117
        %v2121 = vsel %vm826, %v2092, 0
        %v2124 = vsel %vm826, %v2093, 0
        %v2127 = vsel %vm826, %v2094, 0
        %v2130 = vsel %vm826, %v2095, 0
        %2132 = vmatprep.subr.mxu0 %v2085
        %2133 = vmatpush1.msra.mxu0 %v2084
        %2134 = vmatprep.subr.mxu0 %v2087
        %2135 = vmatpush1.msra.mxu0 %v2086
        %2136 = vmatprep.subr.mxu0 %v2089
        %2137 = vmatpush1.msra.mxu0 %v2088
        %2138 = vmatprep.subr.mxu0 %v2091
        %2139 = vmatpush1.msra.mxu0 %v2090
        %2140 = vmatprep.subr.mxu0 0.0
        %2141 = vmatpush1.msra.mxu0 0.0
        %2142 = vmatprep.subr.mxu0 0.0
        %2143 = vmatpush1.msra.mxu0 0.0
        %2144 = vmatprep.subr.mxu0 0.0
        %2145 = vmatpush1.msra.mxu0 0.0
        %2146 = vmatprep.subr.mxu0 0.0
        %2147 = vmatpush1.msra.mxu0 0.0
        %2148 = vmatprep.subr.mxu0 0.0
        %2149 = vmatpush1.msra.mxu0 0.0
        %2150 = vmatprep.subr.mxu0 0.0
        %2151 = vmatpush1.msra.mxu0 0.0
        %2152 = vmatprep.subr.mxu0 0.0
        %2153 = vmatpush1.msra.mxu0 0.0
        %2154 = vmatprep.subr.mxu0 0.0
        %2155 = vmatpush1.msra.mxu0 0.0
        %2156 = vmatprep.subr.mxu0 0.0
        %2157 = vmatpush1.msra.mxu0 0.0
        %2158 = vmatprep.subr.mxu0 0.0
        %2159 = vmatpush1.msra.mxu0 0.0
        %2160 = vmatprep.subr.mxu0 0.0
        %2161 = vmatpush1.msra.mxu0 0.0
        %2162 = vmatprep.subr.mxu0 0.0
        %2163 = vmatpush1.msra.mxu0 0.0
        %2164 = vmatprep.subr.mxu0 0.0
        %2165 = vmatpush1.msra.mxu0 0.0
        %2166 = vmatprep.subr.mxu0 0.0
        %2167 = vmatpush1.msra.mxu0 0.0
        %2168 = vmatprep.subr.mxu0 0.0
        %2169 = vmatpush1.msra.mxu0 0.0
        %2170 = vmatprep.subr.mxu0 0.0
        %2171 = vmatpush1.msra.mxu0 0.0
        %2172 = vmatprep.subr.mxu0 0.0
        %2173 = vmatpush1.msra.mxu0 0.0
        %2174 = vmatprep.subr.mxu0 0.0
        %2175 = vmatpush1.msra.mxu0 0.0
        %2176 = vmatprep.subr.mxu0 0.0
        %2177 = vmatpush1.msra.mxu0 0.0
        %2178 = vmatprep.subr.mxu0 0.0
        %2179 = vmatpush1.msra.mxu0 0.0
        %2180 = vmatprep.subr.mxu0 0.0
        %2181 = vmatpush1.msra.mxu0 0.0
        %2182 = vmatprep.subr.mxu0 0.0
        %2183 = vmatpush1.msra.mxu0 0.0
        %2184 = vmatprep.subr.mxu0 0.0
        %2185 = vmatpush1.msra.mxu0 0.0
        %2186 = vmatprep.subr.mxu0 0.0
        %2187 = vmatpush1.msra.mxu0 0.0
        %2188 = vmatprep.subr.mxu0 0.0
        %2189 = vmatpush1.msra.mxu0 0.0
        %2190 = vmatprep.subr.mxu0 0.0
        %2191 = vmatpush1.msra.mxu0 0.0
        %2192 = vmatprep.subr.mxu0 0.0
        %2193 = vmatpush1.msra.mxu0 0.0
        %2194 = vmatprep.subr.mxu0 0.0
        %2195 = vmatpush1.msra.mxu0 0.0
        %2196 = vmatprep.mubr.f32.mxu0 0.0
        %2197 = vmatmul.mubr.f32.gmra.mrb[0].mxu0 %v2121
        %v2198 = vpop.f32.mrb[0].mxu0
        %v2199 = vadd.f32 %v2103, %v2198
        %v2200 = vpop.f32.mrb[0].mxu0
        %v2201 = vadd.f32 %v2103, %v2200
        %2202 = vmatprep.mubr.f32.mxu0 0.0
        %2203 = vmatmul.mubr.f32.gmra.mrb[0].mxu0 %v2124
        %v2204 = vpop.f32.mrb[0].mxu0
        %v2205 = vadd.f32 %v2108, %v2204
        %v2206 = vpop.f32.mrb[0].mxu0
        %v2207 = vadd.f32 %v2108, %v2206
        %2208 = vmatprep.mubr.f32.mxu0 0.0
        %2209 = vmatmul.mubr.f32.gmra.mrb[0].mxu0 %v2127
        %v2210 = vpop.f32.mrb[0].mxu0
        %v2211 = vadd.f32 %v2113, %v2210
        %v2212 = vpop.f32.mrb[0].mxu0
        %v2213 = vadd.f32 %v2113, %v2212
        %2214 = vmatprep.mubr.f32.mxu0 0.0
        %2215 = vmatmul.mubr.f32.gmra.mrb[0].mxu0 %v2130
        %v2216 = vpop.f32.mrb[0].mxu0
        %v2217 = vadd.f32 %v2118, %v2216
        %v2218 = vpop.f32.mrb[0].mxu0
        %v2219 = vadd.f32 %v2118, %v2218
        %2220 = vdwg.mxu0
        %vm2221 = vcmp.ge.f32.partialorder %v2199, 0.0
        %vm2222 = vcmp.ge.f32.partialorder %v2201, 0.0
        %vm2223 = vcmp.ge.f32.partialorder %v2205, 0.0
        %vm2224 = vcmp.ge.f32.partialorder %v2207, 0.0
        %vm2225 = vcmp.ge.f32.partialorder %v2211, 0.0
        %vm2226 = vcmp.ge.f32.partialorder %v2213, 0.0
        %vm2227 = vcmp.ge.f32.partialorder %v2217, 0.0
        %vm2228 = vcmp.ge.f32.partialorder %v2219, 0.0
        %v2229 = vmul.f32 %v2199, 0.2
        %v2230 = vmul.f32 %v2201, 0.2
        %v2231 = vmul.f32 %v2205, 0.2
        %v2232 = vmul.f32 %v2207, 0.2
        %v2233 = vmul.f32 %v2211, 0.2
        %v2234 = vmul.f32 %v2213, 0.2
        %v2235 = vmul.f32 %v2217, 0.2
        %v2236 = vmul.f32 %v2219, 0.2
        %v2237 = vsel %vm2221, %v2199, %v2229
        %v2238 = vsel %vm2222, %v2201, %v2230
        %v2239 = vsel %vm2223, %v2205, %v2231
        %v2240 = vsel %vm2224, %v2207, %v2232
        %v2241 = vsel %vm2225, %v2211, %v2233
        %v2242 = vsel %vm2226, %v2213, %v2234
        %v2243 = vsel %vm2227, %v2217, %v2235
        %v2244 = vsel %vm2228, %v2219, %v2236
        %2245 = vst [vmem:[%s610] sm:$0xff] %v2237
        %2246 = vst [vmem:[%s610 + $0x8] sm:$0xff] %v2238
        %2247 = vst [vmem:[%s610 + $0x10] sm:$0xff] %v2239
        %2248 = vst [vmem:[%s610 + $0x18] sm:$0xff] %v2240
        %2249 = vst [vmem:[%s610 + $0x20] sm:$0xff] %v2241
        %2250 = vst [vmem:[%s610 + $0x28] sm:$0xff] %v2242
        %2251 = vst [vmem:[%s610 + $0x30] sm:$0xff] %v2243
        %2252 = vst [vmem:[%s610 + $0x38] sm:$0xff] %v2244
        %s2253 = sand.u32 %s361, 1
        %s2254 = scalar_lea.sflag [#allocation5], %s2253
        %s2255 = sand.u32 %s361, 1
        %s2256 = smul.addr %s2255, 64
        %s2257 = scalar_lea.vmem [#allocation14], %s2256
        // Predicated region
        $region128: #{tpu_custom_call.1} parent=98 // pred_check
          %p2258 = pneg %p371
        $region129: #{tpu_custom_call.1} parent=98 // pred_check_branch
          %2260 = sbr.rel (%p2258) target = $region131
        $region130: #{tpu_custom_call.1} parent=98 // pred_region
          %s2261 = smul.u32 2, %s33
          %s2263 = ssub.s32 1024, 1024
          %2264 = vsyncadd %s2254, %s2263
          %s2265 = smul.addr %s2261, 128
          %s2266 = scalar_lea.hbm %s15, %s2265
          %s2267 = sshll.u32 %s2257, 4
          %s2268 = int_to_ptr.vmem [resolvable:$true] %s2267
          %2273 = dma.vmem_to_hbm [thread:$0]  %s2268, 1024, %s2266, %s2254, 256, 512, 16
        $region131: #{tpu_custom_call.1} parent=98 // pred_fallthru
          _
      $region99: #{tpu_custom_call.1} parent=5 // pred_fallthru
        _
      %p2274 = scmp.le.s32.totalorder 2, %s28
      // Predicated region
      $region132: #{tpu_custom_call.1} parent=5 // pred_check
        %p2275 = pneg %p2274
      $region133: #{tpu_custom_call.1} parent=5 // pred_check_branch
        %2277 = sbr.rel (%p2275) target = $region135
      $region134: #{tpu_custom_call.1} parent=5 // pred_region
        %s2278 = ssub.s32 %s28, 2
        // Predicated region
        $region136: #{tpu_custom_call.1} parent=134 // pred_check
          %p2279 = pneg %p377
        $region137: #{tpu_custom_call.1} parent=134 // pred_check_branch
          %2281 = sbr.rel (%p2279) target = $region139
        $region138: #{tpu_custom_call.1} parent=134 // pred_region
          %s2282 = sand.u32 %s362, 1
          %s2283 = scalar_lea.sflag [#allocation5], %s2282
          %s2284 = sand.u32 %s362, 1
          %s2285 = smul.addr %s2284, 64
          %s2286 = scalar_lea.vmem [#allocation14], %s2285
          %2287 = dma.done %s2283, 1024
        $region139: #{tpu_custom_call.1} parent=134 // pred_fallthru
          _
      $region135: #{tpu_custom_call.1} parent=5 // pred_fallthru
        _
    $region6: #{tpu_custom_call.1} parent=1 // loop_footer
      %s32 = sadd.s32 1, %s28
    $region7: #{tpu_custom_call.1} parent=1 // loop_footer_branch
      %27 = sbr.rel target = $region3
    $region8: #{tpu_custom_call.1} parent=1 // loop_exit
      _
    %2288 = vsyncpa [#allocation4], 1
    %s2289 = scalar_lea.sflag [#allocation4], 1
    %2290 = vsyncpa %s2289, 1
    %2291 = vsyncpa [#allocation7], 1
    %2292 = vsyncpa [#allocation10], 1
    %2293 = vsyncpa [#allocation13], 1
    %2294 = vsyncpa [#allocation5], 1
    %s2295 = scalar_lea.sflag [#allocation5], 1
    %2296 = vsyncpa %s2295, 1

</llo_original>
